<compile_context>
chip_gen: v6e
topology: v6e:2x2x1
jax: 0.10.0
libtpu: 0.0.40
codegen_flags: <defaults>
</compile_context>

<pallas_src>
import math
from functools import partial

import jax
import jax.numpy as jnp
from jax.experimental import pallas as pl
from jax.experimental.pallas import tpu as pltpu

BN_EPS = 1e-5


# ----------------------------- Pallas kernel -------------------------------

def _gcn_fused_kernel(x_ref, att_ref, w_ref, b_ref, g_ref, be_ref, out_ref,
                      *, batch, node_n, residual):
    """Whole 11-layer residual GCN block in one kernel.

    x_ref:   (B*N, F)        activations, batch-major flattened
    att_ref: (L, B*N, B*N)   per-layer block-diagonal graph attention
    w_ref:   (L, F, F)       per-layer GraphConvolution weights
    b_ref:   (L, 1, F)       per-layer GraphConvolution biases
    g_ref:   (L, N, F)       per-layer BatchNorm gamma (reshaped from N*F)
    be_ref:  (L, N, F)       per-layer BatchNorm beta
    out_ref: (B*N, F)
    """
    B, N = batch, node_n
    x = x_ref[...]                     # (B*N, F)
    inv_b = 1.0 / B

    def layer(y, l):
        w = w_ref[l]                   # (F, F)
        att = att_ref[l]               # (B*N, B*N)
        bias = b_ref[l]                # (1, F)
        gamma = g_ref[l]               # (N, F)
        beta = be_ref[l]               # (N, F)

        # Graph convolution, batched over B via block-diagonal att.
        support = jnp.dot(y, w, preferred_element_type=jnp.float32)          # (B*N, F)
        out = jnp.dot(att, support, preferred_element_type=jnp.float32) + bias

        # BatchNorm1d (training mode): batch mean / biased batch variance per
        # (node, feature) position.  Batch slabs are tile-aligned sublane slices.
        slabs = [out[b * N:(b + 1) * N, :] for b in range(B)]                 # B x (N, F)
        mean = slabs[0]
        for s in slabs[1:]:
            mean = mean + s
        mean = mean * inv_b
        var = (slabs[0] - mean) * (slabs[0] - mean)
        for s in slabs[1:]:
            var = var + (s - mean) * (s - mean)
        var = var * inv_b
        inv_std = jax.lax.rsqrt(var + BN_EPS)

        # Normalize + affine + sigmoid (exact form to hold 1e-4 tolerance).
        acts = [1.0 / (1.0 + jnp.exp(-((s - mean) * inv_std * gamma + beta)))
                for s in slabs]
        return jnp.concatenate(acts, axis=0)                                  # (B*N, F)

    # 11-layer residual chain, all in VMEM / vregs.
    y1 = layer(x, 0)
    y2 = layer(y1, 1)
    y3 = layer(y2, 2)
    y4 = layer(y3, 3)
    y5 = layer(y4, 4)
    y6 = layer(y5, 5)
    y7 = layer(y6 + y5, 6)
    y8 = layer(y7 + y4, 7)
    y9 = layer(y8 + y3, 8)
    y10 = layer(y9 + y2, 9)
    if residual:
        y11 = layer(y10 + y1, 10)
        out_ref[...] = y11 + x
    else:
        y11 = layer(y10, 10)
        out_ref[...] = y11


def gcn_forward_pallas(x, params, in_features, out_features):
    """Fused Pallas forward for the whole GCN block."""
    assert in_features == out_features, "fused kernel assumes in == out features"
    B, N, F = x.shape
    L = len(params)

    x2d = x.reshape(B * N, F)
    eye_b = jnp.eye(B, dtype=jnp.float32)
    att_blk = jnp.stack([jnp.kron(eye_b, p['att']) for p in params])     # (L, B*N, B*N)
    w_all = jnp.stack([p['w'] for p in params])                          # (L, F, F)
    b_all = jnp.stack([p['bias'].reshape(1, F) for p in params])         # (L, 1, F)
    g_all = jnp.stack([p['gamma'] for p in params])                      # (L, N, F)
    be_all = jnp.stack([p['beta'] for p in params])                      # (L, N, F)

    kernel = partial(_gcn_fused_kernel, batch=B, node_n=N,
                     residual=(in_features == out_features))
    vmem = pl.BlockSpec(memory_space=pltpu.MemorySpace.VMEM)
    out2d = pl.pallas_call(
        kernel,
        out_shape=jax.ShapeDtypeStruct((B * N, F), jnp.float32),
        in_specs=[vmem] * 6,
        out_specs=vmem,
    )(x2d, att_blk, w_all, b_all, g_all, be_all)
    return out2d.reshape(B, N, F)


# ------------------------- Parameter construction --------------------------

def _xavier_normal(key, fan_in, fan_out):
    std = math.sqrt(2.0 / (fan_in + fan_out))
    return std * jax.random.normal(key, (fan_in, fan_out), dtype=jnp.float32)


def init_gcn_params(key, in_features, out_features, node_n):
    """Deterministic parameters matching GCN.__init__ shapes."""
    dims = [(in_features, in_features)] * 9 + \
           [(in_features, out_features), (out_features, out_features)]
    att_init = jnp.asarray(0.01 + 0.99 * jnp.eye(node_n), dtype=jnp.float32)
    params = []
    keys = jax.random.split(key, len(dims))
    for k, (fi, fo) in zip(keys, dims):
        params.append(dict(
            w=_xavier_normal(k, fi, fo),
            att=att_init,                                    # (N, N) learnable per layer
            bias=jnp.zeros((fo,), dtype=jnp.float32),        # zeroed as in reset_parameters
            gamma=jnp.ones((node_n, fo), dtype=jnp.float32),    # BN weight (reshaped N*F)
            beta=jnp.zeros((node_n, fo), dtype=jnp.float32),    # BN bias
        ))
    return params


# ----------------------- Pure-JAX reference forward -------------------------

def _gcn_layer_ref(x, w, att, bias, gamma, beta):
    support = jnp.einsum('bnf,fg->bng', x, w)
    out = jnp.einsum('nm,bmg->bng', att, support) + bias[None, None, :]
    mean = jnp.mean(out, axis=0, keepdims=True)
    var = jnp.mean((out - mean) ** 2, axis=0, keepdims=True)
    y = (out - mean) * jax.lax.rsqrt(var + BN_EPS) * gamma[None] + beta[None]
    return 1.0 / (1.0 + jnp.exp(-y))


def gcn_forward_ref(x, params, in_features, out_features):
    def f(y, p):
        return _gcn_layer_ref(y, p['w'], p['att'], p['bias'], p['gamma'], p['beta'])
    p = params
    y1 = f(x, p[0]);        y2 = f(y1, p[1]);       y3 = f(y2, p[2])
    y4 = f(y3, p[3]);       y5 = f(y4, p[4]);       y6 = f(y5, p[5])
    y7 = f(y6 + y5, p[6]);  y8 = f(y7 + y4, p[7]);  y9 = f(y8 + y3, p[8])
    y10 = f(y9 + y2, p[9])
    if in_features == out_features:
        y11 = f(y10 + y1, p[10])
        return y11 + x
    return f(y10, p[10])


# --------------------------------- Main -------------------------------------

if __name__ == "__main__":
    B = 2            # batch
    NODE_N = 48      # node_n (default in the module)
    IN_F = 16        # in_features
    OUT_F = 16       # out_features (== in_features -> residual paths active)

    key = jax.random.PRNGKey(0)
    kx, kp = jax.random.split(key)
    x = jax.random.normal(kx, (B, NODE_N, IN_F), dtype=jnp.float32)

    params = init_gcn_params(kp, IN_F, OUT_F, NODE_N)

    fwd_pallas = jax.jit(partial(gcn_forward_pallas, in_features=IN_F, out_features=OUT_F))
    fwd_ref = jax.jit(partial(gcn_forward_ref, in_features=IN_F, out_features=OUT_F))

    out = fwd_pallas(x, params)
    jax.block_until_ready(out)

    ref = fwd_ref(x, params)
    jax.block_until_ready(ref)

    assert out.shape == (B, NODE_N, OUT_F), out.shape
    assert jnp.allclose(out, ref, rtol=1e-4, atol=1e-4), \
        f"max abs err = {float(jnp.max(jnp.abs(out - ref)))}"

    print("KERNEL_OK")
</pallas_src>

<mosaic_0001>
module attributes {stable_mosaic.version = 11 : i64} {
  func.func @_gcn_fused_kernel(%arg0: memref<96x16xf32, #tpu.memory_space<vmem>>, %arg1: memref<11x96x96xf32, #tpu.memory_space<vmem>>, %arg2: memref<11x16x16xf32, #tpu.memory_space<vmem>>, %arg3: memref<11x1x16xf32, #tpu.memory_space<vmem>>, %arg4: memref<11x48x16xf32, #tpu.memory_space<vmem>>, %arg5: memref<11x48x16xf32, #tpu.memory_space<vmem>>, %arg6: memref<96x16xf32, #tpu.memory_space<vmem>>) attributes {dimension_semantics = [], scalar_prefetch = 0 : i64, scratch_operands = 0 : i64, tpu.core_type = #tpu.core_type<tc>} {
    %c0 = arith.constant 0 : index
    %c0_0 = arith.constant 0 : index
    %0 = vector.load %arg0[%c0, %c0_0] : memref<96x16xf32, #tpu.memory_space<vmem>>, vector<96x16xf32>
    %c0_1 = arith.constant 0 : index
    %c0_2 = arith.constant 0 : index
    %c0_3 = arith.constant 0 : index
    %1 = vector.load %arg2[%c0_1, %c0_2, %c0_3] : memref<11x16x16xf32, #tpu.memory_space<vmem>>, vector<1x16x16xf32>
    %2 = vector.shape_cast %1 : vector<1x16x16xf32> to vector<16x16xf32>
    %c0_4 = arith.constant 0 : index
    %c0_5 = arith.constant 0 : index
    %c0_6 = arith.constant 0 : index
    %3 = vector.load %arg1[%c0_4, %c0_5, %c0_6] : memref<11x96x96xf32, #tpu.memory_space<vmem>>, vector<1x96x96xf32>
    %4 = vector.shape_cast %3 : vector<1x96x96xf32> to vector<96x96xf32>
    %c0_7 = arith.constant 0 : index
    %c0_8 = arith.constant 0 : index
    %c0_9 = arith.constant 0 : index
    %5 = vector.load %arg3[%c0_7, %c0_8, %c0_9] : memref<11x1x16xf32, #tpu.memory_space<vmem>>, vector<1x1x16xf32>
    %6 = vector.shape_cast %5 : vector<1x1x16xf32> to vector<1x16xf32>
    %c0_10 = arith.constant 0 : index
    %c0_11 = arith.constant 0 : index
    %c0_12 = arith.constant 0 : index
    %7 = vector.load %arg4[%c0_10, %c0_11, %c0_12] : memref<11x48x16xf32, #tpu.memory_space<vmem>>, vector<1x48x16xf32>
    %8 = vector.shape_cast %7 : vector<1x48x16xf32> to vector<48x16xf32>
    %c0_13 = arith.constant 0 : index
    %c0_14 = arith.constant 0 : index
    %c0_15 = arith.constant 0 : index
    %9 = vector.load %arg5[%c0_13, %c0_14, %c0_15] : memref<11x48x16xf32, #tpu.memory_space<vmem>>, vector<1x48x16xf32>
    %10 = vector.shape_cast %9 : vector<1x48x16xf32> to vector<48x16xf32>
    %cst = arith.constant dense<0.000000e+00> : vector<96x16xf32>
    %11 = tpu.matmul %0, %2, %cst {dimension_numbers = #tpu.dot_dimension_numbers<[1], [0], [0], [1], [0, 0, 1, 1], [], []>} : vector<96x16xf32>, vector<16x16xf32>, vector<96x16xf32> -> vector<96x16xf32>
    %cst_16 = arith.constant dense<0.000000e+00> : vector<96x16xf32>
    %12 = tpu.matmul %4, %11, %cst_16 {dimension_numbers = #tpu.dot_dimension_numbers<[1], [0], [0], [1], [0, 0, 1, 1], [], []>} : vector<96x96xf32>, vector<96x16xf32>, vector<96x16xf32> -> vector<96x16xf32>
    %13 = vector.broadcast %6 : vector<1x16xf32> to vector<96x16xf32>
    %14 = arith.addf %12, %13 : vector<96x16xf32>
    %15 = vector.extract_strided_slice %14 {offsets = [0, 0], sizes = [48, 16], strides = [1, 1]} : vector<96x16xf32> to vector<48x16xf32>
    %16 = vector.extract_strided_slice %14 {offsets = [48, 0], sizes = [48, 16], strides = [1, 1]} : vector<96x16xf32> to vector<48x16xf32>
    %17 = arith.addf %15, %16 : vector<48x16xf32>
    %cst_17 = arith.constant 5.000000e-01 : f32
    %18 = vector.broadcast %cst_17 : f32 to vector<48x16xf32>
    %19 = arith.mulf %17, %18 : vector<48x16xf32>
    %20 = arith.subf %15, %19 : vector<48x16xf32>
    %21 = arith.subf %15, %19 : vector<48x16xf32>
    %22 = arith.mulf %20, %21 : vector<48x16xf32>
    %23 = arith.subf %16, %19 : vector<48x16xf32>
    %24 = arith.subf %16, %19 : vector<48x16xf32>
    %25 = arith.mulf %23, %24 : vector<48x16xf32>
    %26 = arith.addf %22, %25 : vector<48x16xf32>
    %cst_18 = arith.constant 5.000000e-01 : f32
    %27 = vector.broadcast %cst_18 : f32 to vector<48x16xf32>
    %28 = arith.mulf %26, %27 : vector<48x16xf32>
    %cst_19 = arith.constant 9.99999974E-6 : f32
    %29 = vector.broadcast %cst_19 : f32 to vector<48x16xf32>
    %30 = arith.addf %28, %29 : vector<48x16xf32>
    %31 = math.rsqrt %30 : vector<48x16xf32>
    %32 = arith.subf %15, %19 : vector<48x16xf32>
    %33 = arith.mulf %32, %31 : vector<48x16xf32>
    %34 = arith.mulf %33, %8 : vector<48x16xf32>
    %35 = arith.addf %34, %10 : vector<48x16xf32>
    %cst_20 = arith.constant 0.000000e+00 : f32
    %36 = vector.broadcast %cst_20 : f32 to vector<48x16xf32>
    %37 = arith.subf %36, %35 : vector<48x16xf32>
    %38 = math.exp %37 : vector<48x16xf32>
    %cst_21 = arith.constant 1.000000e+00 : f32
    %39 = vector.broadcast %cst_21 : f32 to vector<48x16xf32>
    %40 = arith.addf %39, %38 : vector<48x16xf32>
    %cst_22 = arith.constant 1.000000e+00 : f32
    %41 = vector.broadcast %cst_22 : f32 to vector<48x16xf32>
    %42 = arith.divf %41, %40 : vector<48x16xf32>
    %43 = arith.subf %16, %19 : vector<48x16xf32>
    %44 = arith.mulf %43, %31 : vector<48x16xf32>
    %45 = arith.mulf %44, %8 : vector<48x16xf32>
    %46 = arith.addf %45, %10 : vector<48x16xf32>
    %cst_23 = arith.constant 0.000000e+00 : f32
    %47 = vector.broadcast %cst_23 : f32 to vector<48x16xf32>
    %48 = arith.subf %47, %46 : vector<48x16xf32>
    %49 = math.exp %48 : vector<48x16xf32>
    %cst_24 = arith.constant 1.000000e+00 : f32
    %50 = vector.broadcast %cst_24 : f32 to vector<48x16xf32>
    %51 = arith.addf %50, %49 : vector<48x16xf32>
    %cst_25 = arith.constant 1.000000e+00 : f32
    %52 = vector.broadcast %cst_25 : f32 to vector<48x16xf32>
    %53 = arith.divf %52, %51 : vector<48x16xf32>
    %54 = tpu.concatenate %42, %53 in 0 : vector<48x16xf32>, vector<48x16xf32> -> vector<96x16xf32>
    %c1 = arith.constant 1 : index
    %c0_26 = arith.constant 0 : index
    %c0_27 = arith.constant 0 : index
    %55 = vector.load %arg2[%c1, %c0_26, %c0_27] : memref<11x16x16xf32, #tpu.memory_space<vmem>>, vector<1x16x16xf32>
    %56 = vector.shape_cast %55 : vector<1x16x16xf32> to vector<16x16xf32>
    %c1_28 = arith.constant 1 : index
    %c0_29 = arith.constant 0 : index
    %c0_30 = arith.constant 0 : index
    %57 = vector.load %arg1[%c1_28, %c0_29, %c0_30] : memref<11x96x96xf32, #tpu.memory_space<vmem>>, vector<1x96x96xf32>
    %58 = vector.shape_cast %57 : vector<1x96x96xf32> to vector<96x96xf32>
    %c1_31 = arith.constant 1 : index
    %c0_32 = arith.constant 0 : index
    %c0_33 = arith.constant 0 : index
    %59 = vector.load %arg3[%c1_31, %c0_32, %c0_33] : memref<11x1x16xf32, #tpu.memory_space<vmem>>, vector<1x1x16xf32>
    %60 = vector.shape_cast %59 : vector<1x1x16xf32> to vector<1x16xf32>
    %c1_34 = arith.constant 1 : index
    %c0_35 = arith.constant 0 : index
    %c0_36 = arith.constant 0 : index
    %61 = vector.load %arg4[%c1_34, %c0_35, %c0_36] : memref<11x48x16xf32, #tpu.memory_space<vmem>>, vector<1x48x16xf32>
    %62 = vector.shape_cast %61 : vector<1x48x16xf32> to vector<48x16xf32>
    %c1_37 = arith.constant 1 : index
    %c0_38 = arith.constant 0 : index
    %c0_39 = arith.constant 0 : index
    %63 = vector.load %arg5[%c1_37, %c0_38, %c0_39] : memref<11x48x16xf32, #tpu.memory_space<vmem>>, vector<1x48x16xf32>
    %64 = vector.shape_cast %63 : vector<1x48x16xf32> to vector<48x16xf32>
    %cst_40 = arith.constant dense<0.000000e+00> : vector<96x16xf32>
    %65 = tpu.matmul %54, %56, %cst_40 {dimension_numbers = #tpu.dot_dimension_numbers<[1], [0], [0], [1], [0, 0, 1, 1], [], []>} : vector<96x16xf32>, vector<16x16xf32>, vector<96x16xf32> -> vector<96x16xf32>
    %cst_41 = arith.constant dense<0.000000e+00> : vector<96x16xf32>
    %66 = tpu.matmul %58, %65, %cst_41 {dimension_numbers = #tpu.dot_dimension_numbers<[1], [0], [0], [1], [0, 0, 1, 1], [], []>} : vector<96x96xf32>, vector<96x16xf32>, vector<96x16xf32> -> vector<96x16xf32>
    %67 = vector.broadcast %60 : vector<1x16xf32> to vector<96x16xf32>
    %68 = arith.addf %66, %67 : vector<96x16xf32>
    %69 = vector.extract_strided_slice %68 {offsets = [0, 0], sizes = [48, 16], strides = [1, 1]} : vector<96x16xf32> to vector<48x16xf32>
    %70 = vector.extract_strided_slice %68 {offsets = [48, 0], sizes = [48, 16], strides = [1, 1]} : vector<96x16xf32> to vector<48x16xf32>
    %71 = arith.addf %69, %70 : vector<48x16xf32>
    %cst_42 = arith.constant 5.000000e-01 : f32
    %72 = vector.broadcast %cst_42 : f32 to vector<48x16xf32>
    %73 = arith.mulf %71, %72 : vector<48x16xf32>
    %74 = arith.subf %69, %73 : vector<48x16xf32>
    %75 = arith.subf %69, %73 : vector<48x16xf32>
    %76 = arith.mulf %74, %75 : vector<48x16xf32>
    %77 = arith.subf %70, %73 : vector<48x16xf32>
    %78 = arith.subf %70, %73 : vector<48x16xf32>
    %79 = arith.mulf %77, %78 : vector<48x16xf32>
    %80 = arith.addf %76, %79 : vector<48x16xf32>
    %cst_43 = arith.constant 5.000000e-01 : f32
    %81 = vector.broadcast %cst_43 : f32 to vector<48x16xf32>
    %82 = arith.mulf %80, %81 : vector<48x16xf32>
    %cst_44 = arith.constant 9.99999974E-6 : f32
    %83 = vector.broadcast %cst_44 : f32 to vector<48x16xf32>
    %84 = arith.addf %82, %83 : vector<48x16xf32>
    %85 = math.rsqrt %84 : vector<48x16xf32>
    %86 = arith.subf %69, %73 : vector<48x16xf32>
    %87 = arith.mulf %86, %85 : vector<48x16xf32>
    %88 = arith.mulf %87, %62 : vector<48x16xf32>
    %89 = arith.addf %88, %64 : vector<48x16xf32>
    %cst_45 = arith.constant 0.000000e+00 : f32
    %90 = vector.broadcast %cst_45 : f32 to vector<48x16xf32>
    %91 = arith.subf %90, %89 : vector<48x16xf32>
    %92 = math.exp %91 : vector<48x16xf32>
    %cst_46 = arith.constant 1.000000e+00 : f32
    %93 = vector.broadcast %cst_46 : f32 to vector<48x16xf32>
    %94 = arith.addf %93, %92 : vector<48x16xf32>
    %cst_47 = arith.constant 1.000000e+00 : f32
    %95 = vector.broadcast %cst_47 : f32 to vector<48x16xf32>
    %96 = arith.divf %95, %94 : vector<48x16xf32>
    %97 = arith.subf %70, %73 : vector<48x16xf32>
    %98 = arith.mulf %97, %85 : vector<48x16xf32>
    %99 = arith.mulf %98, %62 : vector<48x16xf32>
    %100 = arith.addf %99, %64 : vector<48x16xf32>
    %cst_48 = arith.constant 0.000000e+00 : f32
    %101 = vector.broadcast %cst_48 : f32 to vector<48x16xf32>
    %102 = arith.subf %101, %100 : vector<48x16xf32>
    %103 = math.exp %102 : vector<48x16xf32>
    %cst_49 = arith.constant 1.000000e+00 : f32
    %104 = vector.broadcast %cst_49 : f32 to vector<48x16xf32>
    %105 = arith.addf %104, %103 : vector<48x16xf32>
    %cst_50 = arith.constant 1.000000e+00 : f32
    %106 = vector.broadcast %cst_50 : f32 to vector<48x16xf32>
    %107 = arith.divf %106, %105 : vector<48x16xf32>
    %108 = tpu.concatenate %96, %107 in 0 : vector<48x16xf32>, vector<48x16xf32> -> vector<96x16xf32>
    %c2 = arith.constant 2 : index
    %c0_51 = arith.constant 0 : index
    %c0_52 = arith.constant 0 : index
    %109 = vector.load %arg2[%c2, %c0_51, %c0_52] : memref<11x16x16xf32, #tpu.memory_space<vmem>>, vector<1x16x16xf32>
    %110 = vector.shape_cast %109 : vector<1x16x16xf32> to vector<16x16xf32>
    %c2_53 = arith.constant 2 : index
    %c0_54 = arith.constant 0 : index
    %c0_55 = arith.constant 0 : index
    %111 = vector.load %arg1[%c2_53, %c0_54, %c0_55] : memref<11x96x96xf32, #tpu.memory_space<vmem>>, vector<1x96x96xf32>
    %112 = vector.shape_cast %111 : vector<1x96x96xf32> to vector<96x96xf32>
    %c2_56 = arith.constant 2 : index
    %c0_57 = arith.constant 0 : index
    %c0_58 = arith.constant 0 : index
    %113 = vector.load %arg3[%c2_56, %c0_57, %c0_58] : memref<11x1x16xf32, #tpu.memory_space<vmem>>, vector<1x1x16xf32>
    %114 = vector.shape_cast %113 : vector<1x1x16xf32> to vector<1x16xf32>
    %c2_59 = arith.constant 2 : index
    %c0_60 = arith.constant 0 : index
    %c0_61 = arith.constant 0 : index
    %115 = vector.load %arg4[%c2_59, %c0_60, %c0_61] : memref<11x48x16xf32, #tpu.memory_space<vmem>>, vector<1x48x16xf32>
    %116 = vector.shape_cast %115 : vector<1x48x16xf32> to vector<48x16xf32>
    %c2_62 = arith.constant 2 : index
    %c0_63 = arith.constant 0 : index
    %c0_64 = arith.constant 0 : index
    %117 = vector.load %arg5[%c2_62, %c0_63, %c0_64] : memref<11x48x16xf32, #tpu.memory_space<vmem>>, vector<1x48x16xf32>
    %118 = vector.shape_cast %117 : vector<1x48x16xf32> to vector<48x16xf32>
    %cst_65 = arith.constant dense<0.000000e+00> : vector<96x16xf32>
    %119 = tpu.matmul %108, %110, %cst_65 {dimension_numbers = #tpu.dot_dimension_numbers<[1], [0], [0], [1], [0, 0, 1, 1], [], []>} : vector<96x16xf32>, vector<16x16xf32>, vector<96x16xf32> -> vector<96x16xf32>
    %cst_66 = arith.constant dense<0.000000e+00> : vector<96x16xf32>
    %120 = tpu.matmul %112, %119, %cst_66 {dimension_numbers = #tpu.dot_dimension_numbers<[1], [0], [0], [1], [0, 0, 1, 1], [], []>} : vector<96x96xf32>, vector<96x16xf32>, vector<96x16xf32> -> vector<96x16xf32>
    %121 = vector.broadcast %114 : vector<1x16xf32> to vector<96x16xf32>
    %122 = arith.addf %120, %121 : vector<96x16xf32>
    %123 = vector.extract_strided_slice %122 {offsets = [0, 0], sizes = [48, 16], strides = [1, 1]} : vector<96x16xf32> to vector<48x16xf32>
    %124 = vector.extract_strided_slice %122 {offsets = [48, 0], sizes = [48, 16], strides = [1, 1]} : vector<96x16xf32> to vector<48x16xf32>
    %125 = arith.addf %123, %124 : vector<48x16xf32>
    %cst_67 = arith.constant 5.000000e-01 : f32
    %126 = vector.broadcast %cst_67 : f32 to vector<48x16xf32>
    %127 = arith.mulf %125, %126 : vector<48x16xf32>
    %128 = arith.subf %123, %127 : vector<48x16xf32>
    %129 = arith.subf %123, %127 : vector<48x16xf32>
    %130 = arith.mulf %128, %129 : vector<48x16xf32>
    %131 = arith.subf %124, %127 : vector<48x16xf32>
    %132 = arith.subf %124, %127 : vector<48x16xf32>
    %133 = arith.mulf %131, %132 : vector<48x16xf32>
    %134 = arith.addf %130, %133 : vector<48x16xf32>
    %cst_68 = arith.constant 5.000000e-01 : f32
    %135 = vector.broadcast %cst_68 : f32 to vector<48x16xf32>
    %136 = arith.mulf %134, %135 : vector<48x16xf32>
    %cst_69 = arith.constant 9.99999974E-6 : f32
    %137 = vector.broadcast %cst_69 : f32 to vector<48x16xf32>
    %138 = arith.addf %136, %137 : vector<48x16xf32>
    %139 = math.rsqrt %138 : vector<48x16xf32>
    %140 = arith.subf %123, %127 : vector<48x16xf32>
    %141 = arith.mulf %140, %139 : vector<48x16xf32>
    %142 = arith.mulf %141, %116 : vector<48x16xf32>
    %143 = arith.addf %142, %118 : vector<48x16xf32>
    %cst_70 = arith.constant 0.000000e+00 : f32
    %144 = vector.broadcast %cst_70 : f32 to vector<48x16xf32>
    %145 = arith.subf %144, %143 : vector<48x16xf32>
    %146 = math.exp %145 : vector<48x16xf32>
    %cst_71 = arith.constant 1.000000e+00 : f32
    %147 = vector.broadcast %cst_71 : f32 to vector<48x16xf32>
    %148 = arith.addf %147, %146 : vector<48x16xf32>
    %cst_72 = arith.constant 1.000000e+00 : f32
    %149 = vector.broadcast %cst_72 : f32 to vector<48x16xf32>
    %150 = arith.divf %149, %148 : vector<48x16xf32>
    %151 = arith.subf %124, %127 : vector<48x16xf32>
    %152 = arith.mulf %151, %139 : vector<48x16xf32>
    %153 = arith.mulf %152, %116 : vector<48x16xf32>
    %154 = arith.addf %153, %118 : vector<48x16xf32>
    %cst_73 = arith.constant 0.000000e+00 : f32
    %155 = vector.broadcast %cst_73 : f32 to vector<48x16xf32>
    %156 = arith.subf %155, %154 : vector<48x16xf32>
    %157 = math.exp %156 : vector<48x16xf32>
    %cst_74 = arith.constant 1.000000e+00 : f32
    %158 = vector.broadcast %cst_74 : f32 to vector<48x16xf32>
    %159 = arith.addf %158, %157 : vector<48x16xf32>
    %cst_75 = arith.constant 1.000000e+00 : f32
    %160 = vector.broadcast %cst_75 : f32 to vector<48x16xf32>
    %161 = arith.divf %160, %159 : vector<48x16xf32>
    %162 = tpu.concatenate %150, %161 in 0 : vector<48x16xf32>, vector<48x16xf32> -> vector<96x16xf32>
    %c3 = arith.constant 3 : index
    %c0_76 = arith.constant 0 : index
    %c0_77 = arith.constant 0 : index
    %163 = vector.load %arg2[%c3, %c0_76, %c0_77] : memref<11x16x16xf32, #tpu.memory_space<vmem>>, vector<1x16x16xf32>
    %164 = vector.shape_cast %163 : vector<1x16x16xf32> to vector<16x16xf32>
    %c3_78 = arith.constant 3 : index
    %c0_79 = arith.constant 0 : index
    %c0_80 = arith.constant 0 : index
    %165 = vector.load %arg1[%c3_78, %c0_79, %c0_80] : memref<11x96x96xf32, #tpu.memory_space<vmem>>, vector<1x96x96xf32>
    %166 = vector.shape_cast %165 : vector<1x96x96xf32> to vector<96x96xf32>
    %c3_81 = arith.constant 3 : index
    %c0_82 = arith.constant 0 : index
    %c0_83 = arith.constant 0 : index
    %167 = vector.load %arg3[%c3_81, %c0_82, %c0_83] : memref<11x1x16xf32, #tpu.memory_space<vmem>>, vector<1x1x16xf32>
    %168 = vector.shape_cast %167 : vector<1x1x16xf32> to vector<1x16xf32>
    %c3_84 = arith.constant 3 : index
    %c0_85 = arith.constant 0 : index
    %c0_86 = arith.constant 0 : index
    %169 = vector.load %arg4[%c3_84, %c0_85, %c0_86] : memref<11x48x16xf32, #tpu.memory_space<vmem>>, vector<1x48x16xf32>
    %170 = vector.shape_cast %169 : vector<1x48x16xf32> to vector<48x16xf32>
    %c3_87 = arith.constant 3 : index
    %c0_88 = arith.constant 0 : index
    %c0_89 = arith.constant 0 : index
    %171 = vector.load %arg5[%c3_87, %c0_88, %c0_89] : memref<11x48x16xf32, #tpu.memory_space<vmem>>, vector<1x48x16xf32>
    %172 = vector.shape_cast %171 : vector<1x48x16xf32> to vector<48x16xf32>
    %cst_90 = arith.constant dense<0.000000e+00> : vector<96x16xf32>
    %173 = tpu.matmul %162, %164, %cst_90 {dimension_numbers = #tpu.dot_dimension_numbers<[1], [0], [0], [1], [0, 0, 1, 1], [], []>} : vector<96x16xf32>, vector<16x16xf32>, vector<96x16xf32> -> vector<96x16xf32>
    %cst_91 = arith.constant dense<0.000000e+00> : vector<96x16xf32>
    %174 = tpu.matmul %166, %173, %cst_91 {dimension_numbers = #tpu.dot_dimension_numbers<[1], [0], [0], [1], [0, 0, 1, 1], [], []>} : vector<96x96xf32>, vector<96x16xf32>, vector<96x16xf32> -> vector<96x16xf32>
    %175 = vector.broadcast %168 : vector<1x16xf32> to vector<96x16xf32>
    %176 = arith.addf %174, %175 : vector<96x16xf32>
    %177 = vector.extract_strided_slice %176 {offsets = [0, 0], sizes = [48, 16], strides = [1, 1]} : vector<96x16xf32> to vector<48x16xf32>
    %178 = vector.extract_strided_slice %176 {offsets = [48, 0], sizes = [48, 16], strides = [1, 1]} : vector<96x16xf32> to vector<48x16xf32>
    %179 = arith.addf %177, %178 : vector<48x16xf32>
    %cst_92 = arith.constant 5.000000e-01 : f32
    %180 = vector.broadcast %cst_92 : f32 to vector<48x16xf32>
    %181 = arith.mulf %179, %180 : vector<48x16xf32>
    %182 = arith.subf %177, %181 : vector<48x16xf32>
    %183 = arith.subf %177, %181 : vector<48x16xf32>
    %184 = arith.mulf %182, %183 : vector<48x16xf32>
    %185 = arith.subf %178, %181 : vector<48x16xf32>
    %186 = arith.subf %178, %181 : vector<48x16xf32>
    %187 = arith.mulf %185, %186 : vector<48x16xf32>
    %188 = arith.addf %184, %187 : vector<48x16xf32>
    %cst_93 = arith.constant 5.000000e-01 : f32
    %189 = vector.broadcast %cst_93 : f32 to vector<48x16xf32>
    %190 = arith.mulf %188, %189 : vector<48x16xf32>
    %cst_94 = arith.constant 9.99999974E-6 : f32
    %191 = vector.broadcast %cst_94 : f32 to vector<48x16xf32>
    %192 = arith.addf %190, %191 : vector<48x16xf32>
    %193 = math.rsqrt %192 : vector<48x16xf32>
    %194 = arith.subf %177, %181 : vector<48x16xf32>
    %195 = arith.mulf %194, %193 : vector<48x16xf32>
    %196 = arith.mulf %195, %170 : vector<48x16xf32>
    %197 = arith.addf %196, %172 : vector<48x16xf32>
    %cst_95 = arith.constant 0.000000e+00 : f32
    %198 = vector.broadcast %cst_95 : f32 to vector<48x16xf32>
    %199 = arith.subf %198, %197 : vector<48x16xf32>
    %200 = math.exp %199 : vector<48x16xf32>
    %cst_96 = arith.constant 1.000000e+00 : f32
    %201 = vector.broadcast %cst_96 : f32 to vector<48x16xf32>
    %202 = arith.addf %201, %200 : vector<48x16xf32>
    %cst_97 = arith.constant 1.000000e+00 : f32
    %203 = vector.broadcast %cst_97 : f32 to vector<48x16xf32>
    %204 = arith.divf %203, %202 : vector<48x16xf32>
    %205 = arith.subf %178, %181 : vector<48x16xf32>
    %206 = arith.mulf %205, %193 : vector<48x16xf32>
    %207 = arith.mulf %206, %170 : vector<48x16xf32>
    %208 = arith.addf %207, %172 : vector<48x16xf32>
    %cst_98 = arith.constant 0.000000e+00 : f32
    %209 = vector.broadcast %cst_98 : f32 to vector<48x16xf32>
    %210 = arith.subf %209, %208 : vector<48x16xf32>
    %211 = math.exp %210 : vector<48x16xf32>
    %cst_99 = arith.constant 1.000000e+00 : f32
    %212 = vector.broadcast %cst_99 : f32 to vector<48x16xf32>
    %213 = arith.addf %212, %211 : vector<48x16xf32>
    %cst_100 = arith.constant 1.000000e+00 : f32
    %214 = vector.broadcast %cst_100 : f32 to vector<48x16xf32>
    %215 = arith.divf %214, %213 : vector<48x16xf32>
    %216 = tpu.concatenate %204, %215 in 0 : vector<48x16xf32>, vector<48x16xf32> -> vector<96x16xf32>
    %c4 = arith.constant 4 : index
    %c0_101 = arith.constant 0 : index
    %c0_102 = arith.constant 0 : index
    %217 = vector.load %arg2[%c4, %c0_101, %c0_102] : memref<11x16x16xf32, #tpu.memory_space<vmem>>, vector<1x16x16xf32>
    %218 = vector.shape_cast %217 : vector<1x16x16xf32> to vector<16x16xf32>
    %c4_103 = arith.constant 4 : index
    %c0_104 = arith.constant 0 : index
    %c0_105 = arith.constant 0 : index
    %219 = vector.load %arg1[%c4_103, %c0_104, %c0_105] : memref<11x96x96xf32, #tpu.memory_space<vmem>>, vector<1x96x96xf32>
    %220 = vector.shape_cast %219 : vector<1x96x96xf32> to vector<96x96xf32>
    %c4_106 = arith.constant 4 : index
    %c0_107 = arith.constant 0 : index
    %c0_108 = arith.constant 0 : index
    %221 = vector.load %arg3[%c4_106, %c0_107, %c0_108] : memref<11x1x16xf32, #tpu.memory_space<vmem>>, vector<1x1x16xf32>
    %222 = vector.shape_cast %221 : vector<1x1x16xf32> to vector<1x16xf32>
    %c4_109 = arith.constant 4 : index
    %c0_110 = arith.constant 0 : index
    %c0_111 = arith.constant 0 : index
    %223 = vector.load %arg4[%c4_109, %c0_110, %c0_111] : memref<11x48x16xf32, #tpu.memory_space<vmem>>, vector<1x48x16xf32>
    %224 = vector.shape_cast %223 : vector<1x48x16xf32> to vector<48x16xf32>
    %c4_112 = arith.constant 4 : index
    %c0_113 = arith.constant 0 : index
    %c0_114 = arith.constant 0 : index
    %225 = vector.load %arg5[%c4_112, %c0_113, %c0_114] : memref<11x48x16xf32, #tpu.memory_space<vmem>>, vector<1x48x16xf32>
    %226 = vector.shape_cast %225 : vector<1x48x16xf32> to vector<48x16xf32>
    %cst_115 = arith.constant dense<0.000000e+00> : vector<96x16xf32>
    %227 = tpu.matmul %216, %218, %cst_115 {dimension_numbers = #tpu.dot_dimension_numbers<[1], [0], [0], [1], [0, 0, 1, 1], [], []>} : vector<96x16xf32>, vector<16x16xf32>, vector<96x16xf32> -> vector<96x16xf32>
    %cst_116 = arith.constant dense<0.000000e+00> : vector<96x16xf32>
    %228 = tpu.matmul %220, %227, %cst_116 {dimension_numbers = #tpu.dot_dimension_numbers<[1], [0], [0], [1], [0, 0, 1, 1], [], []>} : vector<96x96xf32>, vector<96x16xf32>, vector<96x16xf32> -> vector<96x16xf32>
    %229 = vector.broadcast %222 : vector<1x16xf32> to vector<96x16xf32>
    %230 = arith.addf %228, %229 : vector<96x16xf32>
    %231 = vector.extract_strided_slice %230 {offsets = [0, 0], sizes = [48, 16], strides = [1, 1]} : vector<96x16xf32> to vector<48x16xf32>
    %232 = vector.extract_strided_slice %230 {offsets = [48, 0], sizes = [48, 16], strides = [1, 1]} : vector<96x16xf32> to vector<48x16xf32>
    %233 = arith.addf %231, %232 : vector<48x16xf32>
    %cst_117 = arith.constant 5.000000e-01 : f32
    %234 = vector.broadcast %cst_117 : f32 to vector<48x16xf32>
    %235 = arith.mulf %233, %234 : vector<48x16xf32>
    %236 = arith.subf %231, %235 : vector<48x16xf32>
    %237 = arith.subf %231, %235 : vector<48x16xf32>
    %238 = arith.mulf %236, %237 : vector<48x16xf32>
    %239 = arith.subf %232, %235 : vector<48x16xf32>
    %240 = arith.subf %232, %235 : vector<48x16xf32>
    %241 = arith.mulf %239, %240 : vector<48x16xf32>
    %242 = arith.addf %238, %241 : vector<48x16xf32>
    %cst_118 = arith.constant 5.000000e-01 : f32
    %243 = vector.broadcast %cst_118 : f32 to vector<48x16xf32>
    %244 = arith.mulf %242, %243 : vector<48x16xf32>
    %cst_119 = arith.constant 9.99999974E-6 : f32
    %245 = vector.broadcast %cst_119 : f32 to vector<48x16xf32>
    %246 = arith.addf %244, %245 : vector<48x16xf32>
    %247 = math.rsqrt %246 : vector<48x16xf32>
    %248 = arith.subf %231, %235 : vector<48x16xf32>
    %249 = arith.mulf %248, %247 : vector<48x16xf32>
    %250 = arith.mulf %249, %224 : vector<48x16xf32>
    %251 = arith.addf %250, %226 : vector<48x16xf32>
    %cst_120 = arith.constant 0.000000e+00 : f32
    %252 = vector.broadcast %cst_120 : f32 to vector<48x16xf32>
    %253 = arith.subf %252, %251 : vector<48x16xf32>
    %254 = math.exp %253 : vector<48x16xf32>
    %cst_121 = arith.constant 1.000000e+00 : f32
    %255 = vector.broadcast %cst_121 : f32 to vector<48x16xf32>
    %256 = arith.addf %255, %254 : vector<48x16xf32>
    %cst_122 = arith.constant 1.000000e+00 : f32
    %257 = vector.broadcast %cst_122 : f32 to vector<48x16xf32>
    %258 = arith.divf %257, %256 : vector<48x16xf32>
    %259 = arith.subf %232, %235 : vector<48x16xf32>
    %260 = arith.mulf %259, %247 : vector<48x16xf32>
    %261 = arith.mulf %260, %224 : vector<48x16xf32>
    %262 = arith.addf %261, %226 : vector<48x16xf32>
    %cst_123 = arith.constant 0.000000e+00 : f32
    %263 = vector.broadcast %cst_123 : f32 to vector<48x16xf32>
    %264 = arith.subf %263, %262 : vector<48x16xf32>
    %265 = math.exp %264 : vector<48x16xf32>
    %cst_124 = arith.constant 1.000000e+00 : f32
    %266 = vector.broadcast %cst_124 : f32 to vector<48x16xf32>
    %267 = arith.addf %266, %265 : vector<48x16xf32>
    %cst_125 = arith.constant 1.000000e+00 : f32
    %268 = vector.broadcast %cst_125 : f32 to vector<48x16xf32>
    %269 = arith.divf %268, %267 : vector<48x16xf32>
    %270 = tpu.concatenate %258, %269 in 0 : vector<48x16xf32>, vector<48x16xf32> -> vector<96x16xf32>
    %c5 = arith.constant 5 : index
    %c0_126 = arith.constant 0 : index
    %c0_127 = arith.constant 0 : index
    %271 = vector.load %arg2[%c5, %c0_126, %c0_127] : memref<11x16x16xf32, #tpu.memory_space<vmem>>, vector<1x16x16xf32>
    %272 = vector.shape_cast %271 : vector<1x16x16xf32> to vector<16x16xf32>
    %c5_128 = arith.constant 5 : index
    %c0_129 = arith.constant 0 : index
    %c0_130 = arith.constant 0 : index
    %273 = vector.load %arg1[%c5_128, %c0_129, %c0_130] : memref<11x96x96xf32, #tpu.memory_space<vmem>>, vector<1x96x96xf32>
    %274 = vector.shape_cast %273 : vector<1x96x96xf32> to vector<96x96xf32>
    %c5_131 = arith.constant 5 : index
    %c0_132 = arith.constant 0 : index
    %c0_133 = arith.constant 0 : index
    %275 = vector.load %arg3[%c5_131, %c0_132, %c0_133] : memref<11x1x16xf32, #tpu.memory_space<vmem>>, vector<1x1x16xf32>
    %276 = vector.shape_cast %275 : vector<1x1x16xf32> to vector<1x16xf32>
    %c5_134 = arith.constant 5 : index
    %c0_135 = arith.constant 0 : index
    %c0_136 = arith.constant 0 : index
    %277 = vector.load %arg4[%c5_134, %c0_135, %c0_136] : memref<11x48x16xf32, #tpu.memory_space<vmem>>, vector<1x48x16xf32>
    %278 = vector.shape_cast %277 : vector<1x48x16xf32> to vector<48x16xf32>
    %c5_137 = arith.constant 5 : index
    %c0_138 = arith.constant 0 : index
    %c0_139 = arith.constant 0 : index
    %279 = vector.load %arg5[%c5_137, %c0_138, %c0_139] : memref<11x48x16xf32, #tpu.memory_space<vmem>>, vector<1x48x16xf32>
    %280 = vector.shape_cast %279 : vector<1x48x16xf32> to vector<48x16xf32>
    %cst_140 = arith.constant dense<0.000000e+00> : vector<96x16xf32>
    %281 = tpu.matmul %270, %272, %cst_140 {dimension_numbers = #tpu.dot_dimension_numbers<[1], [0], [0], [1], [0, 0, 1, 1], [], []>} : vector<96x16xf32>, vector<16x16xf32>, vector<96x16xf32> -> vector<96x16xf32>
    %cst_141 = arith.constant dense<0.000000e+00> : vector<96x16xf32>
    %282 = tpu.matmul %274, %281, %cst_141 {dimension_numbers = #tpu.dot_dimension_numbers<[1], [0], [0], [1], [0, 0, 1, 1], [], []>} : vector<96x96xf32>, vector<96x16xf32>, vector<96x16xf32> -> vector<96x16xf32>
    %283 = vector.broadcast %276 : vector<1x16xf32> to vector<96x16xf32>
    %284 = arith.addf %282, %283 : vector<96x16xf32>
    %285 = vector.extract_strided_slice %284 {offsets = [0, 0], sizes = [48, 16], strides = [1, 1]} : vector<96x16xf32> to vector<48x16xf32>
    %286 = vector.extract_strided_slice %284 {offsets = [48, 0], sizes = [48, 16], strides = [1, 1]} : vector<96x16xf32> to vector<48x16xf32>
    %287 = arith.addf %285, %286 : vector<48x16xf32>
    %cst_142 = arith.constant 5.000000e-01 : f32
    %288 = vector.broadcast %cst_142 : f32 to vector<48x16xf32>
    %289 = arith.mulf %287, %288 : vector<48x16xf32>
    %290 = arith.subf %285, %289 : vector<48x16xf32>
    %291 = arith.subf %285, %289 : vector<48x16xf32>
    %292 = arith.mulf %290, %291 : vector<48x16xf32>
    %293 = arith.subf %286, %289 : vector<48x16xf32>
    %294 = arith.subf %286, %289 : vector<48x16xf32>
    %295 = arith.mulf %293, %294 : vector<48x16xf32>
    %296 = arith.addf %292, %295 : vector<48x16xf32>
    %cst_143 = arith.constant 5.000000e-01 : f32
    %297 = vector.broadcast %cst_143 : f32 to vector<48x16xf32>
    %298 = arith.mulf %296, %297 : vector<48x16xf32>
    %cst_144 = arith.constant 9.99999974E-6 : f32
    %299 = vector.broadcast %cst_144 : f32 to vector<48x16xf32>
    %300 = arith.addf %298, %299 : vector<48x16xf32>
    %301 = math.rsqrt %300 : vector<48x16xf32>
    %302 = arith.subf %285, %289 : vector<48x16xf32>
    %303 = arith.mulf %302, %301 : vector<48x16xf32>
    %304 = arith.mulf %303, %278 : vector<48x16xf32>
    %305 = arith.addf %304, %280 : vector<48x16xf32>
    %cst_145 = arith.constant 0.000000e+00 : f32
    %306 = vector.broadcast %cst_145 : f32 to vector<48x16xf32>
    %307 = arith.subf %306, %305 : vector<48x16xf32>
    %308 = math.exp %307 : vector<48x16xf32>
    %cst_146 = arith.constant 1.000000e+00 : f32
    %309 = vector.broadcast %cst_146 : f32 to vector<48x16xf32>
    %310 = arith.addf %309, %308 : vector<48x16xf32>
    %cst_147 = arith.constant 1.000000e+00 : f32
    %311 = vector.broadcast %cst_147 : f32 to vector<48x16xf32>
    %312 = arith.divf %311, %310 : vector<48x16xf32>
    %313 = arith.subf %286, %289 : vector<48x16xf32>
    %314 = arith.mulf %313, %301 : vector<48x16xf32>
    %315 = arith.mulf %314, %278 : vector<48x16xf32>
    %316 = arith.addf %315, %280 : vector<48x16xf32>
    %cst_148 = arith.constant 0.000000e+00 : f32
    %317 = vector.broadcast %cst_148 : f32 to vector<48x16xf32>
    %318 = arith.subf %317, %316 : vector<48x16xf32>
    %319 = math.exp %318 : vector<48x16xf32>
    %cst_149 = arith.constant 1.000000e+00 : f32
    %320 = vector.broadcast %cst_149 : f32 to vector<48x16xf32>
    %321 = arith.addf %320, %319 : vector<48x16xf32>
    %cst_150 = arith.constant 1.000000e+00 : f32
    %322 = vector.broadcast %cst_150 : f32 to vector<48x16xf32>
    %323 = arith.divf %322, %321 : vector<48x16xf32>
    %324 = tpu.concatenate %312, %323 in 0 : vector<48x16xf32>, vector<48x16xf32> -> vector<96x16xf32>
    %325 = arith.addf %324, %270 : vector<96x16xf32>
    %c6 = arith.constant 6 : index
    %c0_151 = arith.constant 0 : index
    %c0_152 = arith.constant 0 : index
    %326 = vector.load %arg2[%c6, %c0_151, %c0_152] : memref<11x16x16xf32, #tpu.memory_space<vmem>>, vector<1x16x16xf32>
    %327 = vector.shape_cast %326 : vector<1x16x16xf32> to vector<16x16xf32>
    %c6_153 = arith.constant 6 : index
    %c0_154 = arith.constant 0 : index
    %c0_155 = arith.constant 0 : index
    %328 = vector.load %arg1[%c6_153, %c0_154, %c0_155] : memref<11x96x96xf32, #tpu.memory_space<vmem>>, vector<1x96x96xf32>
    %329 = vector.shape_cast %328 : vector<1x96x96xf32> to vector<96x96xf32>
    %c6_156 = arith.constant 6 : index
    %c0_157 = arith.constant 0 : index
    %c0_158 = arith.constant 0 : index
    %330 = vector.load %arg3[%c6_156, %c0_157, %c0_158] : memref<11x1x16xf32, #tpu.memory_space<vmem>>, vector<1x1x16xf32>
    %331 = vector.shape_cast %330 : vector<1x1x16xf32> to vector<1x16xf32>
    %c6_159 = arith.constant 6 : index
    %c0_160 = arith.constant 0 : index
    %c0_161 = arith.constant 0 : index
    %332 = vector.load %arg4[%c6_159, %c0_160, %c0_161] : memref<11x48x16xf32, #tpu.memory_space<vmem>>, vector<1x48x16xf32>
    %333 = vector.shape_cast %332 : vector<1x48x16xf32> to vector<48x16xf32>
    %c6_162 = arith.constant 6 : index
    %c0_163 = arith.constant 0 : index
    %c0_164 = arith.constant 0 : index
    %334 = vector.load %arg5[%c6_162, %c0_163, %c0_164] : memref<11x48x16xf32, #tpu.memory_space<vmem>>, vector<1x48x16xf32>
    %335 = vector.shape_cast %334 : vector<1x48x16xf32> to vector<48x16xf32>
    %cst_165 = arith.constant dense<0.000000e+00> : vector<96x16xf32>
    %336 = tpu.matmul %325, %327, %cst_165 {dimension_numbers = #tpu.dot_dimension_numbers<[1], [0], [0], [1], [0, 0, 1, 1], [], []>} : vector<96x16xf32>, vector<16x16xf32>, vector<96x16xf32> -> vector<96x16xf32>
    %cst_166 = arith.constant dense<0.000000e+00> : vector<96x16xf32>
    %337 = tpu.matmul %329, %336, %cst_166 {dimension_numbers = #tpu.dot_dimension_numbers<[1], [0], [0], [1], [0, 0, 1, 1], [], []>} : vector<96x96xf32>, vector<96x16xf32>, vector<96x16xf32> -> vector<96x16xf32>
    %338 = vector.broadcast %331 : vector<1x16xf32> to vector<96x16xf32>
    %339 = arith.addf %337, %338 : vector<96x16xf32>
    %340 = vector.extract_strided_slice %339 {offsets = [0, 0], sizes = [48, 16], strides = [1, 1]} : vector<96x16xf32> to vector<48x16xf32>
    %341 = vector.extract_strided_slice %339 {offsets = [48, 0], sizes = [48, 16], strides = [1, 1]} : vector<96x16xf32> to vector<48x16xf32>
    %342 = arith.addf %340, %341 : vector<48x16xf32>
    %cst_167 = arith.constant 5.000000e-01 : f32
    %343 = vector.broadcast %cst_167 : f32 to vector<48x16xf32>
    %344 = arith.mulf %342, %343 : vector<48x16xf32>
    %345 = arith.subf %340, %344 : vector<48x16xf32>
    %346 = arith.subf %340, %344 : vector<48x16xf32>
    %347 = arith.mulf %345, %346 : vector<48x16xf32>
    %348 = arith.subf %341, %344 : vector<48x16xf32>
    %349 = arith.subf %341, %344 : vector<48x16xf32>
    %350 = arith.mulf %348, %349 : vector<48x16xf32>
    %351 = arith.addf %347, %350 : vector<48x16xf32>
    %cst_168 = arith.constant 5.000000e-01 : f32
    %352 = vector.broadcast %cst_168 : f32 to vector<48x16xf32>
    %353 = arith.mulf %351, %352 : vector<48x16xf32>
    %cst_169 = arith.constant 9.99999974E-6 : f32
    %354 = vector.broadcast %cst_169 : f32 to vector<48x16xf32>
    %355 = arith.addf %353, %354 : vector<48x16xf32>
    %356 = math.rsqrt %355 : vector<48x16xf32>
    %357 = arith.subf %340, %344 : vector<48x16xf32>
    %358 = arith.mulf %357, %356 : vector<48x16xf32>
    %359 = arith.mulf %358, %333 : vector<48x16xf32>
    %360 = arith.addf %359, %335 : vector<48x16xf32>
    %cst_170 = arith.constant 0.000000e+00 : f32
    %361 = vector.broadcast %cst_170 : f32 to vector<48x16xf32>
    %362 = arith.subf %361, %360 : vector<48x16xf32>
    %363 = math.exp %362 : vector<48x16xf32>
    %cst_171 = arith.constant 1.000000e+00 : f32
    %364 = vector.broadcast %cst_171 : f32 to vector<48x16xf32>
    %365 = arith.addf %364, %363 : vector<48x16xf32>
    %cst_172 = arith.constant 1.000000e+00 : f32
    %366 = vector.broadcast %cst_172 : f32 to vector<48x16xf32>
    %367 = arith.divf %366, %365 : vector<48x16xf32>
    %368 = arith.subf %341, %344 : vector<48x16xf32>
    %369 = arith.mulf %368, %356 : vector<48x16xf32>
    %370 = arith.mulf %369, %333 : vector<48x16xf32>
    %371 = arith.addf %370, %335 : vector<48x16xf32>
    %cst_173 = arith.constant 0.000000e+00 : f32
    %372 = vector.broadcast %cst_173 : f32 to vector<48x16xf32>
    %373 = arith.subf %372, %371 : vector<48x16xf32>
    %374 = math.exp %373 : vector<48x16xf32>
    %cst_174 = arith.constant 1.000000e+00 : f32
    %375 = vector.broadcast %cst_174 : f32 to vector<48x16xf32>
    %376 = arith.addf %375, %374 : vector<48x16xf32>
    %cst_175 = arith.constant 1.000000e+00 : f32
    %377 = vector.broadcast %cst_175 : f32 to vector<48x16xf32>
    %378 = arith.divf %377, %376 : vector<48x16xf32>
    %379 = tpu.concatenate %367, %378 in 0 : vector<48x16xf32>, vector<48x16xf32> -> vector<96x16xf32>
    %380 = arith.addf %379, %216 : vector<96x16xf32>
    %c7 = arith.constant 7 : index
    %c0_176 = arith.constant 0 : index
    %c0_177 = arith.constant 0 : index
    %381 = vector.load %arg2[%c7, %c0_176, %c0_177] : memref<11x16x16xf32, #tpu.memory_space<vmem>>, vector<1x16x16xf32>
    %382 = vector.shape_cast %381 : vector<1x16x16xf32> to vector<16x16xf32>
    %c7_178 = arith.constant 7 : index
    %c0_179 = arith.constant 0 : index
    %c0_180 = arith.constant 0 : index
    %383 = vector.load %arg1[%c7_178, %c0_179, %c0_180] : memref<11x96x96xf32, #tpu.memory_space<vmem>>, vector<1x96x96xf32>
    %384 = vector.shape_cast %383 : vector<1x96x96xf32> to vector<96x96xf32>
    %c7_181 = arith.constant 7 : index
    %c0_182 = arith.constant 0 : index
    %c0_183 = arith.constant 0 : index
    %385 = vector.load %arg3[%c7_181, %c0_182, %c0_183] : memref<11x1x16xf32, #tpu.memory_space<vmem>>, vector<1x1x16xf32>
    %386 = vector.shape_cast %385 : vector<1x1x16xf32> to vector<1x16xf32>
    %c7_184 = arith.constant 7 : index
    %c0_185 = arith.constant 0 : index
    %c0_186 = arith.constant 0 : index
    %387 = vector.load %arg4[%c7_184, %c0_185, %c0_186] : memref<11x48x16xf32, #tpu.memory_space<vmem>>, vector<1x48x16xf32>
    %388 = vector.shape_cast %387 : vector<1x48x16xf32> to vector<48x16xf32>
    %c7_187 = arith.constant 7 : index
    %c0_188 = arith.constant 0 : index
    %c0_189 = arith.constant 0 : index
    %389 = vector.load %arg5[%c7_187, %c0_188, %c0_189] : memref<11x48x16xf32, #tpu.memory_space<vmem>>, vector<1x48x16xf32>
    %390 = vector.shape_cast %389 : vector<1x48x16xf32> to vector<48x16xf32>
    %cst_190 = arith.constant dense<0.000000e+00> : vector<96x16xf32>
    %391 = tpu.matmul %380, %382, %cst_190 {dimension_numbers = #tpu.dot_dimension_numbers<[1], [0], [0], [1], [0, 0, 1, 1], [], []>} : vector<96x16xf32>, vector<16x16xf32>, vector<96x16xf32> -> vector<96x16xf32>
    %cst_191 = arith.constant dense<0.000000e+00> : vector<96x16xf32>
    %392 = tpu.matmul %384, %391, %cst_191 {dimension_numbers = #tpu.dot_dimension_numbers<[1], [0], [0], [1], [0, 0, 1, 1], [], []>} : vector<96x96xf32>, vector<96x16xf32>, vector<96x16xf32> -> vector<96x16xf32>
    %393 = vector.broadcast %386 : vector<1x16xf32> to vector<96x16xf32>
    %394 = arith.addf %392, %393 : vector<96x16xf32>
    %395 = vector.extract_strided_slice %394 {offsets = [0, 0], sizes = [48, 16], strides = [1, 1]} : vector<96x16xf32> to vector<48x16xf32>
    %396 = vector.extract_strided_slice %394 {offsets = [48, 0], sizes = [48, 16], strides = [1, 1]} : vector<96x16xf32> to vector<48x16xf32>
    %397 = arith.addf %395, %396 : vector<48x16xf32>
    %cst_192 = arith.constant 5.000000e-01 : f32
    %398 = vector.broadcast %cst_192 : f32 to vector<48x16xf32>
    %399 = arith.mulf %397, %398 : vector<48x16xf32>
    %400 = arith.subf %395, %399 : vector<48x16xf32>
    %401 = arith.subf %395, %399 : vector<48x16xf32>
    %402 = arith.mulf %400, %401 : vector<48x16xf32>
    %403 = arith.subf %396, %399 : vector<48x16xf32>
    %404 = arith.subf %396, %399 : vector<48x16xf32>
    %405 = arith.mulf %403, %404 : vector<48x16xf32>
    %406 = arith.addf %402, %405 : vector<48x16xf32>
    %cst_193 = arith.constant 5.000000e-01 : f32
    %407 = vector.broadcast %cst_193 : f32 to vector<48x16xf32>
    %408 = arith.mulf %406, %407 : vector<48x16xf32>
    %cst_194 = arith.constant 9.99999974E-6 : f32
    %409 = vector.broadcast %cst_194 : f32 to vector<48x16xf32>
    %410 = arith.addf %408, %409 : vector<48x16xf32>
    %411 = math.rsqrt %410 : vector<48x16xf32>
    %412 = arith.subf %395, %399 : vector<48x16xf32>
    %413 = arith.mulf %412, %411 : vector<48x16xf32>
    %414 = arith.mulf %413, %388 : vector<48x16xf32>
    %415 = arith.addf %414, %390 : vector<48x16xf32>
    %cst_195 = arith.constant 0.000000e+00 : f32
    %416 = vector.broadcast %cst_195 : f32 to vector<48x16xf32>
    %417 = arith.subf %416, %415 : vector<48x16xf32>
    %418 = math.exp %417 : vector<48x16xf32>
    %cst_196 = arith.constant 1.000000e+00 : f32
    %419 = vector.broadcast %cst_196 : f32 to vector<48x16xf32>
    %420 = arith.addf %419, %418 : vector<48x16xf32>
    %cst_197 = arith.constant 1.000000e+00 : f32
    %421 = vector.broadcast %cst_197 : f32 to vector<48x16xf32>
    %422 = arith.divf %421, %420 : vector<48x16xf32>
    %423 = arith.subf %396, %399 : vector<48x16xf32>
    %424 = arith.mulf %423, %411 : vector<48x16xf32>
    %425 = arith.mulf %424, %388 : vector<48x16xf32>
    %426 = arith.addf %425, %390 : vector<48x16xf32>
    %cst_198 = arith.constant 0.000000e+00 : f32
    %427 = vector.broadcast %cst_198 : f32 to vector<48x16xf32>
    %428 = arith.subf %427, %426 : vector<48x16xf32>
    %429 = math.exp %428 : vector<48x16xf32>
    %cst_199 = arith.constant 1.000000e+00 : f32
    %430 = vector.broadcast %cst_199 : f32 to vector<48x16xf32>
    %431 = arith.addf %430, %429 : vector<48x16xf32>
    %cst_200 = arith.constant 1.000000e+00 : f32
    %432 = vector.broadcast %cst_200 : f32 to vector<48x16xf32>
    %433 = arith.divf %432, %431 : vector<48x16xf32>
    %434 = tpu.concatenate %422, %433 in 0 : vector<48x16xf32>, vector<48x16xf32> -> vector<96x16xf32>
    %435 = arith.addf %434, %162 : vector<96x16xf32>
    %c8 = arith.constant 8 : index
    %c0_201 = arith.constant 0 : index
    %c0_202 = arith.constant 0 : index
    %436 = vector.load %arg2[%c8, %c0_201, %c0_202] : memref<11x16x16xf32, #tpu.memory_space<vmem>>, vector<1x16x16xf32>
    %437 = vector.shape_cast %436 : vector<1x16x16xf32> to vector<16x16xf32>
    %c8_203 = arith.constant 8 : index
    %c0_204 = arith.constant 0 : index
    %c0_205 = arith.constant 0 : index
    %438 = vector.load %arg1[%c8_203, %c0_204, %c0_205] : memref<11x96x96xf32, #tpu.memory_space<vmem>>, vector<1x96x96xf32>
    %439 = vector.shape_cast %438 : vector<1x96x96xf32> to vector<96x96xf32>
    %c8_206 = arith.constant 8 : index
    %c0_207 = arith.constant 0 : index
    %c0_208 = arith.constant 0 : index
    %440 = vector.load %arg3[%c8_206, %c0_207, %c0_208] : memref<11x1x16xf32, #tpu.memory_space<vmem>>, vector<1x1x16xf32>
    %441 = vector.shape_cast %440 : vector<1x1x16xf32> to vector<1x16xf32>
    %c8_209 = arith.constant 8 : index
    %c0_210 = arith.constant 0 : index
    %c0_211 = arith.constant 0 : index
    %442 = vector.load %arg4[%c8_209, %c0_210, %c0_211] : memref<11x48x16xf32, #tpu.memory_space<vmem>>, vector<1x48x16xf32>
    %443 = vector.shape_cast %442 : vector<1x48x16xf32> to vector<48x16xf32>
    %c8_212 = arith.constant 8 : index
    %c0_213 = arith.constant 0 : index
    %c0_214 = arith.constant 0 : index
    %444 = vector.load %arg5[%c8_212, %c0_213, %c0_214] : memref<11x48x16xf32, #tpu.memory_space<vmem>>, vector<1x48x16xf32>
    %445 = vector.shape_cast %444 : vector<1x48x16xf32> to vector<48x16xf32>
    %cst_215 = arith.constant dense<0.000000e+00> : vector<96x16xf32>
    %446 = tpu.matmul %435, %437, %cst_215 {dimension_numbers = #tpu.dot_dimension_numbers<[1], [0], [0], [1], [0, 0, 1, 1], [], []>} : vector<96x16xf32>, vector<16x16xf32>, vector<96x16xf32> -> vector<96x16xf32>
    %cst_216 = arith.constant dense<0.000000e+00> : vector<96x16xf32>
    %447 = tpu.matmul %439, %446, %cst_216 {dimension_numbers = #tpu.dot_dimension_numbers<[1], [0], [0], [1], [0, 0, 1, 1], [], []>} : vector<96x96xf32>, vector<96x16xf32>, vector<96x16xf32> -> vector<96x16xf32>
    %448 = vector.broadcast %441 : vector<1x16xf32> to vector<96x16xf32>
    %449 = arith.addf %447, %448 : vector<96x16xf32>
    %450 = vector.extract_strided_slice %449 {offsets = [0, 0], sizes = [48, 16], strides = [1, 1]} : vector<96x16xf32> to vector<48x16xf32>
    %451 = vector.extract_strided_slice %449 {offsets = [48, 0], sizes = [48, 16], strides = [1, 1]} : vector<96x16xf32> to vector<48x16xf32>
    %452 = arith.addf %450, %451 : vector<48x16xf32>
    %cst_217 = arith.constant 5.000000e-01 : f32
    %453 = vector.broadcast %cst_217 : f32 to vector<48x16xf32>
    %454 = arith.mulf %452, %453 : vector<48x16xf32>
    %455 = arith.subf %450, %454 : vector<48x16xf32>
    %456 = arith.subf %450, %454 : vector<48x16xf32>
    %457 = arith.mulf %455, %456 : vector<48x16xf32>
    %458 = arith.subf %451, %454 : vector<48x16xf32>
    %459 = arith.subf %451, %454 : vector<48x16xf32>
    %460 = arith.mulf %458, %459 : vector<48x16xf32>
    %461 = arith.addf %457, %460 : vector<48x16xf32>
    %cst_218 = arith.constant 5.000000e-01 : f32
    %462 = vector.broadcast %cst_218 : f32 to vector<48x16xf32>
    %463 = arith.mulf %461, %462 : vector<48x16xf32>
    %cst_219 = arith.constant 9.99999974E-6 : f32
    %464 = vector.broadcast %cst_219 : f32 to vector<48x16xf32>
    %465 = arith.addf %463, %464 : vector<48x16xf32>
    %466 = math.rsqrt %465 : vector<48x16xf32>
    %467 = arith.subf %450, %454 : vector<48x16xf32>
    %468 = arith.mulf %467, %466 : vector<48x16xf32>
    %469 = arith.mulf %468, %443 : vector<48x16xf32>
    %470 = arith.addf %469, %445 : vector<48x16xf32>
    %cst_220 = arith.constant 0.000000e+00 : f32
    %471 = vector.broadcast %cst_220 : f32 to vector<48x16xf32>
    %472 = arith.subf %471, %470 : vector<48x16xf32>
    %473 = math.exp %472 : vector<48x16xf32>
    %cst_221 = arith.constant 1.000000e+00 : f32
    %474 = vector.broadcast %cst_221 : f32 to vector<48x16xf32>
    %475 = arith.addf %474, %473 : vector<48x16xf32>
    %cst_222 = arith.constant 1.000000e+00 : f32
    %476 = vector.broadcast %cst_222 : f32 to vector<48x16xf32>
    %477 = arith.divf %476, %475 : vector<48x16xf32>
    %478 = arith.subf %451, %454 : vector<48x16xf32>
    %479 = arith.mulf %478, %466 : vector<48x16xf32>
    %480 = arith.mulf %479, %443 : vector<48x16xf32>
    %481 = arith.addf %480, %445 : vector<48x16xf32>
    %cst_223 = arith.constant 0.000000e+00 : f32
    %482 = vector.broadcast %cst_223 : f32 to vector<48x16xf32>
    %483 = arith.subf %482, %481 : vector<48x16xf32>
    %484 = math.exp %483 : vector<48x16xf32>
    %cst_224 = arith.constant 1.000000e+00 : f32
    %485 = vector.broadcast %cst_224 : f32 to vector<48x16xf32>
    %486 = arith.addf %485, %484 : vector<48x16xf32>
    %cst_225 = arith.constant 1.000000e+00 : f32
    %487 = vector.broadcast %cst_225 : f32 to vector<48x16xf32>
    %488 = arith.divf %487, %486 : vector<48x16xf32>
    %489 = tpu.concatenate %477, %488 in 0 : vector<48x16xf32>, vector<48x16xf32> -> vector<96x16xf32>
    %490 = arith.addf %489, %108 : vector<96x16xf32>
    %c9 = arith.constant 9 : index
    %c0_226 = arith.constant 0 : index
    %c0_227 = arith.constant 0 : index
    %491 = vector.load %arg2[%c9, %c0_226, %c0_227] : memref<11x16x16xf32, #tpu.memory_space<vmem>>, vector<1x16x16xf32>
    %492 = vector.shape_cast %491 : vector<1x16x16xf32> to vector<16x16xf32>
    %c9_228 = arith.constant 9 : index
    %c0_229 = arith.constant 0 : index
    %c0_230 = arith.constant 0 : index
    %493 = vector.load %arg1[%c9_228, %c0_229, %c0_230] : memref<11x96x96xf32, #tpu.memory_space<vmem>>, vector<1x96x96xf32>
    %494 = vector.shape_cast %493 : vector<1x96x96xf32> to vector<96x96xf32>
    %c9_231 = arith.constant 9 : index
    %c0_232 = arith.constant 0 : index
    %c0_233 = arith.constant 0 : index
    %495 = vector.load %arg3[%c9_231, %c0_232, %c0_233] : memref<11x1x16xf32, #tpu.memory_space<vmem>>, vector<1x1x16xf32>
    %496 = vector.shape_cast %495 : vector<1x1x16xf32> to vector<1x16xf32>
    %c9_234 = arith.constant 9 : index
    %c0_235 = arith.constant 0 : index
    %c0_236 = arith.constant 0 : index
    %497 = vector.load %arg4[%c9_234, %c0_235, %c0_236] : memref<11x48x16xf32, #tpu.memory_space<vmem>>, vector<1x48x16xf32>
    %498 = vector.shape_cast %497 : vector<1x48x16xf32> to vector<48x16xf32>
    %c9_237 = arith.constant 9 : index
    %c0_238 = arith.constant 0 : index
    %c0_239 = arith.constant 0 : index
    %499 = vector.load %arg5[%c9_237, %c0_238, %c0_239] : memref<11x48x16xf32, #tpu.memory_space<vmem>>, vector<1x48x16xf32>
    %500 = vector.shape_cast %499 : vector<1x48x16xf32> to vector<48x16xf32>
    %cst_240 = arith.constant dense<0.000000e+00> : vector<96x16xf32>
    %501 = tpu.matmul %490, %492, %cst_240 {dimension_numbers = #tpu.dot_dimension_numbers<[1], [0], [0], [1], [0, 0, 1, 1], [], []>} : vector<96x16xf32>, vector<16x16xf32>, vector<96x16xf32> -> vector<96x16xf32>
    %cst_241 = arith.constant dense<0.000000e+00> : vector<96x16xf32>
    %502 = tpu.matmul %494, %501, %cst_241 {dimension_numbers = #tpu.dot_dimension_numbers<[1], [0], [0], [1], [0, 0, 1, 1], [], []>} : vector<96x96xf32>, vector<96x16xf32>, vector<96x16xf32> -> vector<96x16xf32>
    %503 = vector.broadcast %496 : vector<1x16xf32> to vector<96x16xf32>
    %504 = arith.addf %502, %503 : vector<96x16xf32>
    %505 = vector.extract_strided_slice %504 {offsets = [0, 0], sizes = [48, 16], strides = [1, 1]} : vector<96x16xf32> to vector<48x16xf32>
    %506 = vector.extract_strided_slice %504 {offsets = [48, 0], sizes = [48, 16], strides = [1, 1]} : vector<96x16xf32> to vector<48x16xf32>
    %507 = arith.addf %505, %506 : vector<48x16xf32>
    %cst_242 = arith.constant 5.000000e-01 : f32
    %508 = vector.broadcast %cst_242 : f32 to vector<48x16xf32>
    %509 = arith.mulf %507, %508 : vector<48x16xf32>
    %510 = arith.subf %505, %509 : vector<48x16xf32>
    %511 = arith.subf %505, %509 : vector<48x16xf32>
    %512 = arith.mulf %510, %511 : vector<48x16xf32>
    %513 = arith.subf %506, %509 : vector<48x16xf32>
    %514 = arith.subf %506, %509 : vector<48x16xf32>
    %515 = arith.mulf %513, %514 : vector<48x16xf32>
    %516 = arith.addf %512, %515 : vector<48x16xf32>
    %cst_243 = arith.constant 5.000000e-01 : f32
    %517 = vector.broadcast %cst_243 : f32 to vector<48x16xf32>
    %518 = arith.mulf %516, %517 : vector<48x16xf32>
    %cst_244 = arith.constant 9.99999974E-6 : f32
    %519 = vector.broadcast %cst_244 : f32 to vector<48x16xf32>
    %520 = arith.addf %518, %519 : vector<48x16xf32>
    %521 = math.rsqrt %520 : vector<48x16xf32>
    %522 = arith.subf %505, %509 : vector<48x16xf32>
    %523 = arith.mulf %522, %521 : vector<48x16xf32>
    %524 = arith.mulf %523, %498 : vector<48x16xf32>
    %525 = arith.addf %524, %500 : vector<48x16xf32>
    %cst_245 = arith.constant 0.000000e+00 : f32
    %526 = vector.broadcast %cst_245 : f32 to vector<48x16xf32>
    %527 = arith.subf %526, %525 : vector<48x16xf32>
    %528 = math.exp %527 : vector<48x16xf32>
    %cst_246 = arith.constant 1.000000e+00 : f32
    %529 = vector.broadcast %cst_246 : f32 to vector<48x16xf32>
    %530 = arith.addf %529, %528 : vector<48x16xf32>
    %cst_247 = arith.constant 1.000000e+00 : f32
    %531 = vector.broadcast %cst_247 : f32 to vector<48x16xf32>
    %532 = arith.divf %531, %530 : vector<48x16xf32>
    %533 = arith.subf %506, %509 : vector<48x16xf32>
    %534 = arith.mulf %533, %521 : vector<48x16xf32>
    %535 = arith.mulf %534, %498 : vector<48x16xf32>
    %536 = arith.addf %535, %500 : vector<48x16xf32>
    %cst_248 = arith.constant 0.000000e+00 : f32
    %537 = vector.broadcast %cst_248 : f32 to vector<48x16xf32>
    %538 = arith.subf %537, %536 : vector<48x16xf32>
    %539 = math.exp %538 : vector<48x16xf32>
    %cst_249 = arith.constant 1.000000e+00 : f32
    %540 = vector.broadcast %cst_249 : f32 to vector<48x16xf32>
    %541 = arith.addf %540, %539 : vector<48x16xf32>
    %cst_250 = arith.constant 1.000000e+00 : f32
    %542 = vector.broadcast %cst_250 : f32 to vector<48x16xf32>
    %543 = arith.divf %542, %541 : vector<48x16xf32>
    %544 = tpu.concatenate %532, %543 in 0 : vector<48x16xf32>, vector<48x16xf32> -> vector<96x16xf32>
    %545 = arith.addf %544, %54 : vector<96x16xf32>
    %c10 = arith.constant 10 : index
    %c0_251 = arith.constant 0 : index
    %c0_252 = arith.constant 0 : index
    %546 = vector.load %arg2[%c10, %c0_251, %c0_252] : memref<11x16x16xf32, #tpu.memory_space<vmem>>, vector<1x16x16xf32>
    %547 = vector.shape_cast %546 : vector<1x16x16xf32> to vector<16x16xf32>
    %c10_253 = arith.constant 10 : index
    %c0_254 = arith.constant 0 : index
    %c0_255 = arith.constant 0 : index
    %548 = vector.load %arg1[%c10_253, %c0_254, %c0_255] : memref<11x96x96xf32, #tpu.memory_space<vmem>>, vector<1x96x96xf32>
    %549 = vector.shape_cast %548 : vector<1x96x96xf32> to vector<96x96xf32>
    %c10_256 = arith.constant 10 : index
    %c0_257 = arith.constant 0 : index
    %c0_258 = arith.constant 0 : index
    %550 = vector.load %arg3[%c10_256, %c0_257, %c0_258] : memref<11x1x16xf32, #tpu.memory_space<vmem>>, vector<1x1x16xf32>
    %551 = vector.shape_cast %550 : vector<1x1x16xf32> to vector<1x16xf32>
    %c10_259 = arith.constant 10 : index
    %c0_260 = arith.constant 0 : index
    %c0_261 = arith.constant 0 : index
    %552 = vector.load %arg4[%c10_259, %c0_260, %c0_261] : memref<11x48x16xf32, #tpu.memory_space<vmem>>, vector<1x48x16xf32>
    %553 = vector.shape_cast %552 : vector<1x48x16xf32> to vector<48x16xf32>
    %c10_262 = arith.constant 10 : index
    %c0_263 = arith.constant 0 : index
    %c0_264 = arith.constant 0 : index
    %554 = vector.load %arg5[%c10_262, %c0_263, %c0_264] : memref<11x48x16xf32, #tpu.memory_space<vmem>>, vector<1x48x16xf32>
    %555 = vector.shape_cast %554 : vector<1x48x16xf32> to vector<48x16xf32>
    %cst_265 = arith.constant dense<0.000000e+00> : vector<96x16xf32>
    %556 = tpu.matmul %545, %547, %cst_265 {dimension_numbers = #tpu.dot_dimension_numbers<[1], [0], [0], [1], [0, 0, 1, 1], [], []>} : vector<96x16xf32>, vector<16x16xf32>, vector<96x16xf32> -> vector<96x16xf32>
    %cst_266 = arith.constant dense<0.000000e+00> : vector<96x16xf32>
    %557 = tpu.matmul %549, %556, %cst_266 {dimension_numbers = #tpu.dot_dimension_numbers<[1], [0], [0], [1], [0, 0, 1, 1], [], []>} : vector<96x96xf32>, vector<96x16xf32>, vector<96x16xf32> -> vector<96x16xf32>
    %558 = vector.broadcast %551 : vector<1x16xf32> to vector<96x16xf32>
    %559 = arith.addf %557, %558 : vector<96x16xf32>
    %560 = vector.extract_strided_slice %559 {offsets = [0, 0], sizes = [48, 16], strides = [1, 1]} : vector<96x16xf32> to vector<48x16xf32>
    %561 = vector.extract_strided_slice %559 {offsets = [48, 0], sizes = [48, 16], strides = [1, 1]} : vector<96x16xf32> to vector<48x16xf32>
    %562 = arith.addf %560, %561 : vector<48x16xf32>
    %cst_267 = arith.constant 5.000000e-01 : f32
    %563 = vector.broadcast %cst_267 : f32 to vector<48x16xf32>
    %564 = arith.mulf %562, %563 : vector<48x16xf32>
    %565 = arith.subf %560, %564 : vector<48x16xf32>
    %566 = arith.subf %560, %564 : vector<48x16xf32>
    %567 = arith.mulf %565, %566 : vector<48x16xf32>
    %568 = arith.subf %561, %564 : vector<48x16xf32>
    %569 = arith.subf %561, %564 : vector<48x16xf32>
    %570 = arith.mulf %568, %569 : vector<48x16xf32>
    %571 = arith.addf %567, %570 : vector<48x16xf32>
    %cst_268 = arith.constant 5.000000e-01 : f32
    %572 = vector.broadcast %cst_268 : f32 to vector<48x16xf32>
    %573 = arith.mulf %571, %572 : vector<48x16xf32>
    %cst_269 = arith.constant 9.99999974E-6 : f32
    %574 = vector.broadcast %cst_269 : f32 to vector<48x16xf32>
    %575 = arith.addf %573, %574 : vector<48x16xf32>
    %576 = math.rsqrt %575 : vector<48x16xf32>
    %577 = arith.subf %560, %564 : vector<48x16xf32>
    %578 = arith.mulf %577, %576 : vector<48x16xf32>
    %579 = arith.mulf %578, %553 : vector<48x16xf32>
    %580 = arith.addf %579, %555 : vector<48x16xf32>
    %cst_270 = arith.constant 0.000000e+00 : f32
    %581 = vector.broadcast %cst_270 : f32 to vector<48x16xf32>
    %582 = arith.subf %581, %580 : vector<48x16xf32>
    %583 = math.exp %582 : vector<48x16xf32>
    %cst_271 = arith.constant 1.000000e+00 : f32
    %584 = vector.broadcast %cst_271 : f32 to vector<48x16xf32>
    %585 = arith.addf %584, %583 : vector<48x16xf32>
    %cst_272 = arith.constant 1.000000e+00 : f32
    %586 = vector.broadcast %cst_272 : f32 to vector<48x16xf32>
    %587 = arith.divf %586, %585 : vector<48x16xf32>
    %588 = arith.subf %561, %564 : vector<48x16xf32>
    %589 = arith.mulf %588, %576 : vector<48x16xf32>
    %590 = arith.mulf %589, %553 : vector<48x16xf32>
    %591 = arith.addf %590, %555 : vector<48x16xf32>
    %cst_273 = arith.constant 0.000000e+00 : f32
    %592 = vector.broadcast %cst_273 : f32 to vector<48x16xf32>
    %593 = arith.subf %592, %591 : vector<48x16xf32>
    %594 = math.exp %593 : vector<48x16xf32>
    %cst_274 = arith.constant 1.000000e+00 : f32
    %595 = vector.broadcast %cst_274 : f32 to vector<48x16xf32>
    %596 = arith.addf %595, %594 : vector<48x16xf32>
    %cst_275 = arith.constant 1.000000e+00 : f32
    %597 = vector.broadcast %cst_275 : f32 to vector<48x16xf32>
    %598 = arith.divf %597, %596 : vector<48x16xf32>
    %599 = tpu.concatenate %587, %598 in 0 : vector<48x16xf32>, vector<48x16xf32> -> vector<96x16xf32>
    %600 = arith.addf %599, %0 : vector<96x16xf32>
    %c0_276 = arith.constant 0 : index
    %c0_277 = arith.constant 0 : index
    %601 = vector.load %arg6[%c0_276, %c0_277] : memref<96x16xf32, #tpu.memory_space<vmem>>, vector<96x16xf32>
    tpu.vector_store %arg6[%c0_276, %c0_277], %600 {strides = array<i32>} : memref<96x16xf32, #tpu.memory_space<vmem>>, vector<96x16xf32>,
    return
  }
}

</mosaic_0001>

<llo_original>
// kernel: gcn_forward_pallas.1
$region0: #{gcn_forward_pallas.1}
  #allocation0 [shape = 'u32[]', space=smem, size = 0x4, offset = 0x4, fixed_abs, tag = 'smem constant byte address 0x4 - core index']
  #allocation1 [shape = 'u32[144,128]{1,0:T(1,128)}', space=vmem, size = 0x12000, scoped, tag = 'internal scratch']
  %s0 = inlined_call_operand.vmem [shape: f32[96,16], index: 0, kind: input, shape index: {}]
  %s1 = inlined_call_operand.vmem [shape: f32[11,96,96], index: 1, kind: input, shape index: {}]
  %s2 = inlined_call_operand.vmem [shape: f32[11,16,16], index: 2, kind: input, shape index: {}]
  %s3 = inlined_call_operand.vmem [shape: f32[11,1,16], index: 3, kind: input, shape index: {}]
  %s4 = inlined_call_operand.vmem [shape: f32[11,48,16], index: 4, kind: input, shape index: {}]
  %s5 = inlined_call_operand.vmem [shape: f32[11,48,16], index: 5, kind: input, shape index: {}]
  %s6 = inlined_call_operand.vmem [shape: f32[96,16], index: 6, kind: output, shape index: {}]
  %s7 = sld [smem:[#allocation0]]
  $region34: #{gcn_forward_pallas.1} parent=0
    _
  %s9 = ssub.s32 1, %s7
  %s10 = scalar_select 0, %s9, %s7
  // Predicated region
  $region2: #{gcn_forward_pallas.1} parent=0 // pred_check
    _
  $region3: #{gcn_forward_pallas.1} parent=0 // pred_check_branch
    %12 = sbr.rel (0) target = $region5
  $region4: #{gcn_forward_pallas.1} parent=0 // pred_region
    _
  $region5: #{gcn_forward_pallas.1} parent=0 // pred_fallthru
    _
  // Predicated region
  $region6: #{gcn_forward_pallas.1} parent=0 // pred_check
    _
  $region7: #{gcn_forward_pallas.1} parent=0 // pred_check_branch
    %14 = sbr.rel (0) target = $region9
  $region8: #{gcn_forward_pallas.1} parent=0 // pred_region
    _
  $region9: #{gcn_forward_pallas.1} parent=0 // pred_fallthru
    _
  // Predicated region
  $region10: #{gcn_forward_pallas.1} parent=0 // pred_check
    _
  $region11: #{gcn_forward_pallas.1} parent=0 // pred_check_branch
    %16 = sbr.rel (0) target = $region13
  $region12: #{gcn_forward_pallas.1} parent=0 // pred_region
    _
  $region13: #{gcn_forward_pallas.1} parent=0 // pred_fallthru
    _
  // Predicated region
  $region14: #{gcn_forward_pallas.1} parent=0 // pred_check
    _
  $region15: #{gcn_forward_pallas.1} parent=0 // pred_check_branch
    %18 = sbr.rel (0) target = $region17
  $region16: #{gcn_forward_pallas.1} parent=0 // pred_region
    _
  $region17: #{gcn_forward_pallas.1} parent=0 // pred_fallthru
    _
  // Predicated region
  $region18: #{gcn_forward_pallas.1} parent=0 // pred_check
    _
  $region19: #{gcn_forward_pallas.1} parent=0 // pred_check_branch
    %20 = sbr.rel (0) target = $region21
  $region20: #{gcn_forward_pallas.1} parent=0 // pred_region
    _
  $region21: #{gcn_forward_pallas.1} parent=0 // pred_fallthru
    _
  // Predicated region
  $region22: #{gcn_forward_pallas.1} parent=0 // pred_check
    _
  $region23: #{gcn_forward_pallas.1} parent=0 // pred_check_branch
    %22 = sbr.rel (0) target = $region25
  $region24: #{gcn_forward_pallas.1} parent=0 // pred_region
    _
  $region25: #{gcn_forward_pallas.1} parent=0 // pred_fallthru
    _
  %v23 = vld [vmem:[%s0] sm:$0xff]
  %v24 = vld [vmem:[%s0 + $0x8] sm:$0xff]
  %v25 = vld [vmem:[%s0 + $0x10] sm:$0xff]
  %v26 = vld [vmem:[%s0 + $0x18] sm:$0xff]
  %v27 = vld [vmem:[%s0 + $0x20] sm:$0xff]
  %v28 = vld [vmem:[%s0 + $0x28] sm:$0xff]
  %v29 = vld [vmem:[%s0 + $0x30] sm:$0xff]
  %v30 = vld [vmem:[%s0 + $0x38] sm:$0xff]
  %v31 = vld [vmem:[%s0 + $0x40] sm:$0xff]
  %v32 = vld [vmem:[%s0 + $0x48] sm:$0xff]
  %v33 = vld [vmem:[%s0 + $0x50] sm:$0xff]
  %v34 = vld [vmem:[%s0 + $0x58] sm:$0xff]
  %v35 = vld [vmem:[%s2] sm:$0xff]
  %v36 = vld [vmem:[%s2 + $0x8] sm:$0xff]
  %v37 = vld [vmem:[%s1] sm:$0xff]
  %v38 = vld [vmem:[%s1 + $0x8] sm:$0xff]
  %v39 = vld [vmem:[%s1 + $0x10] sm:$0xff]
  %v40 = vld [vmem:[%s1 + $0x18] sm:$0xff]
  %v41 = vld [vmem:[%s1 + $0x20] sm:$0xff]
  %v42 = vld [vmem:[%s1 + $0x28] sm:$0xff]
  %v43 = vld [vmem:[%s1 + $0x30] sm:$0xff]
  %v44 = vld [vmem:[%s1 + $0x38] sm:$0xff]
  %v45 = vld [vmem:[%s1 + $0x40] sm:$0xff]
  %v46 = vld [vmem:[%s1 + $0x48] sm:$0xff]
  %v47 = vld [vmem:[%s1 + $0x50] sm:$0xff]
  %v48 = vld [vmem:[%s1 + $0x58] sm:$0xff]
  %v49 = vld [vmem:[%s3] sm:$0x1]
  %v50 = vld [vmem:[%s4] sm:$0xff]
  %v51 = vld [vmem:[%s4 + $0x8] sm:$0xff]
  %v52 = vld [vmem:[%s4 + $0x10] sm:$0xff]
  %v53 = vld [vmem:[%s4 + $0x18] sm:$0xff]
  %v54 = vld [vmem:[%s4 + $0x20] sm:$0xff]
  %v55 = vld [vmem:[%s4 + $0x28] sm:$0xff]
  %v56 = vld [vmem:[%s5] sm:$0xff]
  %v57 = vld [vmem:[%s5 + $0x8] sm:$0xff]
  %v58 = vld [vmem:[%s5 + $0x10] sm:$0xff]
  %v59 = vld [vmem:[%s5 + $0x18] sm:$0xff]
  %v60 = vld [vmem:[%s5 + $0x20] sm:$0xff]
  %v61 = vld [vmem:[%s5 + $0x28] sm:$0xff]
  %vm62 = vcmask 130048
  %v64 = vsel %vm62, %v23, 0
  %v67 = vsel %vm62, %v24, 0
  %v70 = vsel %vm62, %v25, 0
  %v73 = vsel %vm62, %v26, 0
  %v76 = vsel %vm62, %v27, 0
  %v79 = vsel %vm62, %v28, 0
  %v82 = vsel %vm62, %v29, 0
  %v85 = vsel %vm62, %v30, 0
  %v88 = vsel %vm62, %v31, 0
  %v91 = vsel %vm62, %v32, 0
  %v94 = vsel %vm62, %v33, 0
  %v97 = vsel %vm62, %v34, 0
  %99 = vmatprep.subr.mxu0 0.0
  %100 = vmatpush1.msra.mxu0 0.0
  %101 = vmatprep.subr.mxu0 0.0
  %102 = vmatpush1.msra.mxu0 0.0
  %103 = vmatprep.subr.mxu0 0.0
  %104 = vmatpush1.msra.mxu0 0.0
  %105 = vmatprep.subr.mxu0 0.0
  %106 = vmatpush1.msra.mxu0 0.0
  %107 = vmatprep.subr.mxu0 0.0
  %108 = vmatpush1.msra.mxu0 0.0
  %109 = vmatprep.subr.mxu0 0.0
  %110 = vmatpush1.msra.mxu0 0.0
  %111 = vmatprep.subr.mxu0 0.0
  %112 = vmatpush1.msra.mxu0 0.0
  %113 = vmatprep.subr.mxu0 0.0
  %114 = vmatpush1.msra.mxu0 0.0
  %115 = vmatprep.subr.mxu0 0.0
  %116 = vmatpush1.msra.mxu0 0.0
  %117 = vmatprep.subr.mxu0 0.0
  %118 = vmatpush1.msra.mxu0 0.0
  %119 = vmatprep.subr.mxu0 0.0
  %120 = vmatpush1.msra.mxu0 0.0
  %121 = vmatprep.subr.mxu0 0.0
  %122 = vmatpush1.msra.mxu0 0.0
  %123 = vmatprep.subr.mxu0 0.0
  %124 = vmatpush1.msra.mxu0 0.0
  %125 = vmatprep.subr.mxu0 0.0
  %126 = vmatpush1.msra.mxu0 0.0
  %127 = vmatprep.subr.mxu0 0.0
  %128 = vmatpush1.msra.mxu0 %v36
  %129 = vmatprep.subr.mxu0 0.0
  %130 = vmatpush1.msra.mxu0 %v35
  %131 = vmatprep.subr.mxu0 0.0
  %132 = vmatpush2.msra.mxu0 0.0
  %133 = vmatprep.subr.mxu0 0.0
  %134 = vmatpush2.msra.mxu0 0.0
  %135 = vmatprep.subr.mxu0 0.0
  %136 = vmatpush2.msra.mxu0 0.0
  %137 = vmatprep.subr.mxu0 0.0
  %138 = vmatpush2.msra.mxu0 0.0
  %139 = vmatprep.subr.mxu0 0.0
  %140 = vmatpush2.msra.mxu0 0.0
  %141 = vmatprep.subr.mxu0 0.0
  %142 = vmatpush2.msra.mxu0 0.0
  %143 = vmatprep.subr.mxu0 0.0
  %144 = vmatpush2.msra.mxu0 0.0
  %145 = vmatprep.subr.mxu0 0.0
  %146 = vmatpush2.msra.mxu0 0.0
  %147 = vmatprep.subr.mxu0 0.0
  %148 = vmatpush2.msra.mxu0 0.0
  %149 = vmatprep.subr.mxu0 0.0
  %150 = vmatpush2.msra.mxu0 0.0
  %151 = vmatprep.subr.mxu0 0.0
  %152 = vmatpush2.msra.mxu0 0.0
  %153 = vmatprep.subr.mxu0 0.0
  %154 = vmatpush2.msra.mxu0 0.0
  %155 = vmatprep.subr.mxu0 0.0
  %156 = vmatpush2.msra.mxu0 0.0
  %157 = vmatprep.subr.mxu0 0.0
  %158 = vmatpush2.msra.mxu0 0.0
  %159 = vmatprep.subr.mxu0 0.0
  %160 = vmatpush2.msra.mxu0 0.0
  %161 = vmatprep.subr.mxu0 0.0
  %162 = vmatpush2.msra.mxu0 0.0
  %163 = vmatprep.mubr.f32.mxu0 0.0
  %164 = vmatmul.mubr.f32.gmra.mxu0 %v64
  %v165 = vpop.f32.mrf.mxu0
  %v166 = vadd.f32 0.0, %v165
  %v167 = vpop.f32.mrf.mxu0
  %168 = vmatprep.mubr.f32.mxu0 0.0
  %169 = vmatmul.mubr.f32.gmra.mxu0 %v67
  %v170 = vpop.f32.mrf.mxu0
  %v171 = vadd.f32 0.0, %v170
  %v172 = vpop.f32.mrf.mxu0
  %173 = vmatprep.mubr.f32.mxu0 0.0
  %174 = vmatmul.mubr.f32.gmra.mxu0 %v70
  %v175 = vpop.f32.mrf.mxu0
  %v176 = vadd.f32 0.0, %v175
  %v177 = vpop.f32.mrf.mxu0
  %178 = vmatprep.mubr.f32.mxu0 0.0
  %179 = vmatmul.mubr.f32.gmra.mxu0 %v73
  %v180 = vpop.f32.mrf.mxu0
  %v181 = vadd.f32 0.0, %v180
  %v182 = vpop.f32.mrf.mxu0
  %183 = vmatprep.mubr.f32.mxu0 0.0
  %184 = vmatmul.mubr.f32.gmra.mxu0 %v76
  %v185 = vpop.f32.mrf.mxu0
  %v186 = vadd.f32 0.0, %v185
  %v187 = vpop.f32.mrf.mxu0
  %188 = vmatprep.mubr.f32.mxu0 0.0
  %189 = vmatmul.mubr.f32.gmra.mxu0 %v79
  %v190 = vpop.f32.mrf.mxu0
  %v191 = vadd.f32 0.0, %v190
  %v192 = vpop.f32.mrf.mxu0
  %193 = vmatprep.mubr.f32.mxu0 0.0
  %194 = vmatmul.mubr.f32.gmra.mxu0 %v82
  %v195 = vpop.f32.mrf.mxu0
  %v196 = vadd.f32 0.0, %v195
  %v197 = vpop.f32.mrf.mxu0
  %198 = vmatprep.mubr.f32.mxu0 0.0
  %199 = vmatmul.mubr.f32.gmra.mxu0 %v85
  %v200 = vpop.f32.mrf.mxu0
  %v201 = vadd.f32 0.0, %v200
  %v202 = vpop.f32.mrf.mxu0
  %203 = vmatprep.mubr.f32.mxu0 0.0
  %204 = vmatmul.mubr.f32.gmra.mxu0 %v88
  %v205 = vpop.f32.mrf.mxu0
  %v206 = vadd.f32 0.0, %v205
  %v207 = vpop.f32.mrf.mxu0
  %208 = vmatprep.mubr.f32.mxu0 0.0
  %209 = vmatmul.mubr.f32.gmra.mxu0 %v91
  %v210 = vpop.f32.mrf.mxu0
  %v211 = vadd.f32 0.0, %v210
  %v212 = vpop.f32.mrf.mxu0
  %213 = vmatprep.mubr.f32.mxu0 0.0
  %214 = vmatmul.mubr.f32.gmra.mxu0 %v94
  %v215 = vpop.f32.mrf.mxu0
  %v216 = vadd.f32 0.0, %v215
  %v217 = vpop.f32.mrf.mxu0
  %218 = vmatprep.mubr.f32.mxu0 0.0
  %219 = vmatmul.mubr.f32.gmra.mxu0 %v97
  %v220 = vpop.f32.mrf.mxu0
  %v221 = vadd.f32 0.0, %v220
  %v222 = vpop.f32.mrf.mxu0
  %223 = vdwg.mxu0
  %v225 = vlaneseq
  %v226 = vshrl.u32 %v225, 7
  %v227 = vsub.s32 0, %v226
  %v228 = vrot.slane %v49, %v227
  %vm230 = vcmask 785408
  %v232 = vsel %vm230, %v37, 0
  %v235 = vsel %vm230, %v38, 0
  %v238 = vsel %vm230, %v39, 0
  %v241 = vsel %vm230, %v40, 0
  %v244 = vsel %vm230, %v41, 0
  %v247 = vsel %vm230, %v42, 0
  %v250 = vsel %vm230, %v43, 0
  %v253 = vsel %vm230, %v44, 0
  %v256 = vsel %vm230, %v45, 0
  %v259 = vsel %vm230, %v46, 0
  %v262 = vsel %vm230, %v47, 0
  %v265 = vsel %vm230, %v48, 0
  %267 = vmatprep.subr.mxu0 0.0
  %268 = vmatpush1.msra.mxu0 0.0
  %269 = vmatprep.subr.mxu0 0.0
  %270 = vmatpush1.msra.mxu0 0.0
  %271 = vmatprep.subr.mxu0 0.0
  %272 = vmatpush1.msra.mxu0 0.0
  %273 = vmatprep.subr.mxu0 0.0
  %274 = vmatpush1.msra.mxu0 0.0
  %275 = vmatprep.subr.mxu0 0.0
  %276 = vmatpush1.msra.mxu0 %v221
  %277 = vmatprep.subr.mxu0 0.0
  %278 = vmatpush1.msra.mxu0 %v216
  %279 = vmatprep.subr.mxu0 0.0
  %280 = vmatpush1.msra.mxu0 %v211
  %281 = vmatprep.subr.mxu0 0.0
  %282 = vmatpush1.msra.mxu0 %v206
  %283 = vmatprep.subr.mxu0 0.0
  %284 = vmatpush1.msra.mxu0 %v201
  %285 = vmatprep.subr.mxu0 0.0
  %286 = vmatpush1.msra.mxu0 %v196
  %287 = vmatprep.subr.mxu0 0.0
  %288 = vmatpush1.msra.mxu0 %v191
  %289 = vmatprep.subr.mxu0 0.0
  %290 = vmatpush1.msra.mxu0 %v186
  %291 = vmatprep.subr.mxu0 0.0
  %292 = vmatpush1.msra.mxu0 %v181
  %293 = vmatprep.subr.mxu0 0.0
  %294 = vmatpush1.msra.mxu0 %v176
  %295 = vmatprep.subr.mxu0 0.0
  %296 = vmatpush1.msra.mxu0 %v171
  %297 = vmatprep.subr.mxu0 0.0
  %298 = vmatpush1.msra.mxu0 %v166
  %299 = vmatprep.subr.mxu0 0.0
  %300 = vmatpush2.msra.mxu0 0.0
  %301 = vmatprep.subr.mxu0 0.0
  %302 = vmatpush2.msra.mxu0 0.0
  %303 = vmatprep.subr.mxu0 0.0
  %304 = vmatpush2.msra.mxu0 0.0
  %305 = vmatprep.subr.mxu0 0.0
  %306 = vmatpush2.msra.mxu0 0.0
  %307 = vmatprep.subr.mxu0 0.0
  %308 = vmatpush2.msra.mxu0 0.0
  %309 = vmatprep.subr.mxu0 0.0
  %310 = vmatpush2.msra.mxu0 0.0
  %311 = vmatprep.subr.mxu0 0.0
  %312 = vmatpush2.msra.mxu0 0.0
  %313 = vmatprep.subr.mxu0 0.0
  %314 = vmatpush2.msra.mxu0 0.0
  %315 = vmatprep.subr.mxu0 0.0
  %316 = vmatpush2.msra.mxu0 0.0
  %317 = vmatprep.subr.mxu0 0.0
  %318 = vmatpush2.msra.mxu0 0.0
  %319 = vmatprep.subr.mxu0 0.0
  %320 = vmatpush2.msra.mxu0 0.0
  %321 = vmatprep.subr.mxu0 0.0
  %322 = vmatpush2.msra.mxu0 0.0
  %323 = vmatprep.subr.mxu0 0.0
  %324 = vmatpush2.msra.mxu0 0.0
  %325 = vmatprep.subr.mxu0 0.0
  %326 = vmatpush2.msra.mxu0 0.0
  %327 = vmatprep.subr.mxu0 0.0
  %328 = vmatpush2.msra.mxu0 0.0
  %329 = vmatprep.subr.mxu0 0.0
  %330 = vmatpush2.msra.mxu0 0.0
  %331 = vmatprep.mubr.f32.mxu0 0.0
  %332 = vmatmul.mubr.f32.gmra.mxu0 %v232
  %v333 = vpop.f32.mrf.mxu0
  %v334 = vadd.f32 %v228, %v333
  %v335 = vpop.f32.mrf.mxu0
  %336 = vmatprep.mubr.f32.mxu0 0.0
  %337 = vmatmul.mubr.f32.gmra.mxu0 %v235
  %v338 = vpop.f32.mrf.mxu0
  %v339 = vadd.f32 %v228, %v338
  %v340 = vpop.f32.mrf.mxu0
  %341 = vmatprep.mubr.f32.mxu0 0.0
  %342 = vmatmul.mubr.f32.gmra.mxu0 %v238
  %v343 = vpop.f32.mrf.mxu0
  %v344 = vadd.f32 %v228, %v343
  %v345 = vpop.f32.mrf.mxu0
  %346 = vmatprep.mubr.f32.mxu0 0.0
  %347 = vmatmul.mubr.f32.gmra.mxu0 %v241
  %v348 = vpop.f32.mrf.mxu0
  %v349 = vadd.f32 %v228, %v348
  %v350 = vpop.f32.mrf.mxu0
  %351 = vmatprep.mubr.f32.mxu0 0.0
  %352 = vmatmul.mubr.f32.gmra.mxu0 %v244
  %v353 = vpop.f32.mrf.mxu0
  %v354 = vadd.f32 %v228, %v353
  %v355 = vpop.f32.mrf.mxu0
  %356 = vmatprep.mubr.f32.mxu0 0.0
  %357 = vmatmul.mubr.f32.gmra.mxu0 %v247
  %v358 = vpop.f32.mrf.mxu0
  %v359 = vadd.f32 %v228, %v358
  %v360 = vpop.f32.mrf.mxu0
  %361 = vmatprep.mubr.f32.mxu0 0.0
  %362 = vmatmul.mubr.f32.gmra.mxu0 %v250
  %v363 = vpop.f32.mrf.mxu0
  %v364 = vadd.f32 %v228, %v363
  %v365 = vpop.f32.mrf.mxu0
  %366 = vmatprep.mubr.f32.mxu0 0.0
  %367 = vmatmul.mubr.f32.gmra.mxu0 %v253
  %v368 = vpop.f32.mrf.mxu0
  %v369 = vadd.f32 %v228, %v368
  %v370 = vpop.f32.mrf.mxu0
  %371 = vmatprep.mubr.f32.mxu0 0.0
  %372 = vmatmul.mubr.f32.gmra.mxu0 %v256
  %v373 = vpop.f32.mrf.mxu0
  %v374 = vadd.f32 %v228, %v373
  %v375 = vpop.f32.mrf.mxu0
  %376 = vmatprep.mubr.f32.mxu0 0.0
  %377 = vmatmul.mubr.f32.gmra.mxu0 %v259
  %v378 = vpop.f32.mrf.mxu0
  %v379 = vadd.f32 %v228, %v378
  %v380 = vpop.f32.mrf.mxu0
  %381 = vmatprep.mubr.f32.mxu0 0.0
  %382 = vmatmul.mubr.f32.gmra.mxu0 %v262
  %v383 = vpop.f32.mrf.mxu0
  %v384 = vadd.f32 %v228, %v383
  %v385 = vpop.f32.mrf.mxu0
  %386 = vmatprep.mubr.f32.mxu0 0.0
  %387 = vmatmul.mubr.f32.gmra.mxu0 %v265
  %v388 = vpop.f32.mrf.mxu0
  %v389 = vadd.f32 %v228, %v388
  %v390 = vpop.f32.mrf.mxu0
  %391 = vdwg.mxu0
  %v392 = vadd.f32 %v334, %v364
  %v393 = vadd.f32 %v339, %v369
  %v394 = vadd.f32 %v344, %v374
  %v395 = vadd.f32 %v349, %v379
  %v396 = vadd.f32 %v354, %v384
  %v397 = vadd.f32 %v359, %v389
  %v398 = vmul.f32 %v392, 0.5
  %v399 = vmul.f32 %v393, 0.5
  %v400 = vmul.f32 %v394, 0.5
  %v401 = vmul.f32 %v395, 0.5
  %v402 = vmul.f32 %v396, 0.5
  %v403 = vmul.f32 %v397, 0.5
  %v404 = vsub.f32 %v334, %v398
  %v405 = vsub.f32 %v339, %v399
  %v406 = vsub.f32 %v344, %v400
  %v407 = vsub.f32 %v349, %v401
  %v408 = vsub.f32 %v354, %v402
  %v409 = vsub.f32 %v359, %v403
  %v410 = vmul.f32 %v404, %v404
  %v411 = vmul.f32 %v405, %v405
  %v412 = vmul.f32 %v406, %v406
  %v413 = vmul.f32 %v407, %v407
  %v414 = vmul.f32 %v408, %v408
  %v415 = vmul.f32 %v409, %v409
  %v416 = vsub.f32 %v364, %v398
  %v417 = vsub.f32 %v369, %v399
  %v418 = vsub.f32 %v374, %v400
  %v419 = vsub.f32 %v379, %v401
  %v420 = vsub.f32 %v384, %v402
  %v421 = vsub.f32 %v389, %v403
  %v422 = vmul.f32 %v416, %v416
  %v423 = vmul.f32 %v417, %v417
  %v424 = vmul.f32 %v418, %v418
  %v425 = vmul.f32 %v419, %v419
  %v426 = vmul.f32 %v420, %v420
  %v427 = vmul.f32 %v421, %v421
  %v428 = vadd.f32 %v410, %v422
  %v429 = vadd.f32 %v411, %v423
  %v430 = vadd.f32 %v412, %v424
  %v431 = vadd.f32 %v413, %v425
  %v432 = vadd.f32 %v414, %v426
  %v433 = vadd.f32 %v415, %v427
  %v434 = vmul.f32 %v428, 0.5
  %v435 = vmul.f32 %v429, 0.5
  %v436 = vmul.f32 %v430, 0.5
  %v437 = vmul.f32 %v431, 0.5
  %v438 = vmul.f32 %v432, 0.5
  %v439 = vmul.f32 %v433, 0.5
  %v440 = vadd.f32 %v434, 1e-05
  %v441 = vadd.f32 %v435, 1e-05
  %v442 = vadd.f32 %v436, 1e-05
  %v443 = vadd.f32 %v437, 1e-05
  %v444 = vadd.f32 %v438, 1e-05
  %v445 = vadd.f32 %v439, 1e-05
  %v446 = vrsqrt.pop %v440
  %v447 = vrsqrt.pop %v441
  %v448 = vrsqrt.pop %v442
  %v449 = vrsqrt.pop %v443
  %v450 = vrsqrt.pop %v444
  %v451 = vrsqrt.pop %v445
  %v452 = vmul.f32 %v404, %v446
  %v453 = vmul.f32 %v405, %v447
  %v454 = vmul.f32 %v406, %v448
  %v455 = vmul.f32 %v407, %v449
  %v456 = vmul.f32 %v408, %v450
  %v457 = vmul.f32 %v409, %v451
  %v458 = vmul.f32 %v452, %v50
  %v459 = vmul.f32 %v453, %v51
  %v460 = vmul.f32 %v454, %v52
  %v461 = vmul.f32 %v455, %v53
  %v462 = vmul.f32 %v456, %v54
  %v463 = vmul.f32 %v457, %v55
  %v464 = vadd.f32 %v458, %v56
  %v465 = vadd.f32 %v459, %v57
  %v466 = vadd.f32 %v460, %v58
  %v467 = vadd.f32 %v461, %v59
  %v468 = vadd.f32 %v462, %v60
  %v469 = vadd.f32 %v463, %v61
  %v470 = vsub.f32 0.0, %v464
  %v471 = vsub.f32 0.0, %v465
  %v472 = vsub.f32 0.0, %v466
  %v473 = vsub.f32 0.0, %v467
  %v474 = vsub.f32 0.0, %v468
  %v475 = vsub.f32 0.0, %v469
  %v476 = vmul.f32 %v470, 1.442695
  %v477 = vpow.pop %v476
  %v478 = vmul.f32 %v471, 1.442695
  %v479 = vpow.pop %v478
  %v480 = vmul.f32 %v472, 1.442695
  %v481 = vpow.pop %v480
  %v482 = vmul.f32 %v473, 1.442695
  %v483 = vpow.pop %v482
  %v484 = vmul.f32 %v474, 1.442695
  %v485 = vpow.pop %v484
  %v486 = vmul.f32 %v475, 1.442695
  %v487 = vpow.pop %v486
  %v488 = vadd.f32 %v477, 1.0
  %v489 = vadd.f32 %v479, 1.0
  %v490 = vadd.f32 %v481, 1.0
  %v491 = vadd.f32 %v483, 1.0
  %v492 = vadd.f32 %v485, 1.0
  %v493 = vadd.f32 %v487, 1.0
  %v494 = vrcp.pop %v488
  %v495 = vmul.f32 1.0, %v494
  %v496 = vrcp.pop %v489
  %v497 = vmul.f32 1.0, %v496
  %v498 = vrcp.pop %v490
  %v499 = vmul.f32 1.0, %v498
  %v500 = vrcp.pop %v491
  %v501 = vmul.f32 1.0, %v500
  %v502 = vrcp.pop %v492
  %v503 = vmul.f32 1.0, %v502
  %v504 = vrcp.pop %v493
  %v505 = vmul.f32 1.0, %v504
  %v506 = vmul.f32 %v416, %v446
  %v507 = vmul.f32 %v417, %v447
  %v508 = vmul.f32 %v418, %v448
  %v509 = vmul.f32 %v419, %v449
  %v510 = vmul.f32 %v420, %v450
  %v511 = vmul.f32 %v421, %v451
  %v512 = vmul.f32 %v506, %v50
  %v513 = vmul.f32 %v507, %v51
  %v514 = vmul.f32 %v508, %v52
  %v515 = vmul.f32 %v509, %v53
  %v516 = vmul.f32 %v510, %v54
  %v517 = vmul.f32 %v511, %v55
  %v518 = vadd.f32 %v512, %v56
  %v519 = vadd.f32 %v513, %v57
  %v520 = vadd.f32 %v514, %v58
  %v521 = vadd.f32 %v515, %v59
  %v522 = vadd.f32 %v516, %v60
  %v523 = vadd.f32 %v517, %v61
  %v524 = vsub.f32 0.0, %v518
  %v525 = vsub.f32 0.0, %v519
  %v526 = vsub.f32 0.0, %v520
  %v527 = vsub.f32 0.0, %v521
  %v528 = vsub.f32 0.0, %v522
  %v529 = vsub.f32 0.0, %v523
  %v530 = vmul.f32 %v524, 1.442695
  %v531 = vpow.pop %v530
  %v532 = vmul.f32 %v525, 1.442695
  %v533 = vpow.pop %v532
  %v534 = vmul.f32 %v526, 1.442695
  %v535 = vpow.pop %v534
  %v536 = vmul.f32 %v527, 1.442695
  %v537 = vpow.pop %v536
  %v538 = vmul.f32 %v528, 1.442695
  %v539 = vpow.pop %v538
  %v540 = vmul.f32 %v529, 1.442695
  %v541 = vpow.pop %v540
  %v542 = vadd.f32 %v531, 1.0
  %v543 = vadd.f32 %v533, 1.0
  %v544 = vadd.f32 %v535, 1.0
  %v545 = vadd.f32 %v537, 1.0
  %v546 = vadd.f32 %v539, 1.0
  %v547 = vadd.f32 %v541, 1.0
  %v548 = vrcp.pop %v542
  %v549 = vmul.f32 1.0, %v548
  %v550 = vrcp.pop %v543
  %v551 = vmul.f32 1.0, %v550
  %v552 = vrcp.pop %v544
  %v553 = vmul.f32 1.0, %v552
  %v554 = vrcp.pop %v545
  %v555 = vmul.f32 1.0, %v554
  %v556 = vrcp.pop %v546
  %v557 = vmul.f32 1.0, %v556
  %v558 = vrcp.pop %v547
  %v559 = vmul.f32 1.0, %v558
  %s560 = scalar_lea.vmem %s2, 16
  %v561 = vld [vmem:[%s560] sm:$0xff]
  %v562 = vld [vmem:[%s560 + $0x8] sm:$0xff]
  %s563 = scalar_lea.vmem %s1, 96
  %v564 = vld [vmem:[%s563] sm:$0xff]
  %v565 = vld [vmem:[%s563 + $0x8] sm:$0xff]
  %v566 = vld [vmem:[%s563 + $0x10] sm:$0xff]
  %v567 = vld [vmem:[%s563 + $0x18] sm:$0xff]
  %v568 = vld [vmem:[%s563 + $0x20] sm:$0xff]
  %v569 = vld [vmem:[%s563 + $0x28] sm:$0xff]
  %v570 = vld [vmem:[%s563 + $0x30] sm:$0xff]
  %v571 = vld [vmem:[%s563 + $0x38] sm:$0xff]
  %v572 = vld [vmem:[%s563 + $0x40] sm:$0xff]
  %v573 = vld [vmem:[%s563 + $0x48] sm:$0xff]
  %v574 = vld [vmem:[%s563 + $0x50] sm:$0xff]
  %v575 = vld [vmem:[%s563 + $0x58] sm:$0xff]
  %s576 = scalar_lea.vmem %s3, 1
  %v577 = vld [vmem:[%s576] sm:$0x1]
  %s578 = scalar_lea.vmem %s4, 48
  %v579 = vld [vmem:[%s578] sm:$0xff]
  %v580 = vld [vmem:[%s578 + $0x8] sm:$0xff]
  %v581 = vld [vmem:[%s578 + $0x10] sm:$0xff]
  %v582 = vld [vmem:[%s578 + $0x18] sm:$0xff]
  %v583 = vld [vmem:[%s578 + $0x20] sm:$0xff]
  %v584 = vld [vmem:[%s578 + $0x28] sm:$0xff]
  %s585 = scalar_lea.vmem %s5, 48
  %v586 = vld [vmem:[%s585] sm:$0xff]
  %v587 = vld [vmem:[%s585 + $0x8] sm:$0xff]
  %v588 = vld [vmem:[%s585 + $0x10] sm:$0xff]
  %v589 = vld [vmem:[%s585 + $0x18] sm:$0xff]
  %v590 = vld [vmem:[%s585 + $0x20] sm:$0xff]
  %v591 = vld [vmem:[%s585 + $0x28] sm:$0xff]
  %v593 = vsel %vm62, %v495, 0
  %v596 = vsel %vm62, %v497, 0
  %v599 = vsel %vm62, %v499, 0
  %v602 = vsel %vm62, %v501, 0
  %v605 = vsel %vm62, %v503, 0
  %v608 = vsel %vm62, %v505, 0
  %v611 = vsel %vm62, %v549, 0
  %v614 = vsel %vm62, %v551, 0
  %v617 = vsel %vm62, %v553, 0
  %v620 = vsel %vm62, %v555, 0
  %v623 = vsel %vm62, %v557, 0
  %v626 = vsel %vm62, %v559, 0
  %628 = vmatprep.subr.mxu0 0.0
  %629 = vmatpush1.msra.mxu0 0.0
  %630 = vmatprep.subr.mxu0 0.0
  %631 = vmatpush1.msra.mxu0 0.0
  %632 = vmatprep.subr.mxu0 0.0
  %633 = vmatpush1.msra.mxu0 0.0
  %634 = vmatprep.subr.mxu0 0.0
  %635 = vmatpush1.msra.mxu0 0.0
  %636 = vmatprep.subr.mxu0 0.0
  %637 = vmatpush1.msra.mxu0 0.0
  %638 = vmatprep.subr.mxu0 0.0
  %639 = vmatpush1.msra.mxu0 0.0
  %640 = vmatprep.subr.mxu0 0.0
  %641 = vmatpush1.msra.mxu0 0.0
  %642 = vmatprep.subr.mxu0 0.0
  %643 = vmatpush1.msra.mxu0 0.0
  %644 = vmatprep.subr.mxu0 0.0
  %645 = vmatpush1.msra.mxu0 0.0
  %646 = vmatprep.subr.mxu0 0.0
  %647 = vmatpush1.msra.mxu0 0.0
  %648 = vmatprep.subr.mxu0 0.0
  %649 = vmatpush1.msra.mxu0 0.0
  %650 = vmatprep.subr.mxu0 0.0
  %651 = vmatpush1.msra.mxu0 0.0
  %652 = vmatprep.subr.mxu0 0.0
  %653 = vmatpush1.msra.mxu0 0.0
  %654 = vmatprep.subr.mxu0 0.0
  %655 = vmatpush1.msra.mxu0 0.0
  %656 = vmatprep.subr.mxu0 0.0
  %657 = vmatpush1.msra.mxu0 %v562
  %658 = vmatprep.subr.mxu0 0.0
  %659 = vmatpush1.msra.mxu0 %v561
  %660 = vmatprep.subr.mxu0 0.0
  %661 = vmatpush2.msra.mxu0 0.0
  %662 = vmatprep.subr.mxu0 0.0
  %663 = vmatpush2.msra.mxu0 0.0
  %664 = vmatprep.subr.mxu0 0.0
  %665 = vmatpush2.msra.mxu0 0.0
  %666 = vmatprep.subr.mxu0 0.0
  %667 = vmatpush2.msra.mxu0 0.0
  %668 = vmatprep.subr.mxu0 0.0
  %669 = vmatpush2.msra.mxu0 0.0
  %670 = vmatprep.subr.mxu0 0.0
  %671 = vmatpush2.msra.mxu0 0.0
  %672 = vmatprep.subr.mxu0 0.0
  %673 = vmatpush2.msra.mxu0 0.0
  %674 = vmatprep.subr.mxu0 0.0
  %675 = vmatpush2.msra.mxu0 0.0
  %676 = vmatprep.subr.mxu0 0.0
  %677 = vmatpush2.msra.mxu0 0.0
  %678 = vmatprep.subr.mxu0 0.0
  %679 = vmatpush2.msra.mxu0 0.0
  %680 = vmatprep.subr.mxu0 0.0
  %681 = vmatpush2.msra.mxu0 0.0
  %682 = vmatprep.subr.mxu0 0.0
  %683 = vmatpush2.msra.mxu0 0.0
  %684 = vmatprep.subr.mxu0 0.0
  %685 = vmatpush2.msra.mxu0 0.0
  %686 = vmatprep.subr.mxu0 0.0
  %687 = vmatpush2.msra.mxu0 0.0
  %688 = vmatprep.subr.mxu0 0.0
  %689 = vmatpush2.msra.mxu0 0.0
  %690 = vmatprep.subr.mxu0 0.0
  %691 = vmatpush2.msra.mxu0 0.0
  %692 = vmatprep.mubr.f32.mxu0 0.0
  %693 = vmatmul.mubr.f32.gmra.mxu0 %v593
  %v694 = vpop.f32.mrf.mxu0
  %v695 = vadd.f32 0.0, %v694
  %v696 = vpop.f32.mrf.mxu0
  %697 = vmatprep.mubr.f32.mxu0 0.0
  %698 = vmatmul.mubr.f32.gmra.mxu0 %v596
  %v699 = vpop.f32.mrf.mxu0
  %v700 = vadd.f32 0.0, %v699
  %v701 = vpop.f32.mrf.mxu0
  %702 = vmatprep.mubr.f32.mxu0 0.0
  %703 = vmatmul.mubr.f32.gmra.mxu0 %v599
  %v704 = vpop.f32.mrf.mxu0
  %v705 = vadd.f32 0.0, %v704
  %v706 = vpop.f32.mrf.mxu0
  %707 = vmatprep.mubr.f32.mxu0 0.0
  %708 = vmatmul.mubr.f32.gmra.mxu0 %v602
  %v709 = vpop.f32.mrf.mxu0
  %v710 = vadd.f32 0.0, %v709
  %v711 = vpop.f32.mrf.mxu0
  %712 = vmatprep.mubr.f32.mxu0 0.0
  %713 = vmatmul.mubr.f32.gmra.mxu0 %v605
  %v714 = vpop.f32.mrf.mxu0
  %v715 = vadd.f32 0.0, %v714
  %v716 = vpop.f32.mrf.mxu0
  %717 = vmatprep.mubr.f32.mxu0 0.0
  %718 = vmatmul.mubr.f32.gmra.mxu0 %v608
  %v719 = vpop.f32.mrf.mxu0
  %v720 = vadd.f32 0.0, %v719
  %v721 = vpop.f32.mrf.mxu0
  %722 = vmatprep.mubr.f32.mxu0 0.0
  %723 = vmatmul.mubr.f32.gmra.mxu0 %v611
  %v724 = vpop.f32.mrf.mxu0
  %v725 = vadd.f32 0.0, %v724
  %v726 = vpop.f32.mrf.mxu0
  %727 = vmatprep.mubr.f32.mxu0 0.0
  %728 = vmatmul.mubr.f32.gmra.mxu0 %v614
  %v729 = vpop.f32.mrf.mxu0
  %v730 = vadd.f32 0.0, %v729
  %v731 = vpop.f32.mrf.mxu0
  %732 = vmatprep.mubr.f32.mxu0 0.0
  %733 = vmatmul.mubr.f32.gmra.mxu0 %v617
  %v734 = vpop.f32.mrf.mxu0
  %v735 = vadd.f32 0.0, %v734
  %v736 = vpop.f32.mrf.mxu0
  %737 = vmatprep.mubr.f32.mxu0 0.0
  %738 = vmatmul.mubr.f32.gmra.mxu0 %v620
  %v739 = vpop.f32.mrf.mxu0
  %v740 = vadd.f32 0.0, %v739
  %v741 = vpop.f32.mrf.mxu0
  %742 = vmatprep.mubr.f32.mxu0 0.0
  %743 = vmatmul.mubr.f32.gmra.mxu0 %v623
  %v744 = vpop.f32.mrf.mxu0
  %v745 = vadd.f32 0.0, %v744
  %v746 = vpop.f32.mrf.mxu0
  %747 = vmatprep.mubr.f32.mxu0 0.0
  %748 = vmatmul.mubr.f32.gmra.mxu0 %v626
  %v749 = vpop.f32.mrf.mxu0
  %v750 = vadd.f32 0.0, %v749
  %v751 = vpop.f32.mrf.mxu0
  %752 = vdwg.mxu0
  %v754 = vlaneseq
  %v755 = vshrl.u32 %v754, 7
  %v756 = vsub.s32 0, %v755
  %v757 = vrot.slane %v577, %v756
  %v760 = vsel %vm230, %v564, 0
  %v763 = vsel %vm230, %v565, 0
  %v766 = vsel %vm230, %v566, 0
  %v769 = vsel %vm230, %v567, 0
  %v772 = vsel %vm230, %v568, 0
  %v775 = vsel %vm230, %v569, 0
  %v778 = vsel %vm230, %v570, 0
  %v781 = vsel %vm230, %v571, 0
  %v784 = vsel %vm230, %v572, 0
  %v787 = vsel %vm230, %v573, 0
  %v790 = vsel %vm230, %v574, 0
  %v793 = vsel %vm230, %v575, 0
  %795 = vmatprep.subr.mxu0 0.0
  %796 = vmatpush1.msra.mxu0 0.0
  %797 = vmatprep.subr.mxu0 0.0
  %798 = vmatpush1.msra.mxu0 0.0
  %799 = vmatprep.subr.mxu0 0.0
  %800 = vmatpush1.msra.mxu0 0.0
  %801 = vmatprep.subr.mxu0 0.0
  %802 = vmatpush1.msra.mxu0 0.0
  %803 = vmatprep.subr.mxu0 0.0
  %804 = vmatpush1.msra.mxu0 %v750
  %805 = vmatprep.subr.mxu0 0.0
  %806 = vmatpush1.msra.mxu0 %v745
  %807 = vmatprep.subr.mxu0 0.0
  %808 = vmatpush1.msra.mxu0 %v740
  %809 = vmatprep.subr.mxu0 0.0
  %810 = vmatpush1.msra.mxu0 %v735
  %811 = vmatprep.subr.mxu0 0.0
  %812 = vmatpush1.msra.mxu0 %v730
  %813 = vmatprep.subr.mxu0 0.0
  %814 = vmatpush1.msra.mxu0 %v725
  %815 = vmatprep.subr.mxu0 0.0
  %816 = vmatpush1.msra.mxu0 %v720
  %817 = vmatprep.subr.mxu0 0.0
  %818 = vmatpush1.msra.mxu0 %v715
  %819 = vmatprep.subr.mxu0 0.0
  %820 = vmatpush1.msra.mxu0 %v710
  %821 = vmatprep.subr.mxu0 0.0
  %822 = vmatpush1.msra.mxu0 %v705
  %823 = vmatprep.subr.mxu0 0.0
  %824 = vmatpush1.msra.mxu0 %v700
  %825 = vmatprep.subr.mxu0 0.0
  %826 = vmatpush1.msra.mxu0 %v695
  %827 = vmatprep.subr.mxu0 0.0
  %828 = vmatpush2.msra.mxu0 0.0
  %829 = vmatprep.subr.mxu0 0.0
  %830 = vmatpush2.msra.mxu0 0.0
  %831 = vmatprep.subr.mxu0 0.0
  %832 = vmatpush2.msra.mxu0 0.0
  %833 = vmatprep.subr.mxu0 0.0
  %834 = vmatpush2.msra.mxu0 0.0
  %835 = vmatprep.subr.mxu0 0.0
  %836 = vmatpush2.msra.mxu0 0.0
  %837 = vmatprep.subr.mxu0 0.0
  %838 = vmatpush2.msra.mxu0 0.0
  %839 = vmatprep.subr.mxu0 0.0
  %840 = vmatpush2.msra.mxu0 0.0
  %841 = vmatprep.subr.mxu0 0.0
  %842 = vmatpush2.msra.mxu0 0.0
  %843 = vmatprep.subr.mxu0 0.0
  %844 = vmatpush2.msra.mxu0 0.0
  %845 = vmatprep.subr.mxu0 0.0
  %846 = vmatpush2.msra.mxu0 0.0
  %847 = vmatprep.subr.mxu0 0.0
  %848 = vmatpush2.msra.mxu0 0.0
  %849 = vmatprep.subr.mxu0 0.0
  %850 = vmatpush2.msra.mxu0 0.0
  %851 = vmatprep.subr.mxu0 0.0
  %852 = vmatpush2.msra.mxu0 0.0
  %853 = vmatprep.subr.mxu0 0.0
  %854 = vmatpush2.msra.mxu0 0.0
  %855 = vmatprep.subr.mxu0 0.0
  %856 = vmatpush2.msra.mxu0 0.0
  %857 = vmatprep.subr.mxu0 0.0
  %858 = vmatpush2.msra.mxu0 0.0
  %859 = vmatprep.mubr.f32.mxu0 0.0
  %860 = vmatmul.mubr.f32.gmra.mxu0 %v760
  %v861 = vpop.f32.mrf.mxu0
  %v862 = vadd.f32 %v757, %v861
  %v863 = vpop.f32.mrf.mxu0
  %864 = vmatprep.mubr.f32.mxu0 0.0
  %865 = vmatmul.mubr.f32.gmra.mxu0 %v763
  %v866 = vpop.f32.mrf.mxu0
  %v867 = vadd.f32 %v757, %v866
  %v868 = vpop.f32.mrf.mxu0
  %869 = vmatprep.mubr.f32.mxu0 0.0
  %870 = vmatmul.mubr.f32.gmra.mxu0 %v766
  %v871 = vpop.f32.mrf.mxu0
  %v872 = vadd.f32 %v757, %v871
  %v873 = vpop.f32.mrf.mxu0
  %874 = vmatprep.mubr.f32.mxu0 0.0
  %875 = vmatmul.mubr.f32.gmra.mxu0 %v769
  %v876 = vpop.f32.mrf.mxu0
  %v877 = vadd.f32 %v757, %v876
  %v878 = vpop.f32.mrf.mxu0
  %879 = vmatprep.mubr.f32.mxu0 0.0
  %880 = vmatmul.mubr.f32.gmra.mxu0 %v772
  %v881 = vpop.f32.mrf.mxu0
  %v882 = vadd.f32 %v757, %v881
  %v883 = vpop.f32.mrf.mxu0
  %884 = vmatprep.mubr.f32.mxu0 0.0
  %885 = vmatmul.mubr.f32.gmra.mxu0 %v775
  %v886 = vpop.f32.mrf.mxu0
  %v887 = vadd.f32 %v757, %v886
  %v888 = vpop.f32.mrf.mxu0
  %889 = vmatprep.mubr.f32.mxu0 0.0
  %890 = vmatmul.mubr.f32.gmra.mxu0 %v778
  %v891 = vpop.f32.mrf.mxu0
  %v892 = vadd.f32 %v757, %v891
  %v893 = vpop.f32.mrf.mxu0
  %894 = vmatprep.mubr.f32.mxu0 0.0
  %895 = vmatmul.mubr.f32.gmra.mxu0 %v781
  %v896 = vpop.f32.mrf.mxu0
  %v897 = vadd.f32 %v757, %v896
  %v898 = vpop.f32.mrf.mxu0
  %899 = vmatprep.mubr.f32.mxu0 0.0
  %900 = vmatmul.mubr.f32.gmra.mxu0 %v784
  %v901 = vpop.f32.mrf.mxu0
  %v902 = vadd.f32 %v757, %v901
  %v903 = vpop.f32.mrf.mxu0
  %904 = vmatprep.mubr.f32.mxu0 0.0
  %905 = vmatmul.mubr.f32.gmra.mxu0 %v787
  %v906 = vpop.f32.mrf.mxu0
  %v907 = vadd.f32 %v757, %v906
  %v908 = vpop.f32.mrf.mxu0
  %909 = vmatprep.mubr.f32.mxu0 0.0
  %910 = vmatmul.mubr.f32.gmra.mxu0 %v790
  %v911 = vpop.f32.mrf.mxu0
  %v912 = vadd.f32 %v757, %v911
  %v913 = vpop.f32.mrf.mxu0
  %914 = vmatprep.mubr.f32.mxu0 0.0
  %915 = vmatmul.mubr.f32.gmra.mxu0 %v793
  %v916 = vpop.f32.mrf.mxu0
  %v917 = vadd.f32 %v757, %v916
  %v918 = vpop.f32.mrf.mxu0
  %919 = vdwg.mxu0
  %v920 = vadd.f32 %v862, %v892
  %v921 = vadd.f32 %v867, %v897
  %v922 = vadd.f32 %v872, %v902
  %v923 = vadd.f32 %v877, %v907
  %v924 = vadd.f32 %v882, %v912
  %v925 = vadd.f32 %v887, %v917
  %v926 = vmul.f32 %v920, 0.5
  %v927 = vmul.f32 %v921, 0.5
  %v928 = vmul.f32 %v922, 0.5
  %v929 = vmul.f32 %v923, 0.5
  %v930 = vmul.f32 %v924, 0.5
  %v931 = vmul.f32 %v925, 0.5
  %v932 = vsub.f32 %v862, %v926
  %v933 = vsub.f32 %v867, %v927
  %v934 = vsub.f32 %v872, %v928
  %v935 = vsub.f32 %v877, %v929
  %v936 = vsub.f32 %v882, %v930
  %v937 = vsub.f32 %v887, %v931
  %v938 = vmul.f32 %v932, %v932
  %v939 = vmul.f32 %v933, %v933
  %v940 = vmul.f32 %v934, %v934
  %v941 = vmul.f32 %v935, %v935
  %v942 = vmul.f32 %v936, %v936
  %v943 = vmul.f32 %v937, %v937
  %v944 = vsub.f32 %v892, %v926
  %v945 = vsub.f32 %v897, %v927
  %v946 = vsub.f32 %v902, %v928
  %v947 = vsub.f32 %v907, %v929
  %v948 = vsub.f32 %v912, %v930
  %v949 = vsub.f32 %v917, %v931
  %v950 = vmul.f32 %v944, %v944
  %v951 = vmul.f32 %v945, %v945
  %v952 = vmul.f32 %v946, %v946
  %v953 = vmul.f32 %v947, %v947
  %v954 = vmul.f32 %v948, %v948
  %v955 = vmul.f32 %v949, %v949
  %v956 = vadd.f32 %v938, %v950
  %v957 = vadd.f32 %v939, %v951
  %v958 = vadd.f32 %v940, %v952
  %v959 = vadd.f32 %v941, %v953
  %v960 = vadd.f32 %v942, %v954
  %v961 = vadd.f32 %v943, %v955
  %v962 = vmul.f32 %v956, 0.5
  %v963 = vmul.f32 %v957, 0.5
  %v964 = vmul.f32 %v958, 0.5
  %v965 = vmul.f32 %v959, 0.5
  %v966 = vmul.f32 %v960, 0.5
  %v967 = vmul.f32 %v961, 0.5
  %v968 = vadd.f32 %v962, 1e-05
  %v969 = vadd.f32 %v963, 1e-05
  %v970 = vadd.f32 %v964, 1e-05
  %v971 = vadd.f32 %v965, 1e-05
  %v972 = vadd.f32 %v966, 1e-05
  %v973 = vadd.f32 %v967, 1e-05
  %v974 = vrsqrt.pop %v968
  %v975 = vrsqrt.pop %v969
  %v976 = vrsqrt.pop %v970
  %v977 = vrsqrt.pop %v971
  %v978 = vrsqrt.pop %v972
  %v979 = vrsqrt.pop %v973
  %v980 = vmul.f32 %v932, %v974
  %v981 = vmul.f32 %v933, %v975
  %v982 = vmul.f32 %v934, %v976
  %v983 = vmul.f32 %v935, %v977
  %v984 = vmul.f32 %v936, %v978
  %v985 = vmul.f32 %v937, %v979
  %v986 = vmul.f32 %v980, %v579
  %v987 = vmul.f32 %v981, %v580
  %v988 = vmul.f32 %v982, %v581
  %v989 = vmul.f32 %v983, %v582
  %v990 = vmul.f32 %v984, %v583
  %v991 = vmul.f32 %v985, %v584
  %v992 = vadd.f32 %v986, %v586
  %v993 = vadd.f32 %v987, %v587
  %v994 = vadd.f32 %v988, %v588
  %v995 = vadd.f32 %v989, %v589
  %v996 = vadd.f32 %v990, %v590
  %v997 = vadd.f32 %v991, %v591
  %v998 = vsub.f32 0.0, %v992
  %v999 = vsub.f32 0.0, %v993
  %v1000 = vsub.f32 0.0, %v994
  %v1001 = vsub.f32 0.0, %v995
  %v1002 = vsub.f32 0.0, %v996
  %v1003 = vsub.f32 0.0, %v997
  %v1004 = vmul.f32 %v998, 1.442695
  %v1005 = vpow.pop %v1004
  %v1006 = vmul.f32 %v999, 1.442695
  %v1007 = vpow.pop %v1006
  %v1008 = vmul.f32 %v1000, 1.442695
  %v1009 = vpow.pop %v1008
  %v1010 = vmul.f32 %v1001, 1.442695
  %v1011 = vpow.pop %v1010
  %v1012 = vmul.f32 %v1002, 1.442695
  %v1013 = vpow.pop %v1012
  %v1014 = vmul.f32 %v1003, 1.442695
  %v1015 = vpow.pop %v1014
  %v1016 = vadd.f32 %v1005, 1.0
  %v1017 = vadd.f32 %v1007, 1.0
  %v1018 = vadd.f32 %v1009, 1.0
  %v1019 = vadd.f32 %v1011, 1.0
  %v1020 = vadd.f32 %v1013, 1.0
  %v1021 = vadd.f32 %v1015, 1.0
  %v1022 = vrcp.pop %v1016
  %v1023 = vmul.f32 1.0, %v1022
  %v1024 = vrcp.pop %v1017
  %v1025 = vmul.f32 1.0, %v1024
  %v1026 = vrcp.pop %v1018
  %v1027 = vmul.f32 1.0, %v1026
  %v1028 = vrcp.pop %v1019
  %v1029 = vmul.f32 1.0, %v1028
  %v1030 = vrcp.pop %v1020
  %v1031 = vmul.f32 1.0, %v1030
  %v1032 = vrcp.pop %v1021
  %v1033 = vmul.f32 1.0, %v1032
  %v1034 = vmul.f32 %v944, %v974
  %v1035 = vmul.f32 %v945, %v975
  %v1036 = vmul.f32 %v946, %v976
  %v1037 = vmul.f32 %v947, %v977
  %v1038 = vmul.f32 %v948, %v978
  %v1039 = vmul.f32 %v949, %v979
  %v1040 = vmul.f32 %v1034, %v579
  %v1041 = vmul.f32 %v1035, %v580
  %v1042 = vmul.f32 %v1036, %v581
  %v1043 = vmul.f32 %v1037, %v582
  %v1044 = vmul.f32 %v1038, %v583
  %v1045 = vmul.f32 %v1039, %v584
  %v1046 = vadd.f32 %v1040, %v586
  %v1047 = vadd.f32 %v1041, %v587
  %v1048 = vadd.f32 %v1042, %v588
  %v1049 = vadd.f32 %v1043, %v589
  %v1050 = vadd.f32 %v1044, %v590
  %v1051 = vadd.f32 %v1045, %v591
  %v1052 = vsub.f32 0.0, %v1046
  %v1053 = vsub.f32 0.0, %v1047
  %v1054 = vsub.f32 0.0, %v1048
  %v1055 = vsub.f32 0.0, %v1049
  %v1056 = vsub.f32 0.0, %v1050
  %v1057 = vsub.f32 0.0, %v1051
  %v1058 = vmul.f32 %v1052, 1.442695
  %v1059 = vpow.pop %v1058
  %v1060 = vmul.f32 %v1053, 1.442695
  %v1061 = vpow.pop %v1060
  %v1062 = vmul.f32 %v1054, 1.442695
  %v1063 = vpow.pop %v1062
  %v1064 = vmul.f32 %v1055, 1.442695
  %v1065 = vpow.pop %v1064
  %v1066 = vmul.f32 %v1056, 1.442695
  %v1067 = vpow.pop %v1066
  %v1068 = vmul.f32 %v1057, 1.442695
  %v1069 = vpow.pop %v1068
  %v1070 = vadd.f32 %v1059, 1.0
  %v1071 = vadd.f32 %v1061, 1.0
  %v1072 = vadd.f32 %v1063, 1.0
  %v1073 = vadd.f32 %v1065, 1.0
  %v1074 = vadd.f32 %v1067, 1.0
  %v1075 = vadd.f32 %v1069, 1.0
  %v1076 = vrcp.pop %v1070
  %v1077 = vmul.f32 1.0, %v1076
  %v1078 = vrcp.pop %v1071
  %v1079 = vmul.f32 1.0, %v1078
  %v1080 = vrcp.pop %v1072
  %v1081 = vmul.f32 1.0, %v1080
  %v1082 = vrcp.pop %v1073
  %v1083 = vmul.f32 1.0, %v1082
  %v1084 = vrcp.pop %v1074
  %v1085 = vmul.f32 1.0, %v1084
  %v1086 = vrcp.pop %v1075
  %v1087 = vmul.f32 1.0, %v1086
  %s1088 = scalar_lea.vmem %s2, 32
  %v1089 = vld [vmem:[%s1088] sm:$0xff]
  %v1090 = vld [vmem:[%s1088 + $0x8] sm:$0xff]
  %s1091 = scalar_lea.vmem %s1, 192
  %v1092 = vld [vmem:[%s1091] sm:$0xff]
  %v1093 = vld [vmem:[%s1091 + $0x8] sm:$0xff]
  %v1094 = vld [vmem:[%s1091 + $0x10] sm:$0xff]
  %v1095 = vld [vmem:[%s1091 + $0x18] sm:$0xff]
  %v1096 = vld [vmem:[%s1091 + $0x20] sm:$0xff]
  %v1097 = vld [vmem:[%s1091 + $0x28] sm:$0xff]
  %v1098 = vld [vmem:[%s1091 + $0x30] sm:$0xff]
  %v1099 = vld [vmem:[%s1091 + $0x38] sm:$0xff]
  %v1100 = vld [vmem:[%s1091 + $0x40] sm:$0xff]
  %v1101 = vld [vmem:[%s1091 + $0x48] sm:$0xff]
  %v1102 = vld [vmem:[%s1091 + $0x50] sm:$0xff]
  %v1103 = vld [vmem:[%s1091 + $0x58] sm:$0xff]
  %s1104 = scalar_lea.vmem %s3, 2
  %v1105 = vld [vmem:[%s1104] sm:$0x1]
  %s1106 = scalar_lea.vmem %s4, 96
  %v1107 = vld [vmem:[%s1106] sm:$0xff]
  %v1108 = vld [vmem:[%s1106 + $0x8] sm:$0xff]
  %v1109 = vld [vmem:[%s1106 + $0x10] sm:$0xff]
  %v1110 = vld [vmem:[%s1106 + $0x18] sm:$0xff]
  %v1111 = vld [vmem:[%s1106 + $0x20] sm:$0xff]
  %v1112 = vld [vmem:[%s1106 + $0x28] sm:$0xff]
  %s1113 = scalar_lea.vmem %s5, 96
  %v1114 = vld [vmem:[%s1113] sm:$0xff]
  %v1115 = vld [vmem:[%s1113 + $0x8] sm:$0xff]
  %v1116 = vld [vmem:[%s1113 + $0x10] sm:$0xff]
  %v1117 = vld [vmem:[%s1113 + $0x18] sm:$0xff]
  %v1118 = vld [vmem:[%s1113 + $0x20] sm:$0xff]
  %v1119 = vld [vmem:[%s1113 + $0x28] sm:$0xff]
  %v1121 = vsel %vm62, %v1023, 0
  %v1124 = vsel %vm62, %v1025, 0
  %v1127 = vsel %vm62, %v1027, 0
  %v1130 = vsel %vm62, %v1029, 0
  %v1133 = vsel %vm62, %v1031, 0
  %v1136 = vsel %vm62, %v1033, 0
  %v1139 = vsel %vm62, %v1077, 0
  %v1142 = vsel %vm62, %v1079, 0
  %v1145 = vsel %vm62, %v1081, 0
  %v1148 = vsel %vm62, %v1083, 0
  %v1151 = vsel %vm62, %v1085, 0
  %v1154 = vsel %vm62, %v1087, 0
  %1156 = vmatprep.subr.mxu0 0.0
  %1157 = vmatpush1.msra.mxu0 0.0
  %1158 = vmatprep.subr.mxu0 0.0
  %1159 = vmatpush1.msra.mxu0 0.0
  %1160 = vmatprep.subr.mxu0 0.0
  %1161 = vmatpush1.msra.mxu0 0.0
  %1162 = vmatprep.subr.mxu0 0.0
  %1163 = vmatpush1.msra.mxu0 0.0
  %1164 = vmatprep.subr.mxu0 0.0
  %1165 = vmatpush1.msra.mxu0 0.0
  %1166 = vmatprep.subr.mxu0 0.0
  %1167 = vmatpush1.msra.mxu0 0.0
  %1168 = vmatprep.subr.mxu0 0.0
  %1169 = vmatpush1.msra.mxu0 0.0
  %1170 = vmatprep.subr.mxu0 0.0
  %1171 = vmatpush1.msra.mxu0 0.0
  %1172 = vmatprep.subr.mxu0 0.0
  %1173 = vmatpush1.msra.mxu0 0.0
  %1174 = vmatprep.subr.mxu0 0.0
  %1175 = vmatpush1.msra.mxu0 0.0
  %1176 = vmatprep.subr.mxu0 0.0
  %1177 = vmatpush1.msra.mxu0 0.0
  %1178 = vmatprep.subr.mxu0 0.0
  %1179 = vmatpush1.msra.mxu0 0.0
  %1180 = vmatprep.subr.mxu0 0.0
  %1181 = vmatpush1.msra.mxu0 0.0
  %1182 = vmatprep.subr.mxu0 0.0
  %1183 = vmatpush1.msra.mxu0 0.0
  %1184 = vmatprep.subr.mxu0 0.0
  %1185 = vmatpush1.msra.mxu0 %v1090
  %1186 = vmatprep.subr.mxu0 0.0
  %1187 = vmatpush1.msra.mxu0 %v1089
  %1188 = vmatprep.subr.mxu0 0.0
  %1189 = vmatpush2.msra.mxu0 0.0
  %1190 = vmatprep.subr.mxu0 0.0
  %1191 = vmatpush2.msra.mxu0 0.0
  %1192 = vmatprep.subr.mxu0 0.0
  %1193 = vmatpush2.msra.mxu0 0.0
  %1194 = vmatprep.subr.mxu0 0.0
  %1195 = vmatpush2.msra.mxu0 0.0
  %1196 = vmatprep.subr.mxu0 0.0
  %1197 = vmatpush2.msra.mxu0 0.0
  %1198 = vmatprep.subr.mxu0 0.0
  %1199 = vmatpush2.msra.mxu0 0.0
  %1200 = vmatprep.subr.mxu0 0.0
  %1201 = vmatpush2.msra.mxu0 0.0
  %1202 = vmatprep.subr.mxu0 0.0
  %1203 = vmatpush2.msra.mxu0 0.0
  %1204 = vmatprep.subr.mxu0 0.0
  %1205 = vmatpush2.msra.mxu0 0.0
  %1206 = vmatprep.subr.mxu0 0.0
  %1207 = vmatpush2.msra.mxu0 0.0
  %1208 = vmatprep.subr.mxu0 0.0
  %1209 = vmatpush2.msra.mxu0 0.0
  %1210 = vmatprep.subr.mxu0 0.0
  %1211 = vmatpush2.msra.mxu0 0.0
  %1212 = vmatprep.subr.mxu0 0.0
  %1213 = vmatpush2.msra.mxu0 0.0
  %1214 = vmatprep.subr.mxu0 0.0
  %1215 = vmatpush2.msra.mxu0 0.0
  %1216 = vmatprep.subr.mxu0 0.0
  %1217 = vmatpush2.msra.mxu0 0.0
  %1218 = vmatprep.subr.mxu0 0.0
  %1219 = vmatpush2.msra.mxu0 0.0
  %1220 = vmatprep.mubr.f32.mxu0 0.0
  %1221 = vmatmul.mubr.f32.gmra.mxu0 %v1121
  %v1222 = vpop.f32.mrf.mxu0
  %v1223 = vadd.f32 0.0, %v1222
  %v1224 = vpop.f32.mrf.mxu0
  %1225 = vmatprep.mubr.f32.mxu0 0.0
  %1226 = vmatmul.mubr.f32.gmra.mxu0 %v1124
  %v1227 = vpop.f32.mrf.mxu0
  %v1228 = vadd.f32 0.0, %v1227
  %v1229 = vpop.f32.mrf.mxu0
  %1230 = vmatprep.mubr.f32.mxu0 0.0
  %1231 = vmatmul.mubr.f32.gmra.mxu0 %v1127
  %v1232 = vpop.f32.mrf.mxu0
  %v1233 = vadd.f32 0.0, %v1232
  %v1234 = vpop.f32.mrf.mxu0
  %1235 = vmatprep.mubr.f32.mxu0 0.0
  %1236 = vmatmul.mubr.f32.gmra.mxu0 %v1130
  %v1237 = vpop.f32.mrf.mxu0
  %v1238 = vadd.f32 0.0, %v1237
  %v1239 = vpop.f32.mrf.mxu0
  %1240 = vmatprep.mubr.f32.mxu0 0.0
  %1241 = vmatmul.mubr.f32.gmra.mxu0 %v1133
  %v1242 = vpop.f32.mrf.mxu0
  %v1243 = vadd.f32 0.0, %v1242
  %v1244 = vpop.f32.mrf.mxu0
  %1245 = vmatprep.mubr.f32.mxu0 0.0
  %1246 = vmatmul.mubr.f32.gmra.mxu0 %v1136
  %v1247 = vpop.f32.mrf.mxu0
  %v1248 = vadd.f32 0.0, %v1247
  %v1249 = vpop.f32.mrf.mxu0
  %1250 = vmatprep.mubr.f32.mxu0 0.0
  %1251 = vmatmul.mubr.f32.gmra.mxu0 %v1139
  %v1252 = vpop.f32.mrf.mxu0
  %v1253 = vadd.f32 0.0, %v1252
  %v1254 = vpop.f32.mrf.mxu0
  %1255 = vmatprep.mubr.f32.mxu0 0.0
  %1256 = vmatmul.mubr.f32.gmra.mxu0 %v1142
  %v1257 = vpop.f32.mrf.mxu0
  %v1258 = vadd.f32 0.0, %v1257
  %v1259 = vpop.f32.mrf.mxu0
  %1260 = vmatprep.mubr.f32.mxu0 0.0
  %1261 = vmatmul.mubr.f32.gmra.mxu0 %v1145
  %v1262 = vpop.f32.mrf.mxu0
  %v1263 = vadd.f32 0.0, %v1262
  %v1264 = vpop.f32.mrf.mxu0
  %1265 = vmatprep.mubr.f32.mxu0 0.0
  %1266 = vmatmul.mubr.f32.gmra.mxu0 %v1148
  %v1267 = vpop.f32.mrf.mxu0
  %v1268 = vadd.f32 0.0, %v1267
  %v1269 = vpop.f32.mrf.mxu0
  %1270 = vmatprep.mubr.f32.mxu0 0.0
  %1271 = vmatmul.mubr.f32.gmra.mxu0 %v1151
  %v1272 = vpop.f32.mrf.mxu0
  %v1273 = vadd.f32 0.0, %v1272
  %v1274 = vpop.f32.mrf.mxu0
  %1275 = vmatprep.mubr.f32.mxu0 0.0
  %1276 = vmatmul.mubr.f32.gmra.mxu0 %v1154
  %v1277 = vpop.f32.mrf.mxu0
  %v1278 = vadd.f32 0.0, %v1277
  %v1279 = vpop.f32.mrf.mxu0
  %1280 = vdwg.mxu0
  %v1282 = vlaneseq
  %v1283 = vshrl.u32 %v1282, 7
  %v1284 = vsub.s32 0, %v1283
  %v1285 = vrot.slane %v1105, %v1284
  %v1288 = vsel %vm230, %v1092, 0
  %v1291 = vsel %vm230, %v1093, 0
  %v1294 = vsel %vm230, %v1094, 0
  %v1297 = vsel %vm230, %v1095, 0
  %v1300 = vsel %vm230, %v1096, 0
  %v1303 = vsel %vm230, %v1097, 0
  %v1306 = vsel %vm230, %v1098, 0
  %v1309 = vsel %vm230, %v1099, 0
  %v1312 = vsel %vm230, %v1100, 0
  %v1315 = vsel %vm230, %v1101, 0
  %v1318 = vsel %vm230, %v1102, 0
  %v1321 = vsel %vm230, %v1103, 0
  %1323 = vmatprep.subr.mxu0 0.0
  %1324 = vmatpush1.msra.mxu0 0.0
  %1325 = vmatprep.subr.mxu0 0.0
  %1326 = vmatpush1.msra.mxu0 0.0
  %1327 = vmatprep.subr.mxu0 0.0
  %1328 = vmatpush1.msra.mxu0 0.0
  %1329 = vmatprep.subr.mxu0 0.0
  %1330 = vmatpush1.msra.mxu0 0.0
  %1331 = vmatprep.subr.mxu0 0.0
  %1332 = vmatpush1.msra.mxu0 %v1278
  %1333 = vmatprep.subr.mxu0 0.0
  %1334 = vmatpush1.msra.mxu0 %v1273
  %1335 = vmatprep.subr.mxu0 0.0
  %1336 = vmatpush1.msra.mxu0 %v1268
  %1337 = vmatprep.subr.mxu0 0.0
  %1338 = vmatpush1.msra.mxu0 %v1263
  %1339 = vmatprep.subr.mxu0 0.0
  %1340 = vmatpush1.msra.mxu0 %v1258
  %1341 = vmatprep.subr.mxu0 0.0
  %1342 = vmatpush1.msra.mxu0 %v1253
  %1343 = vmatprep.subr.mxu0 0.0
  %1344 = vmatpush1.msra.mxu0 %v1248
  %1345 = vmatprep.subr.mxu0 0.0
  %1346 = vmatpush1.msra.mxu0 %v1243
  %1347 = vmatprep.subr.mxu0 0.0
  %1348 = vmatpush1.msra.mxu0 %v1238
  %1349 = vmatprep.subr.mxu0 0.0
  %1350 = vmatpush1.msra.mxu0 %v1233
  %1351 = vmatprep.subr.mxu0 0.0
  %1352 = vmatpush1.msra.mxu0 %v1228
  %1353 = vmatprep.subr.mxu0 0.0
  %1354 = vmatpush1.msra.mxu0 %v1223
  %1355 = vmatprep.subr.mxu0 0.0
  %1356 = vmatpush2.msra.mxu0 0.0
  %1357 = vmatprep.subr.mxu0 0.0
  %1358 = vmatpush2.msra.mxu0 0.0
  %1359 = vmatprep.subr.mxu0 0.0
  %1360 = vmatpush2.msra.mxu0 0.0
  %1361 = vmatprep.subr.mxu0 0.0
  %1362 = vmatpush2.msra.mxu0 0.0
  %1363 = vmatprep.subr.mxu0 0.0
  %1364 = vmatpush2.msra.mxu0 0.0
  %1365 = vmatprep.subr.mxu0 0.0
  %1366 = vmatpush2.msra.mxu0 0.0
  %1367 = vmatprep.subr.mxu0 0.0
  %1368 = vmatpush2.msra.mxu0 0.0
  %1369 = vmatprep.subr.mxu0 0.0
  %1370 = vmatpush2.msra.mxu0 0.0
  %1371 = vmatprep.subr.mxu0 0.0
  %1372 = vmatpush2.msra.mxu0 0.0
  %1373 = vmatprep.subr.mxu0 0.0
  %1374 = vmatpush2.msra.mxu0 0.0
  %1375 = vmatprep.subr.mxu0 0.0
  %1376 = vmatpush2.msra.mxu0 0.0
  %1377 = vmatprep.subr.mxu0 0.0
  %1378 = vmatpush2.msra.mxu0 0.0
  %1379 = vmatprep.subr.mxu0 0.0
  %1380 = vmatpush2.msra.mxu0 0.0
  %1381 = vmatprep.subr.mxu0 0.0
  %1382 = vmatpush2.msra.mxu0 0.0
  %1383 = vmatprep.subr.mxu0 0.0
  %1384 = vmatpush2.msra.mxu0 0.0
  %1385 = vmatprep.subr.mxu0 0.0
  %1386 = vmatpush2.msra.mxu0 0.0
  %1387 = vmatprep.mubr.f32.mxu0 0.0
  %1388 = vmatmul.mubr.f32.gmra.mxu0 %v1288
  %v1389 = vpop.f32.mrf.mxu0
  %v1390 = vadd.f32 %v1285, %v1389
  %v1391 = vpop.f32.mrf.mxu0
  %1392 = vmatprep.mubr.f32.mxu0 0.0
  %1393 = vmatmul.mubr.f32.gmra.mxu0 %v1291
  %v1394 = vpop.f32.mrf.mxu0
  %v1395 = vadd.f32 %v1285, %v1394
  %v1396 = vpop.f32.mrf.mxu0
  %1397 = vmatprep.mubr.f32.mxu0 0.0
  %1398 = vmatmul.mubr.f32.gmra.mxu0 %v1294
  %v1399 = vpop.f32.mrf.mxu0
  %v1400 = vadd.f32 %v1285, %v1399
  %v1401 = vpop.f32.mrf.mxu0
  %1402 = vmatprep.mubr.f32.mxu0 0.0
  %1403 = vmatmul.mubr.f32.gmra.mxu0 %v1297
  %v1404 = vpop.f32.mrf.mxu0
  %v1405 = vadd.f32 %v1285, %v1404
  %v1406 = vpop.f32.mrf.mxu0
  %1407 = vmatprep.mubr.f32.mxu0 0.0
  %1408 = vmatmul.mubr.f32.gmra.mxu0 %v1300
  %v1409 = vpop.f32.mrf.mxu0
  %v1410 = vadd.f32 %v1285, %v1409
  %v1411 = vpop.f32.mrf.mxu0
  %1412 = vmatprep.mubr.f32.mxu0 0.0
  %1413 = vmatmul.mubr.f32.gmra.mxu0 %v1303
  %v1414 = vpop.f32.mrf.mxu0
  %v1415 = vadd.f32 %v1285, %v1414
  %v1416 = vpop.f32.mrf.mxu0
  %1417 = vmatprep.mubr.f32.mxu0 0.0
  %1418 = vmatmul.mubr.f32.gmra.mxu0 %v1306
  %v1419 = vpop.f32.mrf.mxu0
  %v1420 = vadd.f32 %v1285, %v1419
  %v1421 = vpop.f32.mrf.mxu0
  %1422 = vmatprep.mubr.f32.mxu0 0.0
  %1423 = vmatmul.mubr.f32.gmra.mxu0 %v1309
  %v1424 = vpop.f32.mrf.mxu0
  %v1425 = vadd.f32 %v1285, %v1424
  %v1426 = vpop.f32.mrf.mxu0
  %1427 = vmatprep.mubr.f32.mxu0 0.0
  %1428 = vmatmul.mubr.f32.gmra.mxu0 %v1312
  %v1429 = vpop.f32.mrf.mxu0
  %v1430 = vadd.f32 %v1285, %v1429
  %v1431 = vpop.f32.mrf.mxu0
  %1432 = vmatprep.mubr.f32.mxu0 0.0
  %1433 = vmatmul.mubr.f32.gmra.mxu0 %v1315
  %v1434 = vpop.f32.mrf.mxu0
  %v1435 = vadd.f32 %v1285, %v1434
  %v1436 = vpop.f32.mrf.mxu0
  %1437 = vmatprep.mubr.f32.mxu0 0.0
  %1438 = vmatmul.mubr.f32.gmra.mxu0 %v1318
  %v1439 = vpop.f32.mrf.mxu0
  %v1440 = vadd.f32 %v1285, %v1439
  %v1441 = vpop.f32.mrf.mxu0
  %1442 = vmatprep.mubr.f32.mxu0 0.0
  %1443 = vmatmul.mubr.f32.gmra.mxu0 %v1321
  %v1444 = vpop.f32.mrf.mxu0
  %v1445 = vadd.f32 %v1285, %v1444
  %v1446 = vpop.f32.mrf.mxu0
  %1447 = vdwg.mxu0
  %v1448 = vadd.f32 %v1390, %v1420
  %v1449 = vadd.f32 %v1395, %v1425
  %v1450 = vadd.f32 %v1400, %v1430
  %v1451 = vadd.f32 %v1405, %v1435
  %v1452 = vadd.f32 %v1410, %v1440
  %v1453 = vadd.f32 %v1415, %v1445
  %v1454 = vmul.f32 %v1448, 0.5
  %v1455 = vmul.f32 %v1449, 0.5
  %v1456 = vmul.f32 %v1450, 0.5
  %v1457 = vmul.f32 %v1451, 0.5
  %v1458 = vmul.f32 %v1452, 0.5
  %v1459 = vmul.f32 %v1453, 0.5
  %v1460 = vsub.f32 %v1390, %v1454
  %v1461 = vsub.f32 %v1395, %v1455
  %v1462 = vsub.f32 %v1400, %v1456
  %v1463 = vsub.f32 %v1405, %v1457
  %v1464 = vsub.f32 %v1410, %v1458
  %v1465 = vsub.f32 %v1415, %v1459
  %v1466 = vmul.f32 %v1460, %v1460
  %v1467 = vmul.f32 %v1461, %v1461
  %v1468 = vmul.f32 %v1462, %v1462
  %v1469 = vmul.f32 %v1463, %v1463
  %v1470 = vmul.f32 %v1464, %v1464
  %v1471 = vmul.f32 %v1465, %v1465
  %v1472 = vsub.f32 %v1420, %v1454
  %v1473 = vsub.f32 %v1425, %v1455
  %v1474 = vsub.f32 %v1430, %v1456
  %v1475 = vsub.f32 %v1435, %v1457
  %v1476 = vsub.f32 %v1440, %v1458
  %v1477 = vsub.f32 %v1445, %v1459
  %v1478 = vmul.f32 %v1472, %v1472
  %v1479 = vmul.f32 %v1473, %v1473
  %v1480 = vmul.f32 %v1474, %v1474
  %v1481 = vmul.f32 %v1475, %v1475
  %v1482 = vmul.f32 %v1476, %v1476
  %v1483 = vmul.f32 %v1477, %v1477
  %v1484 = vadd.f32 %v1466, %v1478
  %v1485 = vadd.f32 %v1467, %v1479
  %v1486 = vadd.f32 %v1468, %v1480
  %v1487 = vadd.f32 %v1469, %v1481
  %v1488 = vadd.f32 %v1470, %v1482
  %v1489 = vadd.f32 %v1471, %v1483
  %v1490 = vmul.f32 %v1484, 0.5
  %v1491 = vmul.f32 %v1485, 0.5
  %v1492 = vmul.f32 %v1486, 0.5
  %v1493 = vmul.f32 %v1487, 0.5
  %v1494 = vmul.f32 %v1488, 0.5
  %v1495 = vmul.f32 %v1489, 0.5
  %v1496 = vadd.f32 %v1490, 1e-05
  %v1497 = vadd.f32 %v1491, 1e-05
  %v1498 = vadd.f32 %v1492, 1e-05
  %v1499 = vadd.f32 %v1493, 1e-05
  %v1500 = vadd.f32 %v1494, 1e-05
  %v1501 = vadd.f32 %v1495, 1e-05
  %v1502 = vrsqrt.pop %v1496
  %v1503 = vrsqrt.pop %v1497
  %v1504 = vrsqrt.pop %v1498
  %v1505 = vrsqrt.pop %v1499
  %v1506 = vrsqrt.pop %v1500
  %v1507 = vrsqrt.pop %v1501
  %v1508 = vmul.f32 %v1460, %v1502
  %v1509 = vmul.f32 %v1461, %v1503
  %v1510 = vmul.f32 %v1462, %v1504
  %v1511 = vmul.f32 %v1463, %v1505
  %v1512 = vmul.f32 %v1464, %v1506
  %v1513 = vmul.f32 %v1465, %v1507
  %v1514 = vmul.f32 %v1508, %v1107
  %v1515 = vmul.f32 %v1509, %v1108
  %v1516 = vmul.f32 %v1510, %v1109
  %v1517 = vmul.f32 %v1511, %v1110
  %v1518 = vmul.f32 %v1512, %v1111
  %v1519 = vmul.f32 %v1513, %v1112
  %v1520 = vadd.f32 %v1514, %v1114
  %v1521 = vadd.f32 %v1515, %v1115
  %v1522 = vadd.f32 %v1516, %v1116
  %v1523 = vadd.f32 %v1517, %v1117
  %v1524 = vadd.f32 %v1518, %v1118
  %v1525 = vadd.f32 %v1519, %v1119
  %v1526 = vsub.f32 0.0, %v1520
  %v1527 = vsub.f32 0.0, %v1521
  %v1528 = vsub.f32 0.0, %v1522
  %v1529 = vsub.f32 0.0, %v1523
  %v1530 = vsub.f32 0.0, %v1524
  %v1531 = vsub.f32 0.0, %v1525
  %v1532 = vmul.f32 %v1526, 1.442695
  %v1533 = vpow.pop %v1532
  %v1534 = vmul.f32 %v1527, 1.442695
  %v1535 = vpow.pop %v1534
  %v1536 = vmul.f32 %v1528, 1.442695
  %v1537 = vpow.pop %v1536
  %v1538 = vmul.f32 %v1529, 1.442695
  %v1539 = vpow.pop %v1538
  %v1540 = vmul.f32 %v1530, 1.442695
  %v1541 = vpow.pop %v1540
  %v1542 = vmul.f32 %v1531, 1.442695
  %v1543 = vpow.pop %v1542
  %v1544 = vadd.f32 %v1533, 1.0
  %v1545 = vadd.f32 %v1535, 1.0
  %v1546 = vadd.f32 %v1537, 1.0
  %v1547 = vadd.f32 %v1539, 1.0
  %v1548 = vadd.f32 %v1541, 1.0
  %v1549 = vadd.f32 %v1543, 1.0
  %v1550 = vrcp.pop %v1544
  %v1551 = vmul.f32 1.0, %v1550
  %v1552 = vrcp.pop %v1545
  %v1553 = vmul.f32 1.0, %v1552
  %v1554 = vrcp.pop %v1546
  %v1555 = vmul.f32 1.0, %v1554
  %v1556 = vrcp.pop %v1547
  %v1557 = vmul.f32 1.0, %v1556
  %v1558 = vrcp.pop %v1548
  %v1559 = vmul.f32 1.0, %v1558
  %v1560 = vrcp.pop %v1549
  %v1561 = vmul.f32 1.0, %v1560
  %v1562 = vmul.f32 %v1472, %v1502
  %v1563 = vmul.f32 %v1473, %v1503
  %v1564 = vmul.f32 %v1474, %v1504
  %v1565 = vmul.f32 %v1475, %v1505
  %v1566 = vmul.f32 %v1476, %v1506
  %v1567 = vmul.f32 %v1477, %v1507
  %v1568 = vmul.f32 %v1562, %v1107
  %v1569 = vmul.f32 %v1563, %v1108
  %v1570 = vmul.f32 %v1564, %v1109
  %v1571 = vmul.f32 %v1565, %v1110
  %v1572 = vmul.f32 %v1566, %v1111
  %v1573 = vmul.f32 %v1567, %v1112
  %v1574 = vadd.f32 %v1568, %v1114
  %v1575 = vadd.f32 %v1569, %v1115
  %v1576 = vadd.f32 %v1570, %v1116
  %v1577 = vadd.f32 %v1571, %v1117
  %v1578 = vadd.f32 %v1572, %v1118
  %v1579 = vadd.f32 %v1573, %v1119
  %v1580 = vsub.f32 0.0, %v1574
  %v1581 = vsub.f32 0.0, %v1575
  %v1582 = vsub.f32 0.0, %v1576
  %v1583 = vsub.f32 0.0, %v1577
  %v1584 = vsub.f32 0.0, %v1578
  %v1585 = vsub.f32 0.0, %v1579
  %v1586 = vmul.f32 %v1580, 1.442695
  %v1587 = vpow.pop %v1586
  %v1588 = vmul.f32 %v1581, 1.442695
  %v1589 = vpow.pop %v1588
  %v1590 = vmul.f32 %v1582, 1.442695
  %v1591 = vpow.pop %v1590
  %v1592 = vmul.f32 %v1583, 1.442695
  %v1593 = vpow.pop %v1592
  %v1594 = vmul.f32 %v1584, 1.442695
  %v1595 = vpow.pop %v1594
  %v1596 = vmul.f32 %v1585, 1.442695
  %v1597 = vpow.pop %v1596
  %v1598 = vadd.f32 %v1587, 1.0
  %v1599 = vadd.f32 %v1589, 1.0
  %v1600 = vadd.f32 %v1591, 1.0
  %v1601 = vadd.f32 %v1593, 1.0
  %v1602 = vadd.f32 %v1595, 1.0
  %v1603 = vadd.f32 %v1597, 1.0
  %v1604 = vrcp.pop %v1598
  %v1605 = vmul.f32 1.0, %v1604
  %v1606 = vrcp.pop %v1599
  %v1607 = vmul.f32 1.0, %v1606
  %v1608 = vrcp.pop %v1600
  %v1609 = vmul.f32 1.0, %v1608
  %v1610 = vrcp.pop %v1601
  %v1611 = vmul.f32 1.0, %v1610
  %v1612 = vrcp.pop %v1602
  %v1613 = vmul.f32 1.0, %v1612
  %v1614 = vrcp.pop %v1603
  %v1615 = vmul.f32 1.0, %v1614
  %s1616 = scalar_lea.vmem %s2, 48
  %v1617 = vld [vmem:[%s1616] sm:$0xff]
  %v1618 = vld [vmem:[%s1616 + $0x8] sm:$0xff]
  %s1619 = scalar_lea.vmem %s1, 288
  %v1620 = vld [vmem:[%s1619] sm:$0xff]
  %v1621 = vld [vmem:[%s1619 + $0x8] sm:$0xff]
  %v1622 = vld [vmem:[%s1619 + $0x10] sm:$0xff]
  %v1623 = vld [vmem:[%s1619 + $0x18] sm:$0xff]
  %v1624 = vld [vmem:[%s1619 + $0x20] sm:$0xff]
  %v1625 = vld [vmem:[%s1619 + $0x28] sm:$0xff]
  %v1626 = vld [vmem:[%s1619 + $0x30] sm:$0xff]
  %v1627 = vld [vmem:[%s1619 + $0x38] sm:$0xff]
  %v1628 = vld [vmem:[%s1619 + $0x40] sm:$0xff]
  %v1629 = vld [vmem:[%s1619 + $0x48] sm:$0xff]
  %v1630 = vld [vmem:[%s1619 + $0x50] sm:$0xff]
  %v1631 = vld [vmem:[%s1619 + $0x58] sm:$0xff]
  %s1632 = scalar_lea.vmem %s3, 3
  %v1633 = vld [vmem:[%s1632] sm:$0x1]
  %s1634 = scalar_lea.vmem %s4, 144
  %v1635 = vld [vmem:[%s1634] sm:$0xff]
  %v1636 = vld [vmem:[%s1634 + $0x8] sm:$0xff]
  %v1637 = vld [vmem:[%s1634 + $0x10] sm:$0xff]
  %v1638 = vld [vmem:[%s1634 + $0x18] sm:$0xff]
  %v1639 = vld [vmem:[%s1634 + $0x20] sm:$0xff]
  %v1640 = vld [vmem:[%s1634 + $0x28] sm:$0xff]
  %s1641 = scalar_lea.vmem %s5, 144
  %v1642 = vld [vmem:[%s1641] sm:$0xff]
  %v1643 = vld [vmem:[%s1641 + $0x8] sm:$0xff]
  %v1644 = vld [vmem:[%s1641 + $0x10] sm:$0xff]
  %v1645 = vld [vmem:[%s1641 + $0x18] sm:$0xff]
  %v1646 = vld [vmem:[%s1641 + $0x20] sm:$0xff]
  %v1647 = vld [vmem:[%s1641 + $0x28] sm:$0xff]
  %v1649 = vsel %vm62, %v1551, 0
  %v1652 = vsel %vm62, %v1553, 0
  %v1655 = vsel %vm62, %v1555, 0
  %v1658 = vsel %vm62, %v1557, 0
  %v1661 = vsel %vm62, %v1559, 0
  %v1664 = vsel %vm62, %v1561, 0
  %v1667 = vsel %vm62, %v1605, 0
  %v1670 = vsel %vm62, %v1607, 0
  %v1673 = vsel %vm62, %v1609, 0
  %v1676 = vsel %vm62, %v1611, 0
  %v1679 = vsel %vm62, %v1613, 0
  %v1682 = vsel %vm62, %v1615, 0
  %1684 = vmatprep.subr.mxu0 0.0
  %1685 = vmatpush1.msra.mxu0 0.0
  %1686 = vmatprep.subr.mxu0 0.0
  %1687 = vmatpush1.msra.mxu0 0.0
  %1688 = vmatprep.subr.mxu0 0.0
  %1689 = vmatpush1.msra.mxu0 0.0
  %1690 = vmatprep.subr.mxu0 0.0
  %1691 = vmatpush1.msra.mxu0 0.0
  %1692 = vmatprep.subr.mxu0 0.0
  %1693 = vmatpush1.msra.mxu0 0.0
  %1694 = vmatprep.subr.mxu0 0.0
  %1695 = vmatpush1.msra.mxu0 0.0
  %1696 = vmatprep.subr.mxu0 0.0
  %1697 = vmatpush1.msra.mxu0 0.0
  %1698 = vmatprep.subr.mxu0 0.0
  %1699 = vmatpush1.msra.mxu0 0.0
  %1700 = vmatprep.subr.mxu0 0.0
  %1701 = vmatpush1.msra.mxu0 0.0
  %1702 = vmatprep.subr.mxu0 0.0
  %1703 = vmatpush1.msra.mxu0 0.0
  %1704 = vmatprep.subr.mxu0 0.0
  %1705 = vmatpush1.msra.mxu0 0.0
  %1706 = vmatprep.subr.mxu0 0.0
  %1707 = vmatpush1.msra.mxu0 0.0
  %1708 = vmatprep.subr.mxu0 0.0
  %1709 = vmatpush1.msra.mxu0 0.0
  %1710 = vmatprep.subr.mxu0 0.0
  %1711 = vmatpush1.msra.mxu0 0.0
  %1712 = vmatprep.subr.mxu0 0.0
  %1713 = vmatpush1.msra.mxu0 %v1618
  %1714 = vmatprep.subr.mxu0 0.0
  %1715 = vmatpush1.msra.mxu0 %v1617
  %1716 = vmatprep.subr.mxu0 0.0
  %1717 = vmatpush2.msra.mxu0 0.0
  %1718 = vmatprep.subr.mxu0 0.0
  %1719 = vmatpush2.msra.mxu0 0.0
  %1720 = vmatprep.subr.mxu0 0.0
  %1721 = vmatpush2.msra.mxu0 0.0
  %1722 = vmatprep.subr.mxu0 0.0
  %1723 = vmatpush2.msra.mxu0 0.0
  %1724 = vmatprep.subr.mxu0 0.0
  %1725 = vmatpush2.msra.mxu0 0.0
  %1726 = vmatprep.subr.mxu0 0.0
  %1727 = vmatpush2.msra.mxu0 0.0
  %1728 = vmatprep.subr.mxu0 0.0
  %1729 = vmatpush2.msra.mxu0 0.0
  %1730 = vmatprep.subr.mxu0 0.0
  %1731 = vmatpush2.msra.mxu0 0.0
  %1732 = vmatprep.subr.mxu0 0.0
  %1733 = vmatpush2.msra.mxu0 0.0
  %1734 = vmatprep.subr.mxu0 0.0
  %1735 = vmatpush2.msra.mxu0 0.0
  %1736 = vmatprep.subr.mxu0 0.0
  %1737 = vmatpush2.msra.mxu0 0.0
  %1738 = vmatprep.subr.mxu0 0.0
  %1739 = vmatpush2.msra.mxu0 0.0
  %1740 = vmatprep.subr.mxu0 0.0
  %1741 = vmatpush2.msra.mxu0 0.0
  %1742 = vmatprep.subr.mxu0 0.0
  %1743 = vmatpush2.msra.mxu0 0.0
  %1744 = vmatprep.subr.mxu0 0.0
  %1745 = vmatpush2.msra.mxu0 0.0
  %1746 = vmatprep.subr.mxu0 0.0
  %1747 = vmatpush2.msra.mxu0 0.0
  %1748 = vmatprep.mubr.f32.mxu0 0.0
  %1749 = vmatmul.mubr.f32.gmra.mxu0 %v1649
  %v1750 = vpop.f32.mrf.mxu0
  %v1751 = vadd.f32 0.0, %v1750
  %v1752 = vpop.f32.mrf.mxu0
  %1753 = vmatprep.mubr.f32.mxu0 0.0
  %1754 = vmatmul.mubr.f32.gmra.mxu0 %v1652
  %v1755 = vpop.f32.mrf.mxu0
  %v1756 = vadd.f32 0.0, %v1755
  %v1757 = vpop.f32.mrf.mxu0
  %1758 = vmatprep.mubr.f32.mxu0 0.0
  %1759 = vmatmul.mubr.f32.gmra.mxu0 %v1655
  %v1760 = vpop.f32.mrf.mxu0
  %v1761 = vadd.f32 0.0, %v1760
  %v1762 = vpop.f32.mrf.mxu0
  %1763 = vmatprep.mubr.f32.mxu0 0.0
  %1764 = vmatmul.mubr.f32.gmra.mxu0 %v1658
  %v1765 = vpop.f32.mrf.mxu0
  %v1766 = vadd.f32 0.0, %v1765
  %v1767 = vpop.f32.mrf.mxu0
  %1768 = vmatprep.mubr.f32.mxu0 0.0
  %1769 = vmatmul.mubr.f32.gmra.mxu0 %v1661
  %v1770 = vpop.f32.mrf.mxu0
  %v1771 = vadd.f32 0.0, %v1770
  %v1772 = vpop.f32.mrf.mxu0
  %1773 = vmatprep.mubr.f32.mxu0 0.0
  %1774 = vmatmul.mubr.f32.gmra.mxu0 %v1664
  %v1775 = vpop.f32.mrf.mxu0
  %v1776 = vadd.f32 0.0, %v1775
  %v1777 = vpop.f32.mrf.mxu0
  %1778 = vmatprep.mubr.f32.mxu0 0.0
  %1779 = vmatmul.mubr.f32.gmra.mxu0 %v1667
  %v1780 = vpop.f32.mrf.mxu0
  %v1781 = vadd.f32 0.0, %v1780
  %v1782 = vpop.f32.mrf.mxu0
  %1783 = vmatprep.mubr.f32.mxu0 0.0
  %1784 = vmatmul.mubr.f32.gmra.mxu0 %v1670
  %v1785 = vpop.f32.mrf.mxu0
  %v1786 = vadd.f32 0.0, %v1785
  %v1787 = vpop.f32.mrf.mxu0
  %1788 = vmatprep.mubr.f32.mxu0 0.0
  %1789 = vmatmul.mubr.f32.gmra.mxu0 %v1673
  %v1790 = vpop.f32.mrf.mxu0
  %v1791 = vadd.f32 0.0, %v1790
  %v1792 = vpop.f32.mrf.mxu0
  %1793 = vmatprep.mubr.f32.mxu0 0.0
  %1794 = vmatmul.mubr.f32.gmra.mxu0 %v1676
  %v1795 = vpop.f32.mrf.mxu0
  %v1796 = vadd.f32 0.0, %v1795
  %v1797 = vpop.f32.mrf.mxu0
  %1798 = vmatprep.mubr.f32.mxu0 0.0
  %1799 = vmatmul.mubr.f32.gmra.mxu0 %v1679
  %v1800 = vpop.f32.mrf.mxu0
  %v1801 = vadd.f32 0.0, %v1800
  %v1802 = vpop.f32.mrf.mxu0
  %1803 = vmatprep.mubr.f32.mxu0 0.0
  %1804 = vmatmul.mubr.f32.gmra.mxu0 %v1682
  %v1805 = vpop.f32.mrf.mxu0
  %v1806 = vadd.f32 0.0, %v1805
  %v1807 = vpop.f32.mrf.mxu0
  %1808 = vdwg.mxu0
  %v1810 = vlaneseq
  %v1811 = vshrl.u32 %v1810, 7
  %v1812 = vsub.s32 0, %v1811
  %v1813 = vrot.slane %v1633, %v1812
  %v1816 = vsel %vm230, %v1620, 0
  %v1819 = vsel %vm230, %v1621, 0
  %v1822 = vsel %vm230, %v1622, 0
  %v1825 = vsel %vm230, %v1623, 0
  %v1828 = vsel %vm230, %v1624, 0
  %v1831 = vsel %vm230, %v1625, 0
  %v1834 = vsel %vm230, %v1626, 0
  %v1837 = vsel %vm230, %v1627, 0
  %v1840 = vsel %vm230, %v1628, 0
  %v1843 = vsel %vm230, %v1629, 0
  %v1846 = vsel %vm230, %v1630, 0
  %v1849 = vsel %vm230, %v1631, 0
  %1851 = vmatprep.subr.mxu0 0.0
  %1852 = vmatpush1.msra.mxu0 0.0
  %1853 = vmatprep.subr.mxu0 0.0
  %1854 = vmatpush1.msra.mxu0 0.0
  %1855 = vmatprep.subr.mxu0 0.0
  %1856 = vmatpush1.msra.mxu0 0.0
  %1857 = vmatprep.subr.mxu0 0.0
  %1858 = vmatpush1.msra.mxu0 0.0
  %1859 = vmatprep.subr.mxu0 0.0
  %1860 = vmatpush1.msra.mxu0 %v1806
  %1861 = vmatprep.subr.mxu0 0.0
  %1862 = vmatpush1.msra.mxu0 %v1801
  %1863 = vmatprep.subr.mxu0 0.0
  %1864 = vmatpush1.msra.mxu0 %v1796
  %1865 = vmatprep.subr.mxu0 0.0
  %1866 = vmatpush1.msra.mxu0 %v1791
  %1867 = vmatprep.subr.mxu0 0.0
  %1868 = vmatpush1.msra.mxu0 %v1786
  %1869 = vmatprep.subr.mxu0 0.0
  %1870 = vmatpush1.msra.mxu0 %v1781
  %1871 = vmatprep.subr.mxu0 0.0
  %1872 = vmatpush1.msra.mxu0 %v1776
  %1873 = vmatprep.subr.mxu0 0.0
  %1874 = vmatpush1.msra.mxu0 %v1771
  %1875 = vmatprep.subr.mxu0 0.0
  %1876 = vmatpush1.msra.mxu0 %v1766
  %1877 = vmatprep.subr.mxu0 0.0
  %1878 = vmatpush1.msra.mxu0 %v1761
  %1879 = vmatprep.subr.mxu0 0.0
  %1880 = vmatpush1.msra.mxu0 %v1756
  %1881 = vmatprep.subr.mxu0 0.0
  %1882 = vmatpush1.msra.mxu0 %v1751
  %1883 = vmatprep.subr.mxu0 0.0
  %1884 = vmatpush2.msra.mxu0 0.0
  %1885 = vmatprep.subr.mxu0 0.0
  %1886 = vmatpush2.msra.mxu0 0.0
  %1887 = vmatprep.subr.mxu0 0.0
  %1888 = vmatpush2.msra.mxu0 0.0
  %1889 = vmatprep.subr.mxu0 0.0
  %1890 = vmatpush2.msra.mxu0 0.0
  %1891 = vmatprep.subr.mxu0 0.0
  %1892 = vmatpush2.msra.mxu0 0.0
  %1893 = vmatprep.subr.mxu0 0.0
  %1894 = vmatpush2.msra.mxu0 0.0
  %1895 = vmatprep.subr.mxu0 0.0
  %1896 = vmatpush2.msra.mxu0 0.0
  %1897 = vmatprep.subr.mxu0 0.0
  %1898 = vmatpush2.msra.mxu0 0.0
  %1899 = vmatprep.subr.mxu0 0.0
  %1900 = vmatpush2.msra.mxu0 0.0
  %1901 = vmatprep.subr.mxu0 0.0
  %1902 = vmatpush2.msra.mxu0 0.0
  %1903 = vmatprep.subr.mxu0 0.0
  %1904 = vmatpush2.msra.mxu0 0.0
  %1905 = vmatprep.subr.mxu0 0.0
  %1906 = vmatpush2.msra.mxu0 0.0
  %1907 = vmatprep.subr.mxu0 0.0
  %1908 = vmatpush2.msra.mxu0 0.0
  %1909 = vmatprep.subr.mxu0 0.0
  %1910 = vmatpush2.msra.mxu0 0.0
  %1911 = vmatprep.subr.mxu0 0.0
  %1912 = vmatpush2.msra.mxu0 0.0
  %1913 = vmatprep.subr.mxu0 0.0
  %1914 = vmatpush2.msra.mxu0 0.0
  %1915 = vmatprep.mubr.f32.mxu0 0.0
  %1916 = vmatmul.mubr.f32.gmra.mxu0 %v1816
  %v1917 = vpop.f32.mrf.mxu0
  %v1918 = vadd.f32 %v1813, %v1917
  %v1919 = vpop.f32.mrf.mxu0
  %1920 = vmatprep.mubr.f32.mxu0 0.0
  %1921 = vmatmul.mubr.f32.gmra.mxu0 %v1819
  %v1922 = vpop.f32.mrf.mxu0
  %v1923 = vadd.f32 %v1813, %v1922
  %v1924 = vpop.f32.mrf.mxu0
  %1925 = vmatprep.mubr.f32.mxu0 0.0
  %1926 = vmatmul.mubr.f32.gmra.mxu0 %v1822
  %v1927 = vpop.f32.mrf.mxu0
  %v1928 = vadd.f32 %v1813, %v1927
  %v1929 = vpop.f32.mrf.mxu0
  %1930 = vmatprep.mubr.f32.mxu0 0.0
  %1931 = vmatmul.mubr.f32.gmra.mxu0 %v1825
  %v1932 = vpop.f32.mrf.mxu0
  %v1933 = vadd.f32 %v1813, %v1932
  %v1934 = vpop.f32.mrf.mxu0
  %1935 = vmatprep.mubr.f32.mxu0 0.0
  %1936 = vmatmul.mubr.f32.gmra.mxu0 %v1828
  %v1937 = vpop.f32.mrf.mxu0
  %v1938 = vadd.f32 %v1813, %v1937
  %v1939 = vpop.f32.mrf.mxu0
  %1940 = vmatprep.mubr.f32.mxu0 0.0
  %1941 = vmatmul.mubr.f32.gmra.mxu0 %v1831
  %v1942 = vpop.f32.mrf.mxu0
  %v1943 = vadd.f32 %v1813, %v1942
  %v1944 = vpop.f32.mrf.mxu0
  %1945 = vmatprep.mubr.f32.mxu0 0.0
  %1946 = vmatmul.mubr.f32.gmra.mxu0 %v1834
  %v1947 = vpop.f32.mrf.mxu0
  %v1948 = vadd.f32 %v1813, %v1947
  %v1949 = vpop.f32.mrf.mxu0
  %1950 = vmatprep.mubr.f32.mxu0 0.0
  %1951 = vmatmul.mubr.f32.gmra.mxu0 %v1837
  %v1952 = vpop.f32.mrf.mxu0
  %v1953 = vadd.f32 %v1813, %v1952
  %v1954 = vpop.f32.mrf.mxu0
  %1955 = vmatprep.mubr.f32.mxu0 0.0
  %1956 = vmatmul.mubr.f32.gmra.mxu0 %v1840
  %v1957 = vpop.f32.mrf.mxu0
  %v1958 = vadd.f32 %v1813, %v1957
  %v1959 = vpop.f32.mrf.mxu0
  %1960 = vmatprep.mubr.f32.mxu0 0.0
  %1961 = vmatmul.mubr.f32.gmra.mxu0 %v1843
  %v1962 = vpop.f32.mrf.mxu0
  %v1963 = vadd.f32 %v1813, %v1962
  %v1964 = vpop.f32.mrf.mxu0
  %1965 = vmatprep.mubr.f32.mxu0 0.0
  %1966 = vmatmul.mubr.f32.gmra.mxu0 %v1846
  %v1967 = vpop.f32.mrf.mxu0
  %v1968 = vadd.f32 %v1813, %v1967
  %v1969 = vpop.f32.mrf.mxu0
  %1970 = vmatprep.mubr.f32.mxu0 0.0
  %1971 = vmatmul.mubr.f32.gmra.mxu0 %v1849
  %v1972 = vpop.f32.mrf.mxu0
  %v1973 = vadd.f32 %v1813, %v1972
  %v1974 = vpop.f32.mrf.mxu0
  %1975 = vdwg.mxu0
  %v1976 = vadd.f32 %v1918, %v1948
  %v1977 = vadd.f32 %v1923, %v1953
  %v1978 = vadd.f32 %v1928, %v1958
  %v1979 = vadd.f32 %v1933, %v1963
  %v1980 = vadd.f32 %v1938, %v1968
  %v1981 = vadd.f32 %v1943, %v1973
  %v1982 = vmul.f32 %v1976, 0.5
  %v1983 = vmul.f32 %v1977, 0.5
  %v1984 = vmul.f32 %v1978, 0.5
  %v1985 = vmul.f32 %v1979, 0.5
  %v1986 = vmul.f32 %v1980, 0.5
  %v1987 = vmul.f32 %v1981, 0.5
  %v1988 = vsub.f32 %v1918, %v1982
  %v1989 = vsub.f32 %v1923, %v1983
  %v1990 = vsub.f32 %v1928, %v1984
  %v1991 = vsub.f32 %v1933, %v1985
  %v1992 = vsub.f32 %v1938, %v1986
  %v1993 = vsub.f32 %v1943, %v1987
  %v1994 = vmul.f32 %v1988, %v1988
  %v1995 = vmul.f32 %v1989, %v1989
  %v1996 = vmul.f32 %v1990, %v1990
  %v1997 = vmul.f32 %v1991, %v1991
  %v1998 = vmul.f32 %v1992, %v1992
  %v1999 = vmul.f32 %v1993, %v1993
  %v2000 = vsub.f32 %v1948, %v1982
  %v2001 = vsub.f32 %v1953, %v1983
  %v2002 = vsub.f32 %v1958, %v1984
  %v2003 = vsub.f32 %v1963, %v1985
  %v2004 = vsub.f32 %v1968, %v1986
  %v2005 = vsub.f32 %v1973, %v1987
  %v2006 = vmul.f32 %v2000, %v2000
  %v2007 = vmul.f32 %v2001, %v2001
  %v2008 = vmul.f32 %v2002, %v2002
  %v2009 = vmul.f32 %v2003, %v2003
  %v2010 = vmul.f32 %v2004, %v2004
  %v2011 = vmul.f32 %v2005, %v2005
  %v2012 = vadd.f32 %v1994, %v2006
  %v2013 = vadd.f32 %v1995, %v2007
  %v2014 = vadd.f32 %v1996, %v2008
  %v2015 = vadd.f32 %v1997, %v2009
  %v2016 = vadd.f32 %v1998, %v2010
  %v2017 = vadd.f32 %v1999, %v2011
  %v2018 = vmul.f32 %v2012, 0.5
  %v2019 = vmul.f32 %v2013, 0.5
  %v2020 = vmul.f32 %v2014, 0.5
  %v2021 = vmul.f32 %v2015, 0.5
  %v2022 = vmul.f32 %v2016, 0.5
  %v2023 = vmul.f32 %v2017, 0.5
  %v2024 = vadd.f32 %v2018, 1e-05
  %v2025 = vadd.f32 %v2019, 1e-05
  %v2026 = vadd.f32 %v2020, 1e-05
  %v2027 = vadd.f32 %v2021, 1e-05
  %v2028 = vadd.f32 %v2022, 1e-05
  %v2029 = vadd.f32 %v2023, 1e-05
  %v2030 = vrsqrt.pop %v2024
  %v2031 = vrsqrt.pop %v2025
  %v2032 = vrsqrt.pop %v2026
  %v2033 = vrsqrt.pop %v2027
  %v2034 = vrsqrt.pop %v2028
  %v2035 = vrsqrt.pop %v2029
  %v2036 = vmul.f32 %v1988, %v2030
  %v2037 = vmul.f32 %v1989, %v2031
  %v2038 = vmul.f32 %v1990, %v2032
  %v2039 = vmul.f32 %v1991, %v2033
  %v2040 = vmul.f32 %v1992, %v2034
  %v2041 = vmul.f32 %v1993, %v2035
  %v2042 = vmul.f32 %v2036, %v1635
  %v2043 = vmul.f32 %v2037, %v1636
  %v2044 = vmul.f32 %v2038, %v1637
  %v2045 = vmul.f32 %v2039, %v1638
  %v2046 = vmul.f32 %v2040, %v1639
  %v2047 = vmul.f32 %v2041, %v1640
  %v2048 = vadd.f32 %v2042, %v1642
  %v2049 = vadd.f32 %v2043, %v1643
  %v2050 = vadd.f32 %v2044, %v1644
  %v2051 = vadd.f32 %v2045, %v1645
  %v2052 = vadd.f32 %v2046, %v1646
  %v2053 = vadd.f32 %v2047, %v1647
  %v2054 = vsub.f32 0.0, %v2048
  %v2055 = vsub.f32 0.0, %v2049
  %v2056 = vsub.f32 0.0, %v2050
  %v2057 = vsub.f32 0.0, %v2051
  %v2058 = vsub.f32 0.0, %v2052
  %v2059 = vsub.f32 0.0, %v2053
  %v2060 = vmul.f32 %v2054, 1.442695
  %v2061 = vpow.pop %v2060
  %v2062 = vmul.f32 %v2055, 1.442695
  %v2063 = vpow.pop %v2062
  %v2064 = vmul.f32 %v2056, 1.442695
  %v2065 = vpow.pop %v2064
  %v2066 = vmul.f32 %v2057, 1.442695
  %v2067 = vpow.pop %v2066
  %v2068 = vmul.f32 %v2058, 1.442695
  %v2069 = vpow.pop %v2068
  %v2070 = vmul.f32 %v2059, 1.442695
  %v2071 = vpow.pop %v2070
  %v2072 = vadd.f32 %v2061, 1.0
  %v2073 = vadd.f32 %v2063, 1.0
  %v2074 = vadd.f32 %v2065, 1.0
  %v2075 = vadd.f32 %v2067, 1.0
  %v2076 = vadd.f32 %v2069, 1.0
  %v2077 = vadd.f32 %v2071, 1.0
  %v2078 = vrcp.pop %v2072
  %v2079 = vmul.f32 1.0, %v2078
  %v2080 = vrcp.pop %v2073
  %v2081 = vmul.f32 1.0, %v2080
  %v2082 = vrcp.pop %v2074
  %v2083 = vmul.f32 1.0, %v2082
  %v2084 = vrcp.pop %v2075
  %v2085 = vmul.f32 1.0, %v2084
  %v2086 = vrcp.pop %v2076
  %v2087 = vmul.f32 1.0, %v2086
  %v2088 = vrcp.pop %v2077
  %v2089 = vmul.f32 1.0, %v2088
  %v2090 = vmul.f32 %v2000, %v2030
  %v2091 = vmul.f32 %v2001, %v2031
  %v2092 = vmul.f32 %v2002, %v2032
  %v2093 = vmul.f32 %v2003, %v2033
  %v2094 = vmul.f32 %v2004, %v2034
  %v2095 = vmul.f32 %v2005, %v2035
  %v2096 = vmul.f32 %v2090, %v1635
  %v2097 = vmul.f32 %v2091, %v1636
  %v2098 = vmul.f32 %v2092, %v1637
  %v2099 = vmul.f32 %v2093, %v1638
  %v2100 = vmul.f32 %v2094, %v1639
  %v2101 = vmul.f32 %v2095, %v1640
  %v2102 = vadd.f32 %v2096, %v1642
  %v2103 = vadd.f32 %v2097, %v1643
  %v2104 = vadd.f32 %v2098, %v1644
  %v2105 = vadd.f32 %v2099, %v1645
  %v2106 = vadd.f32 %v2100, %v1646
  %v2107 = vadd.f32 %v2101, %v1647
  %v2108 = vsub.f32 0.0, %v2102
  %v2109 = vsub.f32 0.0, %v2103
  %v2110 = vsub.f32 0.0, %v2104
  %v2111 = vsub.f32 0.0, %v2105
  %v2112 = vsub.f32 0.0, %v2106
  %v2113 = vsub.f32 0.0, %v2107
  %v2114 = vmul.f32 %v2108, 1.442695
  %v2115 = vpow.pop %v2114
  %v2116 = vmul.f32 %v2109, 1.442695
  %v2117 = vpow.pop %v2116
  %v2118 = vmul.f32 %v2110, 1.442695
  %v2119 = vpow.pop %v2118
  %v2120 = vmul.f32 %v2111, 1.442695
  %v2121 = vpow.pop %v2120
  %v2122 = vmul.f32 %v2112, 1.442695
  %v2123 = vpow.pop %v2122
  %v2124 = vmul.f32 %v2113, 1.442695
  %v2125 = vpow.pop %v2124
  %v2126 = vadd.f32 %v2115, 1.0
  %v2127 = vadd.f32 %v2117, 1.0
  %v2128 = vadd.f32 %v2119, 1.0
  %v2129 = vadd.f32 %v2121, 1.0
  %v2130 = vadd.f32 %v2123, 1.0
  %v2131 = vadd.f32 %v2125, 1.0
  %v2132 = vrcp.pop %v2126
  %v2133 = vmul.f32 1.0, %v2132
  %v2134 = vrcp.pop %v2127
  %v2135 = vmul.f32 1.0, %v2134
  %v2136 = vrcp.pop %v2128
  %v2137 = vmul.f32 1.0, %v2136
  %v2138 = vrcp.pop %v2129
  %v2139 = vmul.f32 1.0, %v2138
  %v2140 = vrcp.pop %v2130
  %v2141 = vmul.f32 1.0, %v2140
  %v2142 = vrcp.pop %v2131
  %v2143 = vmul.f32 1.0, %v2142
  %s2144 = scalar_lea.vmem %s2, 64
  %v2145 = vld [vmem:[%s2144] sm:$0xff]
  %v2146 = vld [vmem:[%s2144 + $0x8] sm:$0xff]
  %s2147 = scalar_lea.vmem %s1, 384
  %v2148 = vld [vmem:[%s2147] sm:$0xff]
  %v2149 = vld [vmem:[%s2147 + $0x8] sm:$0xff]
  %v2150 = vld [vmem:[%s2147 + $0x10] sm:$0xff]
  %v2151 = vld [vmem:[%s2147 + $0x18] sm:$0xff]
  %v2152 = vld [vmem:[%s2147 + $0x20] sm:$0xff]
  %v2153 = vld [vmem:[%s2147 + $0x28] sm:$0xff]
  %v2154 = vld [vmem:[%s2147 + $0x30] sm:$0xff]
  %v2155 = vld [vmem:[%s2147 + $0x38] sm:$0xff]
  %v2156 = vld [vmem:[%s2147 + $0x40] sm:$0xff]
  %v2157 = vld [vmem:[%s2147 + $0x48] sm:$0xff]
  %v2158 = vld [vmem:[%s2147 + $0x50] sm:$0xff]
  %v2159 = vld [vmem:[%s2147 + $0x58] sm:$0xff]
  %s2160 = scalar_lea.vmem %s3, 4
  %v2161 = vld [vmem:[%s2160] sm:$0x1]
  %s2162 = scalar_lea.vmem %s4, 192
  %v2163 = vld [vmem:[%s2162] sm:$0xff]
  %v2164 = vld [vmem:[%s2162 + $0x8] sm:$0xff]
  %v2165 = vld [vmem:[%s2162 + $0x10] sm:$0xff]
  %v2166 = vld [vmem:[%s2162 + $0x18] sm:$0xff]
  %v2167 = vld [vmem:[%s2162 + $0x20] sm:$0xff]
  %v2168 = vld [vmem:[%s2162 + $0x28] sm:$0xff]
  %s2169 = scalar_lea.vmem %s5, 192
  %v2170 = vld [vmem:[%s2169] sm:$0xff]
  %v2171 = vld [vmem:[%s2169 + $0x8] sm:$0xff]
  %v2172 = vld [vmem:[%s2169 + $0x10] sm:$0xff]
  %v2173 = vld [vmem:[%s2169 + $0x18] sm:$0xff]
  %v2174 = vld [vmem:[%s2169 + $0x20] sm:$0xff]
  %v2175 = vld [vmem:[%s2169 + $0x28] sm:$0xff]
  %v2177 = vsel %vm62, %v2079, 0
  %v2180 = vsel %vm62, %v2081, 0
  %v2183 = vsel %vm62, %v2083, 0
  %v2186 = vsel %vm62, %v2085, 0
  %v2189 = vsel %vm62, %v2087, 0
  %v2192 = vsel %vm62, %v2089, 0
  %v2195 = vsel %vm62, %v2133, 0
  %v2198 = vsel %vm62, %v2135, 0
  %v2201 = vsel %vm62, %v2137, 0
  %v2204 = vsel %vm62, %v2139, 0
  %v2207 = vsel %vm62, %v2141, 0
  %v2210 = vsel %vm62, %v2143, 0
  %2212 = vmatprep.subr.mxu0 0.0
  %2213 = vmatpush1.msra.mxu0 0.0
  %2214 = vmatprep.subr.mxu0 0.0
  %2215 = vmatpush1.msra.mxu0 0.0
  %2216 = vmatprep.subr.mxu0 0.0
  %2217 = vmatpush1.msra.mxu0 0.0
  %2218 = vmatprep.subr.mxu0 0.0
  %2219 = vmatpush1.msra.mxu0 0.0
  %2220 = vmatprep.subr.mxu0 0.0
  %2221 = vmatpush1.msra.mxu0 0.0
  %2222 = vmatprep.subr.mxu0 0.0
  %2223 = vmatpush1.msra.mxu0 0.0
  %2224 = vmatprep.subr.mxu0 0.0
  %2225 = vmatpush1.msra.mxu0 0.0
  %2226 = vmatprep.subr.mxu0 0.0
  %2227 = vmatpush1.msra.mxu0 0.0
  %2228 = vmatprep.subr.mxu0 0.0
  %2229 = vmatpush1.msra.mxu0 0.0
  %2230 = vmatprep.subr.mxu0 0.0
  %2231 = vmatpush1.msra.mxu0 0.0
  %2232 = vmatprep.subr.mxu0 0.0
  %2233 = vmatpush1.msra.mxu0 0.0
  %2234 = vmatprep.subr.mxu0 0.0
  %2235 = vmatpush1.msra.mxu0 0.0
  %2236 = vmatprep.subr.mxu0 0.0
  %2237 = vmatpush1.msra.mxu0 0.0
  %2238 = vmatprep.subr.mxu0 0.0
  %2239 = vmatpush1.msra.mxu0 0.0
  %2240 = vmatprep.subr.mxu0 0.0
  %2241 = vmatpush1.msra.mxu0 %v2146
  %2242 = vmatprep.subr.mxu0 0.0
  %2243 = vmatpush1.msra.mxu0 %v2145
  %2244 = vmatprep.subr.mxu0 0.0
  %2245 = vmatpush2.msra.mxu0 0.0
  %2246 = vmatprep.subr.mxu0 0.0
  %2247 = vmatpush2.msra.mxu0 0.0
  %2248 = vmatprep.subr.mxu0 0.0
  %2249 = vmatpush2.msra.mxu0 0.0
  %2250 = vmatprep.subr.mxu0 0.0
  %2251 = vmatpush2.msra.mxu0 0.0
  %2252 = vmatprep.subr.mxu0 0.0
  %2253 = vmatpush2.msra.mxu0 0.0
  %2254 = vmatprep.subr.mxu0 0.0
  %2255 = vmatpush2.msra.mxu0 0.0
  %2256 = vmatprep.subr.mxu0 0.0
  %2257 = vmatpush2.msra.mxu0 0.0
  %2258 = vmatprep.subr.mxu0 0.0
  %2259 = vmatpush2.msra.mxu0 0.0
  %2260 = vmatprep.subr.mxu0 0.0
  %2261 = vmatpush2.msra.mxu0 0.0
  %2262 = vmatprep.subr.mxu0 0.0
  %2263 = vmatpush2.msra.mxu0 0.0
  %2264 = vmatprep.subr.mxu0 0.0
  %2265 = vmatpush2.msra.mxu0 0.0
  %2266 = vmatprep.subr.mxu0 0.0
  %2267 = vmatpush2.msra.mxu0 0.0
  %2268 = vmatprep.subr.mxu0 0.0
  %2269 = vmatpush2.msra.mxu0 0.0
  %2270 = vmatprep.subr.mxu0 0.0
  %2271 = vmatpush2.msra.mxu0 0.0
  %2272 = vmatprep.subr.mxu0 0.0
  %2273 = vmatpush2.msra.mxu0 0.0
  %2274 = vmatprep.subr.mxu0 0.0
  %2275 = vmatpush2.msra.mxu0 0.0
  %2276 = vmatprep.mubr.f32.mxu0 0.0
  %2277 = vmatmul.mubr.f32.gmra.mxu0 %v2177
  %v2278 = vpop.f32.mrf.mxu0
  %v2279 = vadd.f32 0.0, %v2278
  %v2280 = vpop.f32.mrf.mxu0
  %2281 = vmatprep.mubr.f32.mxu0 0.0
  %2282 = vmatmul.mubr.f32.gmra.mxu0 %v2180
  %v2283 = vpop.f32.mrf.mxu0
  %v2284 = vadd.f32 0.0, %v2283
  %v2285 = vpop.f32.mrf.mxu0
  %2286 = vmatprep.mubr.f32.mxu0 0.0
  %2287 = vmatmul.mubr.f32.gmra.mxu0 %v2183
  %v2288 = vpop.f32.mrf.mxu0
  %v2289 = vadd.f32 0.0, %v2288
  %v2290 = vpop.f32.mrf.mxu0
  %2291 = vmatprep.mubr.f32.mxu0 0.0
  %2292 = vmatmul.mubr.f32.gmra.mxu0 %v2186
  %v2293 = vpop.f32.mrf.mxu0
  %v2294 = vadd.f32 0.0, %v2293
  %v2295 = vpop.f32.mrf.mxu0
  %2296 = vmatprep.mubr.f32.mxu0 0.0
  %2297 = vmatmul.mubr.f32.gmra.mxu0 %v2189
  %v2298 = vpop.f32.mrf.mxu0
  %v2299 = vadd.f32 0.0, %v2298
  %v2300 = vpop.f32.mrf.mxu0
  %2301 = vmatprep.mubr.f32.mxu0 0.0
  %2302 = vmatmul.mubr.f32.gmra.mxu0 %v2192
  %v2303 = vpop.f32.mrf.mxu0
  %v2304 = vadd.f32 0.0, %v2303
  %v2305 = vpop.f32.mrf.mxu0
  %2306 = vmatprep.mubr.f32.mxu0 0.0
  %2307 = vmatmul.mubr.f32.gmra.mxu0 %v2195
  %v2308 = vpop.f32.mrf.mxu0
  %v2309 = vadd.f32 0.0, %v2308
  %v2310 = vpop.f32.mrf.mxu0
  %2311 = vmatprep.mubr.f32.mxu0 0.0
  %2312 = vmatmul.mubr.f32.gmra.mxu0 %v2198
  %v2313 = vpop.f32.mrf.mxu0
  %v2314 = vadd.f32 0.0, %v2313
  %v2315 = vpop.f32.mrf.mxu0
  %2316 = vmatprep.mubr.f32.mxu0 0.0
  %2317 = vmatmul.mubr.f32.gmra.mxu0 %v2201
  %v2318 = vpop.f32.mrf.mxu0
  %v2319 = vadd.f32 0.0, %v2318
  %v2320 = vpop.f32.mrf.mxu0
  %2321 = vmatprep.mubr.f32.mxu0 0.0
  %2322 = vmatmul.mubr.f32.gmra.mxu0 %v2204
  %v2323 = vpop.f32.mrf.mxu0
  %v2324 = vadd.f32 0.0, %v2323
  %v2325 = vpop.f32.mrf.mxu0
  %2326 = vmatprep.mubr.f32.mxu0 0.0
  %2327 = vmatmul.mubr.f32.gmra.mxu0 %v2207
  %v2328 = vpop.f32.mrf.mxu0
  %v2329 = vadd.f32 0.0, %v2328
  %v2330 = vpop.f32.mrf.mxu0
  %2331 = vmatprep.mubr.f32.mxu0 0.0
  %2332 = vmatmul.mubr.f32.gmra.mxu0 %v2210
  %v2333 = vpop.f32.mrf.mxu0
  %v2334 = vadd.f32 0.0, %v2333
  %v2335 = vpop.f32.mrf.mxu0
  %2336 = vdwg.mxu0
  %v2338 = vlaneseq
  %v2339 = vshrl.u32 %v2338, 7
  %v2340 = vsub.s32 0, %v2339
  %v2341 = vrot.slane %v2161, %v2340
  %v2344 = vsel %vm230, %v2148, 0
  %v2347 = vsel %vm230, %v2149, 0
  %v2350 = vsel %vm230, %v2150, 0
  %v2353 = vsel %vm230, %v2151, 0
  %v2356 = vsel %vm230, %v2152, 0
  %v2359 = vsel %vm230, %v2153, 0
  %v2362 = vsel %vm230, %v2154, 0
  %v2365 = vsel %vm230, %v2155, 0
  %v2368 = vsel %vm230, %v2156, 0
  %v2371 = vsel %vm230, %v2157, 0
  %v2374 = vsel %vm230, %v2158, 0
  %v2377 = vsel %vm230, %v2159, 0
  %2379 = vmatprep.subr.mxu0 0.0
  %2380 = vmatpush1.msra.mxu0 0.0
  %2381 = vmatprep.subr.mxu0 0.0
  %2382 = vmatpush1.msra.mxu0 0.0
  %2383 = vmatprep.subr.mxu0 0.0
  %2384 = vmatpush1.msra.mxu0 0.0
  %2385 = vmatprep.subr.mxu0 0.0
  %2386 = vmatpush1.msra.mxu0 0.0
  %2387 = vmatprep.subr.mxu0 0.0
  %2388 = vmatpush1.msra.mxu0 %v2334
  %2389 = vmatprep.subr.mxu0 0.0
  %2390 = vmatpush1.msra.mxu0 %v2329
  %2391 = vmatprep.subr.mxu0 0.0
  %2392 = vmatpush1.msra.mxu0 %v2324
  %2393 = vmatprep.subr.mxu0 0.0
  %2394 = vmatpush1.msra.mxu0 %v2319
  %2395 = vmatprep.subr.mxu0 0.0
  %2396 = vmatpush1.msra.mxu0 %v2314
  %2397 = vmatprep.subr.mxu0 0.0
  %2398 = vmatpush1.msra.mxu0 %v2309
  %2399 = vmatprep.subr.mxu0 0.0
  %2400 = vmatpush1.msra.mxu0 %v2304
  %2401 = vmatprep.subr.mxu0 0.0
  %2402 = vmatpush1.msra.mxu0 %v2299
  %2403 = vmatprep.subr.mxu0 0.0
  %2404 = vmatpush1.msra.mxu0 %v2294
  %2405 = vmatprep.subr.mxu0 0.0
  %2406 = vmatpush1.msra.mxu0 %v2289
  %2407 = vmatprep.subr.mxu0 0.0
  %2408 = vmatpush1.msra.mxu0 %v2284
  %2409 = vmatprep.subr.mxu0 0.0
  %2410 = vmatpush1.msra.mxu0 %v2279
  %2411 = vmatprep.subr.mxu0 0.0
  %2412 = vmatpush2.msra.mxu0 0.0
  %2413 = vmatprep.subr.mxu0 0.0
  %2414 = vmatpush2.msra.mxu0 0.0
  %2415 = vmatprep.subr.mxu0 0.0
  %2416 = vmatpush2.msra.mxu0 0.0
  %2417 = vmatprep.subr.mxu0 0.0
  %2418 = vmatpush2.msra.mxu0 0.0
  %2419 = vmatprep.subr.mxu0 0.0
  %2420 = vmatpush2.msra.mxu0 0.0
  %2421 = vmatprep.subr.mxu0 0.0
  %2422 = vmatpush2.msra.mxu0 0.0
  %2423 = vmatprep.subr.mxu0 0.0
  %2424 = vmatpush2.msra.mxu0 0.0
  %2425 = vmatprep.subr.mxu0 0.0
  %2426 = vmatpush2.msra.mxu0 0.0
  %2427 = vmatprep.subr.mxu0 0.0
  %2428 = vmatpush2.msra.mxu0 0.0
  %2429 = vmatprep.subr.mxu0 0.0
  %2430 = vmatpush2.msra.mxu0 0.0
  %2431 = vmatprep.subr.mxu0 0.0
  %2432 = vmatpush2.msra.mxu0 0.0
  %2433 = vmatprep.subr.mxu0 0.0
  %2434 = vmatpush2.msra.mxu0 0.0
  %2435 = vmatprep.subr.mxu0 0.0
  %2436 = vmatpush2.msra.mxu0 0.0
  %2437 = vmatprep.subr.mxu0 0.0
  %2438 = vmatpush2.msra.mxu0 0.0
  %2439 = vmatprep.subr.mxu0 0.0
  %2440 = vmatpush2.msra.mxu0 0.0
  %2441 = vmatprep.subr.mxu0 0.0
  %2442 = vmatpush2.msra.mxu0 0.0
  %2443 = vmatprep.mubr.f32.mxu0 0.0
  %2444 = vmatmul.mubr.f32.gmra.mxu0 %v2344
  %v2445 = vpop.f32.mrf.mxu0
  %v2446 = vadd.f32 %v2341, %v2445
  %v2447 = vpop.f32.mrf.mxu0
  %2448 = vmatprep.mubr.f32.mxu0 0.0
  %2449 = vmatmul.mubr.f32.gmra.mxu0 %v2347
  %v2450 = vpop.f32.mrf.mxu0
  %v2451 = vadd.f32 %v2341, %v2450
  %v2452 = vpop.f32.mrf.mxu0
  %2453 = vmatprep.mubr.f32.mxu0 0.0
  %2454 = vmatmul.mubr.f32.gmra.mxu0 %v2350
  %v2455 = vpop.f32.mrf.mxu0
  %v2456 = vadd.f32 %v2341, %v2455
  %v2457 = vpop.f32.mrf.mxu0
  %2458 = vmatprep.mubr.f32.mxu0 0.0
  %2459 = vmatmul.mubr.f32.gmra.mxu0 %v2353
  %v2460 = vpop.f32.mrf.mxu0
  %v2461 = vadd.f32 %v2341, %v2460
  %v2462 = vpop.f32.mrf.mxu0
  %2463 = vmatprep.mubr.f32.mxu0 0.0
  %2464 = vmatmul.mubr.f32.gmra.mxu0 %v2356
  %v2465 = vpop.f32.mrf.mxu0
  %v2466 = vadd.f32 %v2341, %v2465
  %v2467 = vpop.f32.mrf.mxu0
  %2468 = vmatprep.mubr.f32.mxu0 0.0
  %2469 = vmatmul.mubr.f32.gmra.mxu0 %v2359
  %v2470 = vpop.f32.mrf.mxu0
  %v2471 = vadd.f32 %v2341, %v2470
  %v2472 = vpop.f32.mrf.mxu0
  %2473 = vmatprep.mubr.f32.mxu0 0.0
  %2474 = vmatmul.mubr.f32.gmra.mxu0 %v2362
  %v2475 = vpop.f32.mrf.mxu0
  %v2476 = vadd.f32 %v2341, %v2475
  %v2477 = vpop.f32.mrf.mxu0
  %2478 = vmatprep.mubr.f32.mxu0 0.0
  %2479 = vmatmul.mubr.f32.gmra.mxu0 %v2365
  %v2480 = vpop.f32.mrf.mxu0
  %v2481 = vadd.f32 %v2341, %v2480
  %v2482 = vpop.f32.mrf.mxu0
  %2483 = vmatprep.mubr.f32.mxu0 0.0
  %2484 = vmatmul.mubr.f32.gmra.mxu0 %v2368
  %v2485 = vpop.f32.mrf.mxu0
  %v2486 = vadd.f32 %v2341, %v2485
  %v2487 = vpop.f32.mrf.mxu0
  %2488 = vmatprep.mubr.f32.mxu0 0.0
  %2489 = vmatmul.mubr.f32.gmra.mxu0 %v2371
  %v2490 = vpop.f32.mrf.mxu0
  %v2491 = vadd.f32 %v2341, %v2490
  %v2492 = vpop.f32.mrf.mxu0
  %2493 = vmatprep.mubr.f32.mxu0 0.0
  %2494 = vmatmul.mubr.f32.gmra.mxu0 %v2374
  %v2495 = vpop.f32.mrf.mxu0
  %v2496 = vadd.f32 %v2341, %v2495
  %v2497 = vpop.f32.mrf.mxu0
  %2498 = vmatprep.mubr.f32.mxu0 0.0
  %2499 = vmatmul.mubr.f32.gmra.mxu0 %v2377
  %v2500 = vpop.f32.mrf.mxu0
  %v2501 = vadd.f32 %v2341, %v2500
  %v2502 = vpop.f32.mrf.mxu0
  %2503 = vdwg.mxu0
  %v2504 = vadd.f32 %v2446, %v2476
  %v2505 = vadd.f32 %v2451, %v2481
  %v2506 = vadd.f32 %v2456, %v2486
  %v2507 = vadd.f32 %v2461, %v2491
  %v2508 = vadd.f32 %v2466, %v2496
  %v2509 = vadd.f32 %v2471, %v2501
  %v2510 = vmul.f32 %v2504, 0.5
  %v2511 = vmul.f32 %v2505, 0.5
  %v2512 = vmul.f32 %v2506, 0.5
  %v2513 = vmul.f32 %v2507, 0.5
  %v2514 = vmul.f32 %v2508, 0.5
  %v2515 = vmul.f32 %v2509, 0.5
  %v2516 = vsub.f32 %v2446, %v2510
  %v2517 = vsub.f32 %v2451, %v2511
  %v2518 = vsub.f32 %v2456, %v2512
  %v2519 = vsub.f32 %v2461, %v2513
  %v2520 = vsub.f32 %v2466, %v2514
  %v2521 = vsub.f32 %v2471, %v2515
  %v2522 = vmul.f32 %v2516, %v2516
  %v2523 = vmul.f32 %v2517, %v2517
  %v2524 = vmul.f32 %v2518, %v2518
  %v2525 = vmul.f32 %v2519, %v2519
  %v2526 = vmul.f32 %v2520, %v2520
  %v2527 = vmul.f32 %v2521, %v2521
  %v2528 = vsub.f32 %v2476, %v2510
  %v2529 = vsub.f32 %v2481, %v2511
  %v2530 = vsub.f32 %v2486, %v2512
  %v2531 = vsub.f32 %v2491, %v2513
  %v2532 = vsub.f32 %v2496, %v2514
  %v2533 = vsub.f32 %v2501, %v2515
  %v2534 = vmul.f32 %v2528, %v2528
  %v2535 = vmul.f32 %v2529, %v2529
  %v2536 = vmul.f32 %v2530, %v2530
  %v2537 = vmul.f32 %v2531, %v2531
  %v2538 = vmul.f32 %v2532, %v2532
  %v2539 = vmul.f32 %v2533, %v2533
  %v2540 = vadd.f32 %v2522, %v2534
  %v2541 = vadd.f32 %v2523, %v2535
  %v2542 = vadd.f32 %v2524, %v2536
  %v2543 = vadd.f32 %v2525, %v2537
  %v2544 = vadd.f32 %v2526, %v2538
  %v2545 = vadd.f32 %v2527, %v2539
  %v2546 = vmul.f32 %v2540, 0.5
  %v2547 = vmul.f32 %v2541, 0.5
  %v2548 = vmul.f32 %v2542, 0.5
  %v2549 = vmul.f32 %v2543, 0.5
  %v2550 = vmul.f32 %v2544, 0.5
  %v2551 = vmul.f32 %v2545, 0.5
  %v2552 = vadd.f32 %v2546, 1e-05
  %v2553 = vadd.f32 %v2547, 1e-05
  %v2554 = vadd.f32 %v2548, 1e-05
  %v2555 = vadd.f32 %v2549, 1e-05
  %v2556 = vadd.f32 %v2550, 1e-05
  %v2557 = vadd.f32 %v2551, 1e-05
  %v2558 = vrsqrt.pop %v2552
  %v2559 = vrsqrt.pop %v2553
  %v2560 = vrsqrt.pop %v2554
  %v2561 = vrsqrt.pop %v2555
  %v2562 = vrsqrt.pop %v2556
  %v2563 = vrsqrt.pop %v2557
  %v2564 = vmul.f32 %v2516, %v2558
  %v2565 = vmul.f32 %v2517, %v2559
  %v2566 = vmul.f32 %v2518, %v2560
  %v2567 = vmul.f32 %v2519, %v2561
  %v2568 = vmul.f32 %v2520, %v2562
  %v2569 = vmul.f32 %v2521, %v2563
  %v2570 = vmul.f32 %v2564, %v2163
  %v2571 = vmul.f32 %v2565, %v2164
  %v2572 = vmul.f32 %v2566, %v2165
  %v2573 = vmul.f32 %v2567, %v2166
  %v2574 = vmul.f32 %v2568, %v2167
  %v2575 = vmul.f32 %v2569, %v2168
  %v2576 = vadd.f32 %v2570, %v2170
  %v2577 = vadd.f32 %v2571, %v2171
  %v2578 = vadd.f32 %v2572, %v2172
  %v2579 = vadd.f32 %v2573, %v2173
  %v2580 = vadd.f32 %v2574, %v2174
  %v2581 = vadd.f32 %v2575, %v2175
  %v2582 = vsub.f32 0.0, %v2576
  %v2583 = vsub.f32 0.0, %v2577
  %v2584 = vsub.f32 0.0, %v2578
  %v2585 = vsub.f32 0.0, %v2579
  %v2586 = vsub.f32 0.0, %v2580
  %v2587 = vsub.f32 0.0, %v2581
  %v2588 = vmul.f32 %v2582, 1.442695
  %v2589 = vpow.pop %v2588
  %v2590 = vmul.f32 %v2583, 1.442695
  %v2591 = vpow.pop %v2590
  %v2592 = vmul.f32 %v2584, 1.442695
  %v2593 = vpow.pop %v2592
  %v2594 = vmul.f32 %v2585, 1.442695
  %v2595 = vpow.pop %v2594
  %v2596 = vmul.f32 %v2586, 1.442695
  %v2597 = vpow.pop %v2596
  %v2598 = vmul.f32 %v2587, 1.442695
  %v2599 = vpow.pop %v2598
  %v2600 = vadd.f32 %v2589, 1.0
  %v2601 = vadd.f32 %v2591, 1.0
  %v2602 = vadd.f32 %v2593, 1.0
  %v2603 = vadd.f32 %v2595, 1.0
  %v2604 = vadd.f32 %v2597, 1.0
  %v2605 = vadd.f32 %v2599, 1.0
  %v2606 = vrcp.pop %v2600
  %v2607 = vmul.f32 1.0, %v2606
  %v2608 = vrcp.pop %v2601
  %v2609 = vmul.f32 1.0, %v2608
  %v2610 = vrcp.pop %v2602
  %v2611 = vmul.f32 1.0, %v2610
  %v2612 = vrcp.pop %v2603
  %v2613 = vmul.f32 1.0, %v2612
  %v2614 = vrcp.pop %v2604
  %v2615 = vmul.f32 1.0, %v2614
  %v2616 = vrcp.pop %v2605
  %v2617 = vmul.f32 1.0, %v2616
  %v2618 = vmul.f32 %v2528, %v2558
  %v2619 = vmul.f32 %v2529, %v2559
  %v2620 = vmul.f32 %v2530, %v2560
  %v2621 = vmul.f32 %v2531, %v2561
  %v2622 = vmul.f32 %v2532, %v2562
  %v2623 = vmul.f32 %v2533, %v2563
  %v2624 = vmul.f32 %v2618, %v2163
  %v2625 = vmul.f32 %v2619, %v2164
  %v2626 = vmul.f32 %v2620, %v2165
  %v2627 = vmul.f32 %v2621, %v2166
  %v2628 = vmul.f32 %v2622, %v2167
  %v2629 = vmul.f32 %v2623, %v2168
  %v2630 = vadd.f32 %v2624, %v2170
  %v2631 = vadd.f32 %v2625, %v2171
  %v2632 = vadd.f32 %v2626, %v2172
  %v2633 = vadd.f32 %v2627, %v2173
  %v2634 = vadd.f32 %v2628, %v2174
  %v2635 = vadd.f32 %v2629, %v2175
  %v2636 = vsub.f32 0.0, %v2630
  %v2637 = vsub.f32 0.0, %v2631
  %v2638 = vsub.f32 0.0, %v2632
  %v2639 = vsub.f32 0.0, %v2633
  %v2640 = vsub.f32 0.0, %v2634
  %v2641 = vsub.f32 0.0, %v2635
  %v2642 = vmul.f32 %v2636, 1.442695
  %v2643 = vpow.pop %v2642
  %v2644 = vmul.f32 %v2637, 1.442695
  %v2645 = vpow.pop %v2644
  %v2646 = vmul.f32 %v2638, 1.442695
  %v2647 = vpow.pop %v2646
  %v2648 = vmul.f32 %v2639, 1.442695
  %v2649 = vpow.pop %v2648
  %v2650 = vmul.f32 %v2640, 1.442695
  %v2651 = vpow.pop %v2650
  %v2652 = vmul.f32 %v2641, 1.442695
  %v2653 = vpow.pop %v2652
  %v2654 = vadd.f32 %v2643, 1.0
  %v2655 = vadd.f32 %v2645, 1.0
  %v2656 = vadd.f32 %v2647, 1.0
  %v2657 = vadd.f32 %v2649, 1.0
  %v2658 = vadd.f32 %v2651, 1.0
  %v2659 = vadd.f32 %v2653, 1.0
  %v2660 = vrcp.pop %v2654
  %v2661 = vmul.f32 1.0, %v2660
  %v2662 = vrcp.pop %v2655
  %v2663 = vmul.f32 1.0, %v2662
  %v2664 = vrcp.pop %v2656
  %v2665 = vmul.f32 1.0, %v2664
  %v2666 = vrcp.pop %v2657
  %v2667 = vmul.f32 1.0, %v2666
  %v2668 = vrcp.pop %v2658
  %v2669 = vmul.f32 1.0, %v2668
  %v2670 = vrcp.pop %v2659
  %v2671 = vmul.f32 1.0, %v2670
  %s2672 = scalar_lea.vmem %s2, 80
  %v2673 = vld [vmem:[%s2672] sm:$0xff]
  %v2674 = vld [vmem:[%s2672 + $0x8] sm:$0xff]
  %s2675 = scalar_lea.vmem %s1, 480
  %v2676 = vld [vmem:[%s2675] sm:$0xff]
  %v2677 = vld [vmem:[%s2675 + $0x8] sm:$0xff]
  %v2678 = vld [vmem:[%s2675 + $0x10] sm:$0xff]
  %v2679 = vld [vmem:[%s2675 + $0x18] sm:$0xff]
  %v2680 = vld [vmem:[%s2675 + $0x20] sm:$0xff]
  %v2681 = vld [vmem:[%s2675 + $0x28] sm:$0xff]
  %v2682 = vld [vmem:[%s2675 + $0x30] sm:$0xff]
  %v2683 = vld [vmem:[%s2675 + $0x38] sm:$0xff]
  %v2684 = vld [vmem:[%s2675 + $0x40] sm:$0xff]
  %v2685 = vld [vmem:[%s2675 + $0x48] sm:$0xff]
  %v2686 = vld [vmem:[%s2675 + $0x50] sm:$0xff]
  %v2687 = vld [vmem:[%s2675 + $0x58] sm:$0xff]
  %s2688 = scalar_lea.vmem %s3, 5
  %v2689 = vld [vmem:[%s2688] sm:$0x1]
  %s2690 = scalar_lea.vmem %s4, 240
  %v2691 = vld [vmem:[%s2690] sm:$0xff]
  %v2692 = vld [vmem:[%s2690 + $0x8] sm:$0xff]
  %v2693 = vld [vmem:[%s2690 + $0x10] sm:$0xff]
  %v2694 = vld [vmem:[%s2690 + $0x18] sm:$0xff]
  %v2695 = vld [vmem:[%s2690 + $0x20] sm:$0xff]
  %v2696 = vld [vmem:[%s2690 + $0x28] sm:$0xff]
  %s2697 = scalar_lea.vmem %s5, 240
  %v2698 = vld [vmem:[%s2697] sm:$0xff]
  %v2699 = vld [vmem:[%s2697 + $0x8] sm:$0xff]
  %v2700 = vld [vmem:[%s2697 + $0x10] sm:$0xff]
  %v2701 = vld [vmem:[%s2697 + $0x18] sm:$0xff]
  %v2702 = vld [vmem:[%s2697 + $0x20] sm:$0xff]
  %v2703 = vld [vmem:[%s2697 + $0x28] sm:$0xff]
  %v2705 = vsel %vm62, %v2607, 0
  %v2708 = vsel %vm62, %v2609, 0
  %v2711 = vsel %vm62, %v2611, 0
  %v2714 = vsel %vm62, %v2613, 0
  %v2717 = vsel %vm62, %v2615, 0
  %v2720 = vsel %vm62, %v2617, 0
  %v2723 = vsel %vm62, %v2661, 0
  %v2726 = vsel %vm62, %v2663, 0
  %v2729 = vsel %vm62, %v2665, 0
  %v2732 = vsel %vm62, %v2667, 0
  %v2735 = vsel %vm62, %v2669, 0
  %v2738 = vsel %vm62, %v2671, 0
  %2740 = vmatprep.subr.mxu0 0.0
  %2741 = vmatpush1.msra.mxu0 0.0
  %2742 = vmatprep.subr.mxu0 0.0
  %2743 = vmatpush1.msra.mxu0 0.0
  %2744 = vmatprep.subr.mxu0 0.0
  %2745 = vmatpush1.msra.mxu0 0.0
  %2746 = vmatprep.subr.mxu0 0.0
  %2747 = vmatpush1.msra.mxu0 0.0
  %2748 = vmatprep.subr.mxu0 0.0
  %2749 = vmatpush1.msra.mxu0 0.0
  %2750 = vmatprep.subr.mxu0 0.0
  %2751 = vmatpush1.msra.mxu0 0.0
  %2752 = vmatprep.subr.mxu0 0.0
  %2753 = vmatpush1.msra.mxu0 0.0
  %2754 = vmatprep.subr.mxu0 0.0
  %2755 = vmatpush1.msra.mxu0 0.0
  %2756 = vmatprep.subr.mxu0 0.0
  %2757 = vmatpush1.msra.mxu0 0.0
  %2758 = vmatprep.subr.mxu0 0.0
  %2759 = vmatpush1.msra.mxu0 0.0
  %2760 = vmatprep.subr.mxu0 0.0
  %2761 = vmatpush1.msra.mxu0 0.0
  %2762 = vmatprep.subr.mxu0 0.0
  %2763 = vmatpush1.msra.mxu0 0.0
  %2764 = vmatprep.subr.mxu0 0.0
  %2765 = vmatpush1.msra.mxu0 0.0
  %2766 = vmatprep.subr.mxu0 0.0
  %2767 = vmatpush1.msra.mxu0 0.0
  %2768 = vmatprep.subr.mxu0 0.0
  %2769 = vmatpush1.msra.mxu0 %v2674
  %2770 = vmatprep.subr.mxu0 0.0
  %2771 = vmatpush1.msra.mxu0 %v2673
  %2772 = vmatprep.subr.mxu0 0.0
  %2773 = vmatpush2.msra.mxu0 0.0
  %2774 = vmatprep.subr.mxu0 0.0
  %2775 = vmatpush2.msra.mxu0 0.0
  %2776 = vmatprep.subr.mxu0 0.0
  %2777 = vmatpush2.msra.mxu0 0.0
  %2778 = vmatprep.subr.mxu0 0.0
  %2779 = vmatpush2.msra.mxu0 0.0
  %2780 = vmatprep.subr.mxu0 0.0
  %2781 = vmatpush2.msra.mxu0 0.0
  %2782 = vmatprep.subr.mxu0 0.0
  %2783 = vmatpush2.msra.mxu0 0.0
  %2784 = vmatprep.subr.mxu0 0.0
  %2785 = vmatpush2.msra.mxu0 0.0
  %2786 = vmatprep.subr.mxu0 0.0
  %2787 = vmatpush2.msra.mxu0 0.0
  %2788 = vmatprep.subr.mxu0 0.0
  %2789 = vmatpush2.msra.mxu0 0.0
  %2790 = vmatprep.subr.mxu0 0.0
  %2791 = vmatpush2.msra.mxu0 0.0
  %2792 = vmatprep.subr.mxu0 0.0
  %2793 = vmatpush2.msra.mxu0 0.0
  %2794 = vmatprep.subr.mxu0 0.0
  %2795 = vmatpush2.msra.mxu0 0.0
  %2796 = vmatprep.subr.mxu0 0.0
  %2797 = vmatpush2.msra.mxu0 0.0
  %2798 = vmatprep.subr.mxu0 0.0
  %2799 = vmatpush2.msra.mxu0 0.0
  %2800 = vmatprep.subr.mxu0 0.0
  %2801 = vmatpush2.msra.mxu0 0.0
  %2802 = vmatprep.subr.mxu0 0.0
  %2803 = vmatpush2.msra.mxu0 0.0
  %2804 = vmatprep.mubr.f32.mxu0 0.0
  %2805 = vmatmul.mubr.f32.gmra.mxu0 %v2705
  %v2806 = vpop.f32.mrf.mxu0
  %v2807 = vadd.f32 0.0, %v2806
  %v2808 = vpop.f32.mrf.mxu0
  %2809 = vmatprep.mubr.f32.mxu0 0.0
  %2810 = vmatmul.mubr.f32.gmra.mxu0 %v2708
  %v2811 = vpop.f32.mrf.mxu0
  %v2812 = vadd.f32 0.0, %v2811
  %v2813 = vpop.f32.mrf.mxu0
  %2814 = vmatprep.mubr.f32.mxu0 0.0
  %2815 = vmatmul.mubr.f32.gmra.mxu0 %v2711
  %v2816 = vpop.f32.mrf.mxu0
  %v2817 = vadd.f32 0.0, %v2816
  %v2818 = vpop.f32.mrf.mxu0
  %2819 = vmatprep.mubr.f32.mxu0 0.0
  %2820 = vmatmul.mubr.f32.gmra.mxu0 %v2714
  %v2821 = vpop.f32.mrf.mxu0
  %v2822 = vadd.f32 0.0, %v2821
  %v2823 = vpop.f32.mrf.mxu0
  %2824 = vmatprep.mubr.f32.mxu0 0.0
  %2825 = vmatmul.mubr.f32.gmra.mxu0 %v2717
  %v2826 = vpop.f32.mrf.mxu0
  %v2827 = vadd.f32 0.0, %v2826
  %v2828 = vpop.f32.mrf.mxu0
  %2829 = vmatprep.mubr.f32.mxu0 0.0
  %2830 = vmatmul.mubr.f32.gmra.mxu0 %v2720
  %v2831 = vpop.f32.mrf.mxu0
  %v2832 = vadd.f32 0.0, %v2831
  %v2833 = vpop.f32.mrf.mxu0
  %2834 = vmatprep.mubr.f32.mxu0 0.0
  %2835 = vmatmul.mubr.f32.gmra.mxu0 %v2723
  %v2836 = vpop.f32.mrf.mxu0
  %v2837 = vadd.f32 0.0, %v2836
  %v2838 = vpop.f32.mrf.mxu0
  %2839 = vmatprep.mubr.f32.mxu0 0.0
  %2840 = vmatmul.mubr.f32.gmra.mxu0 %v2726
  %v2841 = vpop.f32.mrf.mxu0
  %v2842 = vadd.f32 0.0, %v2841
  %v2843 = vpop.f32.mrf.mxu0
  %2844 = vmatprep.mubr.f32.mxu0 0.0
  %2845 = vmatmul.mubr.f32.gmra.mxu0 %v2729
  %v2846 = vpop.f32.mrf.mxu0
  %v2847 = vadd.f32 0.0, %v2846
  %v2848 = vpop.f32.mrf.mxu0
  %2849 = vmatprep.mubr.f32.mxu0 0.0
  %2850 = vmatmul.mubr.f32.gmra.mxu0 %v2732
  %v2851 = vpop.f32.mrf.mxu0
  %v2852 = vadd.f32 0.0, %v2851
  %v2853 = vpop.f32.mrf.mxu0
  %2854 = vmatprep.mubr.f32.mxu0 0.0
  %2855 = vmatmul.mubr.f32.gmra.mxu0 %v2735
  %v2856 = vpop.f32.mrf.mxu0
  %v2857 = vadd.f32 0.0, %v2856
  %v2858 = vpop.f32.mrf.mxu0
  %2859 = vmatprep.mubr.f32.mxu0 0.0
  %2860 = vmatmul.mubr.f32.gmra.mxu0 %v2738
  %v2861 = vpop.f32.mrf.mxu0
  %v2862 = vadd.f32 0.0, %v2861
  %v2863 = vpop.f32.mrf.mxu0
  %2864 = vdwg.mxu0
  %v2866 = vlaneseq
  %v2867 = vshrl.u32 %v2866, 7
  %v2868 = vsub.s32 0, %v2867
  %v2869 = vrot.slane %v2689, %v2868
  %v2872 = vsel %vm230, %v2676, 0
  %v2875 = vsel %vm230, %v2677, 0
  %v2878 = vsel %vm230, %v2678, 0
  %v2881 = vsel %vm230, %v2679, 0
  %v2884 = vsel %vm230, %v2680, 0
  %v2887 = vsel %vm230, %v2681, 0
  %v2890 = vsel %vm230, %v2682, 0
  %v2893 = vsel %vm230, %v2683, 0
  %v2896 = vsel %vm230, %v2684, 0
  %v2899 = vsel %vm230, %v2685, 0
  %v2902 = vsel %vm230, %v2686, 0
  %v2905 = vsel %vm230, %v2687, 0
  %2907 = vmatprep.subr.mxu0 0.0
  %2908 = vmatpush1.msra.mxu0 0.0
  %2909 = vmatprep.subr.mxu0 0.0
  %2910 = vmatpush1.msra.mxu0 0.0
  %2911 = vmatprep.subr.mxu0 0.0
  %2912 = vmatpush1.msra.mxu0 0.0
  %2913 = vmatprep.subr.mxu0 0.0
  %2914 = vmatpush1.msra.mxu0 0.0
  %2915 = vmatprep.subr.mxu0 0.0
  %2916 = vmatpush1.msra.mxu0 %v2862
  %2917 = vmatprep.subr.mxu0 0.0
  %2918 = vmatpush1.msra.mxu0 %v2857
  %2919 = vmatprep.subr.mxu0 0.0
  %2920 = vmatpush1.msra.mxu0 %v2852
  %2921 = vmatprep.subr.mxu0 0.0
  %2922 = vmatpush1.msra.mxu0 %v2847
  %2923 = vmatprep.subr.mxu0 0.0
  %2924 = vmatpush1.msra.mxu0 %v2842
  %2925 = vmatprep.subr.mxu0 0.0
  %2926 = vmatpush1.msra.mxu0 %v2837
  %2927 = vmatprep.subr.mxu0 0.0
  %2928 = vmatpush1.msra.mxu0 %v2832
  %2929 = vmatprep.subr.mxu0 0.0
  %2930 = vmatpush1.msra.mxu0 %v2827
  %2931 = vmatprep.subr.mxu0 0.0
  %2932 = vmatpush1.msra.mxu0 %v2822
  %2933 = vmatprep.subr.mxu0 0.0
  %2934 = vmatpush1.msra.mxu0 %v2817
  %2935 = vmatprep.subr.mxu0 0.0
  %2936 = vmatpush1.msra.mxu0 %v2812
  %2937 = vmatprep.subr.mxu0 0.0
  %2938 = vmatpush1.msra.mxu0 %v2807
  %2939 = vmatprep.subr.mxu0 0.0
  %2940 = vmatpush2.msra.mxu0 0.0
  %2941 = vmatprep.subr.mxu0 0.0
  %2942 = vmatpush2.msra.mxu0 0.0
  %2943 = vmatprep.subr.mxu0 0.0
  %2944 = vmatpush2.msra.mxu0 0.0
  %2945 = vmatprep.subr.mxu0 0.0
  %2946 = vmatpush2.msra.mxu0 0.0
  %2947 = vmatprep.subr.mxu0 0.0
  %2948 = vmatpush2.msra.mxu0 0.0
  %2949 = vmatprep.subr.mxu0 0.0
  %2950 = vmatpush2.msra.mxu0 0.0
  %2951 = vmatprep.subr.mxu0 0.0
  %2952 = vmatpush2.msra.mxu0 0.0
  %2953 = vmatprep.subr.mxu0 0.0
  %2954 = vmatpush2.msra.mxu0 0.0
  %2955 = vmatprep.subr.mxu0 0.0
  %2956 = vmatpush2.msra.mxu0 0.0
  %2957 = vmatprep.subr.mxu0 0.0
  %2958 = vmatpush2.msra.mxu0 0.0
  %2959 = vmatprep.subr.mxu0 0.0
  %2960 = vmatpush2.msra.mxu0 0.0
  %2961 = vmatprep.subr.mxu0 0.0
  %2962 = vmatpush2.msra.mxu0 0.0
  %2963 = vmatprep.subr.mxu0 0.0
  %2964 = vmatpush2.msra.mxu0 0.0
  %2965 = vmatprep.subr.mxu0 0.0
  %2966 = vmatpush2.msra.mxu0 0.0
  %2967 = vmatprep.subr.mxu0 0.0
  %2968 = vmatpush2.msra.mxu0 0.0
  %2969 = vmatprep.subr.mxu0 0.0
  %2970 = vmatpush2.msra.mxu0 0.0
  %2971 = vmatprep.mubr.f32.mxu0 0.0
  %2972 = vmatmul.mubr.f32.gmra.mxu0 %v2872
  %v2973 = vpop.f32.mrf.mxu0
  %v2974 = vadd.f32 %v2869, %v2973
  %v2975 = vpop.f32.mrf.mxu0
  %2976 = vmatprep.mubr.f32.mxu0 0.0
  %2977 = vmatmul.mubr.f32.gmra.mxu0 %v2875
  %v2978 = vpop.f32.mrf.mxu0
  %v2979 = vadd.f32 %v2869, %v2978
  %v2980 = vpop.f32.mrf.mxu0
  %2981 = vmatprep.mubr.f32.mxu0 0.0
  %2982 = vmatmul.mubr.f32.gmra.mxu0 %v2878
  %v2983 = vpop.f32.mrf.mxu0
  %v2984 = vadd.f32 %v2869, %v2983
  %v2985 = vpop.f32.mrf.mxu0
  %2986 = vmatprep.mubr.f32.mxu0 0.0
  %2987 = vmatmul.mubr.f32.gmra.mxu0 %v2881
  %v2988 = vpop.f32.mrf.mxu0
  %v2989 = vadd.f32 %v2869, %v2988
  %v2990 = vpop.f32.mrf.mxu0
  %2991 = vmatprep.mubr.f32.mxu0 0.0
  %2992 = vmatmul.mubr.f32.gmra.mxu0 %v2884
  %v2993 = vpop.f32.mrf.mxu0
  %v2994 = vadd.f32 %v2869, %v2993
  %v2995 = vpop.f32.mrf.mxu0
  %2996 = vmatprep.mubr.f32.mxu0 0.0
  %2997 = vmatmul.mubr.f32.gmra.mxu0 %v2887
  %v2998 = vpop.f32.mrf.mxu0
  %v2999 = vadd.f32 %v2869, %v2998
  %v3000 = vpop.f32.mrf.mxu0
  %3001 = vmatprep.mubr.f32.mxu0 0.0
  %3002 = vmatmul.mubr.f32.gmra.mxu0 %v2890
  %v3003 = vpop.f32.mrf.mxu0
  %v3004 = vadd.f32 %v2869, %v3003
  %v3005 = vpop.f32.mrf.mxu0
  %3006 = vmatprep.mubr.f32.mxu0 0.0
  %3007 = vmatmul.mubr.f32.gmra.mxu0 %v2893
  %v3008 = vpop.f32.mrf.mxu0
  %v3009 = vadd.f32 %v2869, %v3008
  %v3010 = vpop.f32.mrf.mxu0
  %3011 = vmatprep.mubr.f32.mxu0 0.0
  %3012 = vmatmul.mubr.f32.gmra.mxu0 %v2896
  %v3013 = vpop.f32.mrf.mxu0
  %v3014 = vadd.f32 %v2869, %v3013
  %v3015 = vpop.f32.mrf.mxu0
  %3016 = vmatprep.mubr.f32.mxu0 0.0
  %3017 = vmatmul.mubr.f32.gmra.mxu0 %v2899
  %v3018 = vpop.f32.mrf.mxu0
  %v3019 = vadd.f32 %v2869, %v3018
  %v3020 = vpop.f32.mrf.mxu0
  %3021 = vmatprep.mubr.f32.mxu0 0.0
  %3022 = vmatmul.mubr.f32.gmra.mxu0 %v2902
  %v3023 = vpop.f32.mrf.mxu0
  %v3024 = vadd.f32 %v2869, %v3023
  %v3025 = vpop.f32.mrf.mxu0
  %3026 = vmatprep.mubr.f32.mxu0 0.0
  %3027 = vmatmul.mubr.f32.gmra.mxu0 %v2905
  %v3028 = vpop.f32.mrf.mxu0
  %v3029 = vadd.f32 %v2869, %v3028
  %v3030 = vpop.f32.mrf.mxu0
  %3031 = vdwg.mxu0
  %v3032 = vadd.f32 %v2974, %v3004
  %v3033 = vadd.f32 %v2979, %v3009
  %v3034 = vadd.f32 %v2984, %v3014
  %v3035 = vadd.f32 %v2989, %v3019
  %v3036 = vadd.f32 %v2994, %v3024
  %v3037 = vadd.f32 %v2999, %v3029
  %v3038 = vmul.f32 %v3032, 0.5
  %v3039 = vmul.f32 %v3033, 0.5
  %v3040 = vmul.f32 %v3034, 0.5
  %v3041 = vmul.f32 %v3035, 0.5
  %v3042 = vmul.f32 %v3036, 0.5
  %v3043 = vmul.f32 %v3037, 0.5
  %v3044 = vsub.f32 %v2974, %v3038
  %v3045 = vsub.f32 %v2979, %v3039
  %v3046 = vsub.f32 %v2984, %v3040
  %v3047 = vsub.f32 %v2989, %v3041
  %v3048 = vsub.f32 %v2994, %v3042
  %v3049 = vsub.f32 %v2999, %v3043
  %v3050 = vmul.f32 %v3044, %v3044
  %v3051 = vmul.f32 %v3045, %v3045
  %v3052 = vmul.f32 %v3046, %v3046
  %v3053 = vmul.f32 %v3047, %v3047
  %v3054 = vmul.f32 %v3048, %v3048
  %v3055 = vmul.f32 %v3049, %v3049
  %v3056 = vsub.f32 %v3004, %v3038
  %v3057 = vsub.f32 %v3009, %v3039
  %v3058 = vsub.f32 %v3014, %v3040
  %v3059 = vsub.f32 %v3019, %v3041
  %v3060 = vsub.f32 %v3024, %v3042
  %v3061 = vsub.f32 %v3029, %v3043
  %v3062 = vmul.f32 %v3056, %v3056
  %v3063 = vmul.f32 %v3057, %v3057
  %v3064 = vmul.f32 %v3058, %v3058
  %v3065 = vmul.f32 %v3059, %v3059
  %v3066 = vmul.f32 %v3060, %v3060
  %v3067 = vmul.f32 %v3061, %v3061
  %v3068 = vadd.f32 %v3050, %v3062
  %v3069 = vadd.f32 %v3051, %v3063
  %v3070 = vadd.f32 %v3052, %v3064
  %v3071 = vadd.f32 %v3053, %v3065
  %v3072 = vadd.f32 %v3054, %v3066
  %v3073 = vadd.f32 %v3055, %v3067
  %v3074 = vmul.f32 %v3068, 0.5
  %v3075 = vmul.f32 %v3069, 0.5
  %v3076 = vmul.f32 %v3070, 0.5
  %v3077 = vmul.f32 %v3071, 0.5
  %v3078 = vmul.f32 %v3072, 0.5
  %v3079 = vmul.f32 %v3073, 0.5
  %v3080 = vadd.f32 %v3074, 1e-05
  %v3081 = vadd.f32 %v3075, 1e-05
  %v3082 = vadd.f32 %v3076, 1e-05
  %v3083 = vadd.f32 %v3077, 1e-05
  %v3084 = vadd.f32 %v3078, 1e-05
  %v3085 = vadd.f32 %v3079, 1e-05
  %v3086 = vrsqrt.pop %v3080
  %v3087 = vrsqrt.pop %v3081
  %v3088 = vrsqrt.pop %v3082
  %v3089 = vrsqrt.pop %v3083
  %v3090 = vrsqrt.pop %v3084
  %v3091 = vrsqrt.pop %v3085
  %v3092 = vmul.f32 %v3044, %v3086
  %v3093 = vmul.f32 %v3045, %v3087
  %v3094 = vmul.f32 %v3046, %v3088
  %v3095 = vmul.f32 %v3047, %v3089
  %v3096 = vmul.f32 %v3048, %v3090
  %v3097 = vmul.f32 %v3049, %v3091
  %v3098 = vmul.f32 %v3092, %v2691
  %v3099 = vmul.f32 %v3093, %v2692
  %v3100 = vmul.f32 %v3094, %v2693
  %v3101 = vmul.f32 %v3095, %v2694
  %v3102 = vmul.f32 %v3096, %v2695
  %v3103 = vmul.f32 %v3097, %v2696
  %v3104 = vadd.f32 %v3098, %v2698
  %v3105 = vadd.f32 %v3099, %v2699
  %v3106 = vadd.f32 %v3100, %v2700
  %v3107 = vadd.f32 %v3101, %v2701
  %v3108 = vadd.f32 %v3102, %v2702
  %v3109 = vadd.f32 %v3103, %v2703
  %v3110 = vsub.f32 0.0, %v3104
  %v3111 = vsub.f32 0.0, %v3105
  %v3112 = vsub.f32 0.0, %v3106
  %v3113 = vsub.f32 0.0, %v3107
  %v3114 = vsub.f32 0.0, %v3108
  %v3115 = vsub.f32 0.0, %v3109
  %v3116 = vmul.f32 %v3110, 1.442695
  %v3117 = vpow.pop %v3116
  %v3118 = vmul.f32 %v3111, 1.442695
  %v3119 = vpow.pop %v3118
  %v3120 = vmul.f32 %v3112, 1.442695
  %v3121 = vpow.pop %v3120
  %v3122 = vmul.f32 %v3113, 1.442695
  %v3123 = vpow.pop %v3122
  %v3124 = vmul.f32 %v3114, 1.442695
  %v3125 = vpow.pop %v3124
  %v3126 = vmul.f32 %v3115, 1.442695
  %v3127 = vpow.pop %v3126
  %v3128 = vadd.f32 %v3117, 1.0
  %v3129 = vadd.f32 %v3119, 1.0
  %v3130 = vadd.f32 %v3121, 1.0
  %v3131 = vadd.f32 %v3123, 1.0
  %v3132 = vadd.f32 %v3125, 1.0
  %v3133 = vadd.f32 %v3127, 1.0
  %v3134 = vrcp.pop %v3128
  %v3135 = vmul.f32 1.0, %v3134
  %v3136 = vrcp.pop %v3129
  %v3137 = vmul.f32 1.0, %v3136
  %v3138 = vrcp.pop %v3130
  %v3139 = vmul.f32 1.0, %v3138
  %v3140 = vrcp.pop %v3131
  %v3141 = vmul.f32 1.0, %v3140
  %v3142 = vrcp.pop %v3132
  %v3143 = vmul.f32 1.0, %v3142
  %v3144 = vrcp.pop %v3133
  %v3145 = vmul.f32 1.0, %v3144
  %v3146 = vmul.f32 %v3056, %v3086
  %v3147 = vmul.f32 %v3057, %v3087
  %v3148 = vmul.f32 %v3058, %v3088
  %v3149 = vmul.f32 %v3059, %v3089
  %v3150 = vmul.f32 %v3060, %v3090
  %v3151 = vmul.f32 %v3061, %v3091
  %v3152 = vmul.f32 %v3146, %v2691
  %v3153 = vmul.f32 %v3147, %v2692
  %v3154 = vmul.f32 %v3148, %v2693
  %v3155 = vmul.f32 %v3149, %v2694
  %v3156 = vmul.f32 %v3150, %v2695
  %v3157 = vmul.f32 %v3151, %v2696
  %v3158 = vadd.f32 %v3152, %v2698
  %v3159 = vadd.f32 %v3153, %v2699
  %v3160 = vadd.f32 %v3154, %v2700
  %v3161 = vadd.f32 %v3155, %v2701
  %v3162 = vadd.f32 %v3156, %v2702
  %v3163 = vadd.f32 %v3157, %v2703
  %v3164 = vsub.f32 0.0, %v3158
  %v3165 = vsub.f32 0.0, %v3159
  %v3166 = vsub.f32 0.0, %v3160
  %v3167 = vsub.f32 0.0, %v3161
  %v3168 = vsub.f32 0.0, %v3162
  %v3169 = vsub.f32 0.0, %v3163
  %v3170 = vmul.f32 %v3164, 1.442695
  %v3171 = vpow.pop %v3170
  %v3172 = vmul.f32 %v3165, 1.442695
  %v3173 = vpow.pop %v3172
  %v3174 = vmul.f32 %v3166, 1.442695
  %v3175 = vpow.pop %v3174
  %v3176 = vmul.f32 %v3167, 1.442695
  %v3177 = vpow.pop %v3176
  %v3178 = vmul.f32 %v3168, 1.442695
  %v3179 = vpow.pop %v3178
  %v3180 = vmul.f32 %v3169, 1.442695
  %v3181 = vpow.pop %v3180
  %v3182 = vadd.f32 %v3171, 1.0
  %v3183 = vadd.f32 %v3173, 1.0
  %v3184 = vadd.f32 %v3175, 1.0
  %v3185 = vadd.f32 %v3177, 1.0
  %v3186 = vadd.f32 %v3179, 1.0
  %v3187 = vadd.f32 %v3181, 1.0
  %v3188 = vrcp.pop %v3182
  %v3189 = vmul.f32 1.0, %v3188
  %v3190 = vrcp.pop %v3183
  %v3191 = vmul.f32 1.0, %v3190
  %v3192 = vrcp.pop %v3184
  %v3193 = vmul.f32 1.0, %v3192
  %v3194 = vrcp.pop %v3185
  %v3195 = vmul.f32 1.0, %v3194
  %v3196 = vrcp.pop %v3186
  %v3197 = vmul.f32 1.0, %v3196
  %v3198 = vrcp.pop %v3187
  %v3199 = vmul.f32 1.0, %v3198
  %v3200 = vadd.f32 %v3135, %v2607
  %v3201 = vadd.f32 %v3137, %v2609
  %v3202 = vadd.f32 %v3139, %v2611
  %v3203 = vadd.f32 %v3141, %v2613
  %v3204 = vadd.f32 %v3143, %v2615
  %v3205 = vadd.f32 %v3145, %v2617
  %v3206 = vadd.f32 %v3189, %v2661
  %v3207 = vadd.f32 %v3191, %v2663
  %v3208 = vadd.f32 %v3193, %v2665
  %v3209 = vadd.f32 %v3195, %v2667
  %v3210 = vadd.f32 %v3197, %v2669
  %v3211 = vadd.f32 %v3199, %v2671
  %s3212 = scalar_lea.vmem %s2, 96
  %v3213 = vld [vmem:[%s3212] sm:$0xff]
  %v3214 = vld [vmem:[%s3212 + $0x8] sm:$0xff]
  %s3215 = scalar_lea.vmem %s1, 576
  %v3216 = vld [vmem:[%s3215] sm:$0xff]
  %v3217 = vld [vmem:[%s3215 + $0x8] sm:$0xff]
  %v3218 = vld [vmem:[%s3215 + $0x10] sm:$0xff]
  %v3219 = vld [vmem:[%s3215 + $0x18] sm:$0xff]
  %v3220 = vld [vmem:[%s3215 + $0x20] sm:$0xff]
  %v3221 = vld [vmem:[%s3215 + $0x28] sm:$0xff]
  %v3222 = vld [vmem:[%s3215 + $0x30] sm:$0xff]
  %v3223 = vld [vmem:[%s3215 + $0x38] sm:$0xff]
  %v3224 = vld [vmem:[%s3215 + $0x40] sm:$0xff]
  %v3225 = vld [vmem:[%s3215 + $0x48] sm:$0xff]
  %v3226 = vld [vmem:[%s3215 + $0x50] sm:$0xff]
  %v3227 = vld [vmem:[%s3215 + $0x58] sm:$0xff]
  %s3228 = scalar_lea.vmem %s3, 6
  %v3229 = vld [vmem:[%s3228] sm:$0x1]
  %s3230 = scalar_lea.vmem %s4, 288
  %v3231 = vld [vmem:[%s3230] sm:$0xff]
  %v3232 = vld [vmem:[%s3230 + $0x8] sm:$0xff]
  %v3233 = vld [vmem:[%s3230 + $0x10] sm:$0xff]
  %v3234 = vld [vmem:[%s3230 + $0x18] sm:$0xff]
  %v3235 = vld [vmem:[%s3230 + $0x20] sm:$0xff]
  %v3236 = vld [vmem:[%s3230 + $0x28] sm:$0xff]
  %s3237 = scalar_lea.vmem %s5, 288
  %v3238 = vld [vmem:[%s3237] sm:$0xff]
  %v3239 = vld [vmem:[%s3237 + $0x8] sm:$0xff]
  %v3240 = vld [vmem:[%s3237 + $0x10] sm:$0xff]
  %v3241 = vld [vmem:[%s3237 + $0x18] sm:$0xff]
  %v3242 = vld [vmem:[%s3237 + $0x20] sm:$0xff]
  %v3243 = vld [vmem:[%s3237 + $0x28] sm:$0xff]
  %v3245 = vsel %vm62, %v3200, 0
  %v3248 = vsel %vm62, %v3201, 0
  %v3251 = vsel %vm62, %v3202, 0
  %v3254 = vsel %vm62, %v3203, 0
  %v3257 = vsel %vm62, %v3204, 0
  %v3260 = vsel %vm62, %v3205, 0
  %v3263 = vsel %vm62, %v3206, 0
  %v3266 = vsel %vm62, %v3207, 0
  %v3269 = vsel %vm62, %v3208, 0
  %v3272 = vsel %vm62, %v3209, 0
  %v3275 = vsel %vm62, %v3210, 0
  %v3278 = vsel %vm62, %v3211, 0
  %3280 = vmatprep.subr.mxu0 0.0
  %3281 = vmatpush1.msra.mxu0 0.0
  %3282 = vmatprep.subr.mxu0 0.0
  %3283 = vmatpush1.msra.mxu0 0.0
  %3284 = vmatprep.subr.mxu0 0.0
  %3285 = vmatpush1.msra.mxu0 0.0
  %3286 = vmatprep.subr.mxu0 0.0
  %3287 = vmatpush1.msra.mxu0 0.0
  %3288 = vmatprep.subr.mxu0 0.0
  %3289 = vmatpush1.msra.mxu0 0.0
  %3290 = vmatprep.subr.mxu0 0.0
  %3291 = vmatpush1.msra.mxu0 0.0
  %3292 = vmatprep.subr.mxu0 0.0
  %3293 = vmatpush1.msra.mxu0 0.0
  %3294 = vmatprep.subr.mxu0 0.0
  %3295 = vmatpush1.msra.mxu0 0.0
  %3296 = vmatprep.subr.mxu0 0.0
  %3297 = vmatpush1.msra.mxu0 0.0
  %3298 = vmatprep.subr.mxu0 0.0
  %3299 = vmatpush1.msra.mxu0 0.0
  %3300 = vmatprep.subr.mxu0 0.0
  %3301 = vmatpush1.msra.mxu0 0.0
  %3302 = vmatprep.subr.mxu0 0.0
  %3303 = vmatpush1.msra.mxu0 0.0
  %3304 = vmatprep.subr.mxu0 0.0
  %3305 = vmatpush1.msra.mxu0 0.0
  %3306 = vmatprep.subr.mxu0 0.0
  %3307 = vmatpush1.msra.mxu0 0.0
  %3308 = vmatprep.subr.mxu0 0.0
  %3309 = vmatpush1.msra.mxu0 %v3214
  %3310 = vmatprep.subr.mxu0 0.0
  %3311 = vmatpush1.msra.mxu0 %v3213
  %3312 = vmatprep.subr.mxu0 0.0
  %3313 = vmatpush2.msra.mxu0 0.0
  %3314 = vmatprep.subr.mxu0 0.0
  %3315 = vmatpush2.msra.mxu0 0.0
  %3316 = vmatprep.subr.mxu0 0.0
  %3317 = vmatpush2.msra.mxu0 0.0
  %3318 = vmatprep.subr.mxu0 0.0
  %3319 = vmatpush2.msra.mxu0 0.0
  %3320 = vmatprep.subr.mxu0 0.0
  %3321 = vmatpush2.msra.mxu0 0.0
  %3322 = vmatprep.subr.mxu0 0.0
  %3323 = vmatpush2.msra.mxu0 0.0
  %3324 = vmatprep.subr.mxu0 0.0
  %3325 = vmatpush2.msra.mxu0 0.0
  %3326 = vmatprep.subr.mxu0 0.0
  %3327 = vmatpush2.msra.mxu0 0.0
  %3328 = vmatprep.subr.mxu0 0.0
  %3329 = vmatpush2.msra.mxu0 0.0
  %3330 = vmatprep.subr.mxu0 0.0
  %3331 = vmatpush2.msra.mxu0 0.0
  %3332 = vmatprep.subr.mxu0 0.0
  %3333 = vmatpush2.msra.mxu0 0.0
  %3334 = vmatprep.subr.mxu0 0.0
  %3335 = vmatpush2.msra.mxu0 0.0
  %3336 = vmatprep.subr.mxu0 0.0
  %3337 = vmatpush2.msra.mxu0 0.0
  %3338 = vmatprep.subr.mxu0 0.0
  %3339 = vmatpush2.msra.mxu0 0.0
  %3340 = vmatprep.subr.mxu0 0.0
  %3341 = vmatpush2.msra.mxu0 0.0
  %3342 = vmatprep.subr.mxu0 0.0
  %3343 = vmatpush2.msra.mxu0 0.0
  %3344 = vmatprep.mubr.f32.mxu0 0.0
  %3345 = vmatmul.mubr.f32.gmra.mxu0 %v3245
  %v3346 = vpop.f32.mrf.mxu0
  %v3347 = vadd.f32 0.0, %v3346
  %v3348 = vpop.f32.mrf.mxu0
  %3349 = vmatprep.mubr.f32.mxu0 0.0
  %3350 = vmatmul.mubr.f32.gmra.mxu0 %v3248
  %v3351 = vpop.f32.mrf.mxu0
  %v3352 = vadd.f32 0.0, %v3351
  %v3353 = vpop.f32.mrf.mxu0
  %3354 = vmatprep.mubr.f32.mxu0 0.0
  %3355 = vmatmul.mubr.f32.gmra.mxu0 %v3251
  %v3356 = vpop.f32.mrf.mxu0
  %v3357 = vadd.f32 0.0, %v3356
  %v3358 = vpop.f32.mrf.mxu0
  %3359 = vmatprep.mubr.f32.mxu0 0.0
  %3360 = vmatmul.mubr.f32.gmra.mxu0 %v3254
  %v3361 = vpop.f32.mrf.mxu0
  %v3362 = vadd.f32 0.0, %v3361
  %v3363 = vpop.f32.mrf.mxu0
  %3364 = vmatprep.mubr.f32.mxu0 0.0
  %3365 = vmatmul.mubr.f32.gmra.mxu0 %v3257
  %v3366 = vpop.f32.mrf.mxu0
  %v3367 = vadd.f32 0.0, %v3366
  %v3368 = vpop.f32.mrf.mxu0
  %3369 = vmatprep.mubr.f32.mxu0 0.0
  %3370 = vmatmul.mubr.f32.gmra.mxu0 %v3260
  %v3371 = vpop.f32.mrf.mxu0
  %v3372 = vadd.f32 0.0, %v3371
  %v3373 = vpop.f32.mrf.mxu0
  %3374 = vmatprep.mubr.f32.mxu0 0.0
  %3375 = vmatmul.mubr.f32.gmra.mxu0 %v3263
  %v3376 = vpop.f32.mrf.mxu0
  %v3377 = vadd.f32 0.0, %v3376
  %v3378 = vpop.f32.mrf.mxu0
  %3379 = vmatprep.mubr.f32.mxu0 0.0
  %3380 = vmatmul.mubr.f32.gmra.mxu0 %v3266
  %v3381 = vpop.f32.mrf.mxu0
  %v3382 = vadd.f32 0.0, %v3381
  %v3383 = vpop.f32.mrf.mxu0
  %3384 = vmatprep.mubr.f32.mxu0 0.0
  %3385 = vmatmul.mubr.f32.gmra.mxu0 %v3269
  %v3386 = vpop.f32.mrf.mxu0
  %v3387 = vadd.f32 0.0, %v3386
  %v3388 = vpop.f32.mrf.mxu0
  %3389 = vmatprep.mubr.f32.mxu0 0.0
  %3390 = vmatmul.mubr.f32.gmra.mxu0 %v3272
  %v3391 = vpop.f32.mrf.mxu0
  %v3392 = vadd.f32 0.0, %v3391
  %v3393 = vpop.f32.mrf.mxu0
  %3394 = vmatprep.mubr.f32.mxu0 0.0
  %3395 = vmatmul.mubr.f32.gmra.mxu0 %v3275
  %v3396 = vpop.f32.mrf.mxu0
  %v3397 = vadd.f32 0.0, %v3396
  %v3398 = vpop.f32.mrf.mxu0
  %3399 = vmatprep.mubr.f32.mxu0 0.0
  %3400 = vmatmul.mubr.f32.gmra.mxu0 %v3278
  %v3401 = vpop.f32.mrf.mxu0
  %v3402 = vadd.f32 0.0, %v3401
  %v3403 = vpop.f32.mrf.mxu0
  %3404 = vdwg.mxu0
  %v3406 = vlaneseq
  %v3407 = vshrl.u32 %v3406, 7
  %v3408 = vsub.s32 0, %v3407
  %v3409 = vrot.slane %v3229, %v3408
  %v3412 = vsel %vm230, %v3216, 0
  %v3415 = vsel %vm230, %v3217, 0
  %v3418 = vsel %vm230, %v3218, 0
  %v3421 = vsel %vm230, %v3219, 0
  %v3424 = vsel %vm230, %v3220, 0
  %v3427 = vsel %vm230, %v3221, 0
  %v3430 = vsel %vm230, %v3222, 0
  %v3433 = vsel %vm230, %v3223, 0
  %v3436 = vsel %vm230, %v3224, 0
  %v3439 = vsel %vm230, %v3225, 0
  %v3442 = vsel %vm230, %v3226, 0
  %v3445 = vsel %vm230, %v3227, 0
  %3447 = vmatprep.subr.mxu0 0.0
  %3448 = vmatpush1.msra.mxu0 0.0
  %3449 = vmatprep.subr.mxu0 0.0
  %3450 = vmatpush1.msra.mxu0 0.0
  %3451 = vmatprep.subr.mxu0 0.0
  %3452 = vmatpush1.msra.mxu0 0.0
  %3453 = vmatprep.subr.mxu0 0.0
  %3454 = vmatpush1.msra.mxu0 0.0
  %3455 = vmatprep.subr.mxu0 0.0
  %3456 = vmatpush1.msra.mxu0 %v3402
  %3457 = vmatprep.subr.mxu0 0.0
  %3458 = vmatpush1.msra.mxu0 %v3397
  %3459 = vmatprep.subr.mxu0 0.0
  %3460 = vmatpush1.msra.mxu0 %v3392
  %3461 = vmatprep.subr.mxu0 0.0
  %3462 = vmatpush1.msra.mxu0 %v3387
  %3463 = vmatprep.subr.mxu0 0.0
  %3464 = vmatpush1.msra.mxu0 %v3382
  %3465 = vmatprep.subr.mxu0 0.0
  %3466 = vmatpush1.msra.mxu0 %v3377
  %3467 = vmatprep.subr.mxu0 0.0
  %3468 = vmatpush1.msra.mxu0 %v3372
  %3469 = vmatprep.subr.mxu0 0.0
  %3470 = vmatpush1.msra.mxu0 %v3367
  %3471 = vmatprep.subr.mxu0 0.0
  %3472 = vmatpush1.msra.mxu0 %v3362
  %3473 = vmatprep.subr.mxu0 0.0
  %3474 = vmatpush1.msra.mxu0 %v3357
  %3475 = vmatprep.subr.mxu0 0.0
  %3476 = vmatpush1.msra.mxu0 %v3352
  %3477 = vmatprep.subr.mxu0 0.0
  %3478 = vmatpush1.msra.mxu0 %v3347
  %3479 = vmatprep.subr.mxu0 0.0
  %3480 = vmatpush2.msra.mxu0 0.0
  %3481 = vmatprep.subr.mxu0 0.0
  %3482 = vmatpush2.msra.mxu0 0.0
  %3483 = vmatprep.subr.mxu0 0.0
  %3484 = vmatpush2.msra.mxu0 0.0
  %3485 = vmatprep.subr.mxu0 0.0
  %3486 = vmatpush2.msra.mxu0 0.0
  %3487 = vmatprep.subr.mxu0 0.0
  %3488 = vmatpush2.msra.mxu0 0.0
  %3489 = vmatprep.subr.mxu0 0.0
  %3490 = vmatpush2.msra.mxu0 0.0
  %3491 = vmatprep.subr.mxu0 0.0
  %3492 = vmatpush2.msra.mxu0 0.0
  %3493 = vmatprep.subr.mxu0 0.0
  %3494 = vmatpush2.msra.mxu0 0.0
  %3495 = vmatprep.subr.mxu0 0.0
  %3496 = vmatpush2.msra.mxu0 0.0
  %3497 = vmatprep.subr.mxu0 0.0
  %3498 = vmatpush2.msra.mxu0 0.0
  %3499 = vmatprep.subr.mxu0 0.0
  %3500 = vmatpush2.msra.mxu0 0.0
  %3501 = vmatprep.subr.mxu0 0.0
  %3502 = vmatpush2.msra.mxu0 0.0
  %3503 = vmatprep.subr.mxu0 0.0
  %3504 = vmatpush2.msra.mxu0 0.0
  %3505 = vmatprep.subr.mxu0 0.0
  %3506 = vmatpush2.msra.mxu0 0.0
  %3507 = vmatprep.subr.mxu0 0.0
  %3508 = vmatpush2.msra.mxu0 0.0
  %3509 = vmatprep.subr.mxu0 0.0
  %3510 = vmatpush2.msra.mxu0 0.0
  %3511 = vmatprep.mubr.f32.mxu0 0.0
  %3512 = vmatmul.mubr.f32.gmra.mxu0 %v3412
  %v3513 = vpop.f32.mrf.mxu0
  %v3514 = vadd.f32 %v3409, %v3513
  %v3515 = vpop.f32.mrf.mxu0
  %3516 = vmatprep.mubr.f32.mxu0 0.0
  %3517 = vmatmul.mubr.f32.gmra.mxu0 %v3415
  %v3518 = vpop.f32.mrf.mxu0
  %v3519 = vadd.f32 %v3409, %v3518
  %v3520 = vpop.f32.mrf.mxu0
  %3521 = vmatprep.mubr.f32.mxu0 0.0
  %3522 = vmatmul.mubr.f32.gmra.mxu0 %v3418
  %v3523 = vpop.f32.mrf.mxu0
  %v3524 = vadd.f32 %v3409, %v3523
  %v3525 = vpop.f32.mrf.mxu0
  %3526 = vmatprep.mubr.f32.mxu0 0.0
  %3527 = vmatmul.mubr.f32.gmra.mxu0 %v3421
  %v3528 = vpop.f32.mrf.mxu0
  %v3529 = vadd.f32 %v3409, %v3528
  %v3530 = vpop.f32.mrf.mxu0
  %3531 = vmatprep.mubr.f32.mxu0 0.0
  %3532 = vmatmul.mubr.f32.gmra.mxu0 %v3424
  %v3533 = vpop.f32.mrf.mxu0
  %v3534 = vadd.f32 %v3409, %v3533
  %v3535 = vpop.f32.mrf.mxu0
  %3536 = vmatprep.mubr.f32.mxu0 0.0
  %3537 = vmatmul.mubr.f32.gmra.mxu0 %v3427
  %v3538 = vpop.f32.mrf.mxu0
  %v3539 = vadd.f32 %v3409, %v3538
  %v3540 = vpop.f32.mrf.mxu0
  %3541 = vmatprep.mubr.f32.mxu0 0.0
  %3542 = vmatmul.mubr.f32.gmra.mxu0 %v3430
  %v3543 = vpop.f32.mrf.mxu0
  %v3544 = vadd.f32 %v3409, %v3543
  %v3545 = vpop.f32.mrf.mxu0
  %3546 = vmatprep.mubr.f32.mxu0 0.0
  %3547 = vmatmul.mubr.f32.gmra.mxu0 %v3433
  %v3548 = vpop.f32.mrf.mxu0
  %v3549 = vadd.f32 %v3409, %v3548
  %v3550 = vpop.f32.mrf.mxu0
  %3551 = vmatprep.mubr.f32.mxu0 0.0
  %3552 = vmatmul.mubr.f32.gmra.mxu0 %v3436
  %v3553 = vpop.f32.mrf.mxu0
  %v3554 = vadd.f32 %v3409, %v3553
  %v3555 = vpop.f32.mrf.mxu0
  %3556 = vmatprep.mubr.f32.mxu0 0.0
  %3557 = vmatmul.mubr.f32.gmra.mxu0 %v3439
  %v3558 = vpop.f32.mrf.mxu0
  %v3559 = vadd.f32 %v3409, %v3558
  %v3560 = vpop.f32.mrf.mxu0
  %3561 = vmatprep.mubr.f32.mxu0 0.0
  %3562 = vmatmul.mubr.f32.gmra.mxu0 %v3442
  %v3563 = vpop.f32.mrf.mxu0
  %v3564 = vadd.f32 %v3409, %v3563
  %v3565 = vpop.f32.mrf.mxu0
  %3566 = vmatprep.mubr.f32.mxu0 0.0
  %3567 = vmatmul.mubr.f32.gmra.mxu0 %v3445
  %v3568 = vpop.f32.mrf.mxu0
  %v3569 = vadd.f32 %v3409, %v3568
  %v3570 = vpop.f32.mrf.mxu0
  %3571 = vdwg.mxu0
  %v3572 = vadd.f32 %v3514, %v3544
  %v3573 = vadd.f32 %v3519, %v3549
  %v3574 = vadd.f32 %v3524, %v3554
  %v3575 = vadd.f32 %v3529, %v3559
  %v3576 = vadd.f32 %v3534, %v3564
  %v3577 = vadd.f32 %v3539, %v3569
  %v3578 = vmul.f32 %v3572, 0.5
  %v3579 = vmul.f32 %v3573, 0.5
  %v3580 = vmul.f32 %v3574, 0.5
  %v3581 = vmul.f32 %v3575, 0.5
  %v3582 = vmul.f32 %v3576, 0.5
  %v3583 = vmul.f32 %v3577, 0.5
  %v3584 = vsub.f32 %v3514, %v3578
  %v3585 = vsub.f32 %v3519, %v3579
  %v3586 = vsub.f32 %v3524, %v3580
  %v3587 = vsub.f32 %v3529, %v3581
  %v3588 = vsub.f32 %v3534, %v3582
  %v3589 = vsub.f32 %v3539, %v3583
  %v3590 = vmul.f32 %v3584, %v3584
  %v3591 = vmul.f32 %v3585, %v3585
  %v3592 = vmul.f32 %v3586, %v3586
  %v3593 = vmul.f32 %v3587, %v3587
  %v3594 = vmul.f32 %v3588, %v3588
  %v3595 = vmul.f32 %v3589, %v3589
  %v3596 = vsub.f32 %v3544, %v3578
  %v3597 = vsub.f32 %v3549, %v3579
  %v3598 = vsub.f32 %v3554, %v3580
  %v3599 = vsub.f32 %v3559, %v3581
  %v3600 = vsub.f32 %v3564, %v3582
  %v3601 = vsub.f32 %v3569, %v3583
  %v3602 = vmul.f32 %v3596, %v3596
  %v3603 = vmul.f32 %v3597, %v3597
  %v3604 = vmul.f32 %v3598, %v3598
  %v3605 = vmul.f32 %v3599, %v3599
  %v3606 = vmul.f32 %v3600, %v3600
  %v3607 = vmul.f32 %v3601, %v3601
  %v3608 = vadd.f32 %v3590, %v3602
  %v3609 = vadd.f32 %v3591, %v3603
  %v3610 = vadd.f32 %v3592, %v3604
  %v3611 = vadd.f32 %v3593, %v3605
  %v3612 = vadd.f32 %v3594, %v3606
  %v3613 = vadd.f32 %v3595, %v3607
  %v3614 = vmul.f32 %v3608, 0.5
  %v3615 = vmul.f32 %v3609, 0.5
  %v3616 = vmul.f32 %v3610, 0.5
  %v3617 = vmul.f32 %v3611, 0.5
  %v3618 = vmul.f32 %v3612, 0.5
  %v3619 = vmul.f32 %v3613, 0.5
  %v3620 = vadd.f32 %v3614, 1e-05
  %v3621 = vadd.f32 %v3615, 1e-05
  %v3622 = vadd.f32 %v3616, 1e-05
  %v3623 = vadd.f32 %v3617, 1e-05
  %v3624 = vadd.f32 %v3618, 1e-05
  %v3625 = vadd.f32 %v3619, 1e-05
  %v3626 = vrsqrt.pop %v3620
  %v3627 = vrsqrt.pop %v3621
  %v3628 = vrsqrt.pop %v3622
  %v3629 = vrsqrt.pop %v3623
  %v3630 = vrsqrt.pop %v3624
  %v3631 = vrsqrt.pop %v3625
  %v3632 = vmul.f32 %v3584, %v3626
  %v3633 = vmul.f32 %v3585, %v3627
  %v3634 = vmul.f32 %v3586, %v3628
  %v3635 = vmul.f32 %v3587, %v3629
  %v3636 = vmul.f32 %v3588, %v3630
  %v3637 = vmul.f32 %v3589, %v3631
  %v3638 = vmul.f32 %v3632, %v3231
  %v3639 = vmul.f32 %v3633, %v3232
  %v3640 = vmul.f32 %v3634, %v3233
  %v3641 = vmul.f32 %v3635, %v3234
  %v3642 = vmul.f32 %v3636, %v3235
  %v3643 = vmul.f32 %v3637, %v3236
  %v3644 = vadd.f32 %v3638, %v3238
  %v3645 = vadd.f32 %v3639, %v3239
  %v3646 = vadd.f32 %v3640, %v3240
  %v3647 = vadd.f32 %v3641, %v3241
  %v3648 = vadd.f32 %v3642, %v3242
  %v3649 = vadd.f32 %v3643, %v3243
  %v3650 = vsub.f32 0.0, %v3644
  %v3651 = vsub.f32 0.0, %v3645
  %v3652 = vsub.f32 0.0, %v3646
  %v3653 = vsub.f32 0.0, %v3647
  %v3654 = vsub.f32 0.0, %v3648
  %v3655 = vsub.f32 0.0, %v3649
  %v3656 = vmul.f32 %v3650, 1.442695
  %v3657 = vpow.pop %v3656
  %v3658 = vmul.f32 %v3651, 1.442695
  %v3659 = vpow.pop %v3658
  %v3660 = vmul.f32 %v3652, 1.442695
  %v3661 = vpow.pop %v3660
  %v3662 = vmul.f32 %v3653, 1.442695
  %v3663 = vpow.pop %v3662
  %v3664 = vmul.f32 %v3654, 1.442695
  %v3665 = vpow.pop %v3664
  %v3666 = vmul.f32 %v3655, 1.442695
  %v3667 = vpow.pop %v3666
  %v3668 = vadd.f32 %v3657, 1.0
  %v3669 = vadd.f32 %v3659, 1.0
  %v3670 = vadd.f32 %v3661, 1.0
  %v3671 = vadd.f32 %v3663, 1.0
  %v3672 = vadd.f32 %v3665, 1.0
  %v3673 = vadd.f32 %v3667, 1.0
  %v3674 = vrcp.pop %v3668
  %v3675 = vmul.f32 1.0, %v3674
  %v3676 = vrcp.pop %v3669
  %v3677 = vmul.f32 1.0, %v3676
  %v3678 = vrcp.pop %v3670
  %v3679 = vmul.f32 1.0, %v3678
  %v3680 = vrcp.pop %v3671
  %v3681 = vmul.f32 1.0, %v3680
  %v3682 = vrcp.pop %v3672
  %v3683 = vmul.f32 1.0, %v3682
  %v3684 = vrcp.pop %v3673
  %v3685 = vmul.f32 1.0, %v3684
  %v3686 = vmul.f32 %v3596, %v3626
  %v3687 = vmul.f32 %v3597, %v3627
  %v3688 = vmul.f32 %v3598, %v3628
  %v3689 = vmul.f32 %v3599, %v3629
  %v3690 = vmul.f32 %v3600, %v3630
  %v3691 = vmul.f32 %v3601, %v3631
  %v3692 = vmul.f32 %v3686, %v3231
  %v3693 = vmul.f32 %v3687, %v3232
  %v3694 = vmul.f32 %v3688, %v3233
  %v3695 = vmul.f32 %v3689, %v3234
  %v3696 = vmul.f32 %v3690, %v3235
  %v3697 = vmul.f32 %v3691, %v3236
  %v3698 = vadd.f32 %v3692, %v3238
  %v3699 = vadd.f32 %v3693, %v3239
  %v3700 = vadd.f32 %v3694, %v3240
  %v3701 = vadd.f32 %v3695, %v3241
  %v3702 = vadd.f32 %v3696, %v3242
  %v3703 = vadd.f32 %v3697, %v3243
  %v3704 = vsub.f32 0.0, %v3698
  %v3705 = vsub.f32 0.0, %v3699
  %v3706 = vsub.f32 0.0, %v3700
  %v3707 = vsub.f32 0.0, %v3701
  %v3708 = vsub.f32 0.0, %v3702
  %v3709 = vsub.f32 0.0, %v3703
  %v3710 = vmul.f32 %v3704, 1.442695
  %v3711 = vpow.pop %v3710
  %v3712 = vmul.f32 %v3705, 1.442695
  %v3713 = vpow.pop %v3712
  %v3714 = vmul.f32 %v3706, 1.442695
  %v3715 = vpow.pop %v3714
  %v3716 = vmul.f32 %v3707, 1.442695
  %v3717 = vpow.pop %v3716
  %v3718 = vmul.f32 %v3708, 1.442695
  %v3719 = vpow.pop %v3718
  %v3720 = vmul.f32 %v3709, 1.442695
  %v3721 = vpow.pop %v3720
  %v3722 = vadd.f32 %v3711, 1.0
  %v3723 = vadd.f32 %v3713, 1.0
  %v3724 = vadd.f32 %v3715, 1.0
  %v3725 = vadd.f32 %v3717, 1.0
  %v3726 = vadd.f32 %v3719, 1.0
  %v3727 = vadd.f32 %v3721, 1.0
  %v3728 = vrcp.pop %v3722
  %v3729 = vmul.f32 1.0, %v3728
  %v3730 = vrcp.pop %v3723
  %v3731 = vmul.f32 1.0, %v3730
  %v3732 = vrcp.pop %v3724
  %v3733 = vmul.f32 1.0, %v3732
  %v3734 = vrcp.pop %v3725
  %v3735 = vmul.f32 1.0, %v3734
  %v3736 = vrcp.pop %v3726
  %v3737 = vmul.f32 1.0, %v3736
  %v3738 = vrcp.pop %v3727
  %v3739 = vmul.f32 1.0, %v3738
  %v3740 = vadd.f32 %v3675, %v2079
  %v3741 = vadd.f32 %v3677, %v2081
  %v3742 = vadd.f32 %v3679, %v2083
  %v3743 = vadd.f32 %v3681, %v2085
  %v3744 = vadd.f32 %v3683, %v2087
  %v3745 = vadd.f32 %v3685, %v2089
  %v3746 = vadd.f32 %v3729, %v2133
  %v3747 = vadd.f32 %v3731, %v2135
  %v3748 = vadd.f32 %v3733, %v2137
  %v3749 = vadd.f32 %v3735, %v2139
  %v3750 = vadd.f32 %v3737, %v2141
  %v3751 = vadd.f32 %v3739, %v2143
  %s3752 = scalar_lea.vmem %s2, 112
  %v3753 = vld [vmem:[%s3752] sm:$0xff]
  %v3754 = vld [vmem:[%s3752 + $0x8] sm:$0xff]
  %s3755 = scalar_lea.vmem %s1, 672
  %v3756 = vld [vmem:[%s3755] sm:$0xff]
  %v3757 = vld [vmem:[%s3755 + $0x8] sm:$0xff]
  %v3758 = vld [vmem:[%s3755 + $0x10] sm:$0xff]
  %v3759 = vld [vmem:[%s3755 + $0x18] sm:$0xff]
  %v3760 = vld [vmem:[%s3755 + $0x20] sm:$0xff]
  %v3761 = vld [vmem:[%s3755 + $0x28] sm:$0xff]
  %v3762 = vld [vmem:[%s3755 + $0x30] sm:$0xff]
  %v3763 = vld [vmem:[%s3755 + $0x38] sm:$0xff]
  %v3764 = vld [vmem:[%s3755 + $0x40] sm:$0xff]
  %v3765 = vld [vmem:[%s3755 + $0x48] sm:$0xff]
  %v3766 = vld [vmem:[%s3755 + $0x50] sm:$0xff]
  %v3767 = vld [vmem:[%s3755 + $0x58] sm:$0xff]
  %s3768 = scalar_lea.vmem %s3, 7
  %v3769 = vld [vmem:[%s3768] sm:$0x1]
  %s3770 = scalar_lea.vmem %s4, 336
  %v3771 = vld [vmem:[%s3770] sm:$0xff]
  %v3772 = vld [vmem:[%s3770 + $0x8] sm:$0xff]
  %v3773 = vld [vmem:[%s3770 + $0x10] sm:$0xff]
  %v3774 = vld [vmem:[%s3770 + $0x18] sm:$0xff]
  %v3775 = vld [vmem:[%s3770 + $0x20] sm:$0xff]
  %v3776 = vld [vmem:[%s3770 + $0x28] sm:$0xff]
  %s3777 = scalar_lea.vmem %s5, 336
  %v3778 = vld [vmem:[%s3777] sm:$0xff]
  %v3779 = vld [vmem:[%s3777 + $0x8] sm:$0xff]
  %v3780 = vld [vmem:[%s3777 + $0x10] sm:$0xff]
  %v3781 = vld [vmem:[%s3777 + $0x18] sm:$0xff]
  %v3782 = vld [vmem:[%s3777 + $0x20] sm:$0xff]
  %v3783 = vld [vmem:[%s3777 + $0x28] sm:$0xff]
  %v3785 = vsel %vm62, %v3740, 0
  %v3788 = vsel %vm62, %v3741, 0
  %v3791 = vsel %vm62, %v3742, 0
  %v3794 = vsel %vm62, %v3743, 0
  %v3797 = vsel %vm62, %v3744, 0
  %v3800 = vsel %vm62, %v3745, 0
  %v3803 = vsel %vm62, %v3746, 0
  %v3806 = vsel %vm62, %v3747, 0
  %v3809 = vsel %vm62, %v3748, 0
  %v3812 = vsel %vm62, %v3749, 0
  %v3815 = vsel %vm62, %v3750, 0
  %v3818 = vsel %vm62, %v3751, 0
  %3820 = vmatprep.subr.mxu0 0.0
  %3821 = vmatpush1.msra.mxu0 0.0
  %3822 = vmatprep.subr.mxu0 0.0
  %3823 = vmatpush1.msra.mxu0 0.0
  %3824 = vmatprep.subr.mxu0 0.0
  %3825 = vmatpush1.msra.mxu0 0.0
  %3826 = vmatprep.subr.mxu0 0.0
  %3827 = vmatpush1.msra.mxu0 0.0
  %3828 = vmatprep.subr.mxu0 0.0
  %3829 = vmatpush1.msra.mxu0 0.0
  %3830 = vmatprep.subr.mxu0 0.0
  %3831 = vmatpush1.msra.mxu0 0.0
  %3832 = vmatprep.subr.mxu0 0.0
  %3833 = vmatpush1.msra.mxu0 0.0
  %3834 = vmatprep.subr.mxu0 0.0
  %3835 = vmatpush1.msra.mxu0 0.0
  %3836 = vmatprep.subr.mxu0 0.0
  %3837 = vmatpush1.msra.mxu0 0.0
  %3838 = vmatprep.subr.mxu0 0.0
  %3839 = vmatpush1.msra.mxu0 0.0
  %3840 = vmatprep.subr.mxu0 0.0
  %3841 = vmatpush1.msra.mxu0 0.0
  %3842 = vmatprep.subr.mxu0 0.0
  %3843 = vmatpush1.msra.mxu0 0.0
  %3844 = vmatprep.subr.mxu0 0.0
  %3845 = vmatpush1.msra.mxu0 0.0
  %3846 = vmatprep.subr.mxu0 0.0
  %3847 = vmatpush1.msra.mxu0 0.0
  %3848 = vmatprep.subr.mxu0 0.0
  %3849 = vmatpush1.msra.mxu0 %v3754
  %3850 = vmatprep.subr.mxu0 0.0
  %3851 = vmatpush1.msra.mxu0 %v3753
  %3852 = vmatprep.subr.mxu0 0.0
  %3853 = vmatpush2.msra.mxu0 0.0
  %3854 = vmatprep.subr.mxu0 0.0
  %3855 = vmatpush2.msra.mxu0 0.0
  %3856 = vmatprep.subr.mxu0 0.0
  %3857 = vmatpush2.msra.mxu0 0.0
  %3858 = vmatprep.subr.mxu0 0.0
  %3859 = vmatpush2.msra.mxu0 0.0
  %3860 = vmatprep.subr.mxu0 0.0
  %3861 = vmatpush2.msra.mxu0 0.0
  %3862 = vmatprep.subr.mxu0 0.0
  %3863 = vmatpush2.msra.mxu0 0.0
  %3864 = vmatprep.subr.mxu0 0.0
  %3865 = vmatpush2.msra.mxu0 0.0
  %3866 = vmatprep.subr.mxu0 0.0
  %3867 = vmatpush2.msra.mxu0 0.0
  %3868 = vmatprep.subr.mxu0 0.0
  %3869 = vmatpush2.msra.mxu0 0.0
  %3870 = vmatprep.subr.mxu0 0.0
  %3871 = vmatpush2.msra.mxu0 0.0
  %3872 = vmatprep.subr.mxu0 0.0
  %3873 = vmatpush2.msra.mxu0 0.0
  %3874 = vmatprep.subr.mxu0 0.0
  %3875 = vmatpush2.msra.mxu0 0.0
  %3876 = vmatprep.subr.mxu0 0.0
  %3877 = vmatpush2.msra.mxu0 0.0
  %3878 = vmatprep.subr.mxu0 0.0
  %3879 = vmatpush2.msra.mxu0 0.0
  %3880 = vmatprep.subr.mxu0 0.0
  %3881 = vmatpush2.msra.mxu0 0.0
  %3882 = vmatprep.subr.mxu0 0.0
  %3883 = vmatpush2.msra.mxu0 0.0
  %3884 = vmatprep.mubr.f32.mxu0 0.0
  %3885 = vmatmul.mubr.f32.gmra.mxu0 %v3785
  %v3886 = vpop.f32.mrf.mxu0
  %v3887 = vadd.f32 0.0, %v3886
  %v3888 = vpop.f32.mrf.mxu0
  %3889 = vmatprep.mubr.f32.mxu0 0.0
  %3890 = vmatmul.mubr.f32.gmra.mxu0 %v3788
  %v3891 = vpop.f32.mrf.mxu0
  %v3892 = vadd.f32 0.0, %v3891
  %v3893 = vpop.f32.mrf.mxu0
  %3894 = vmatprep.mubr.f32.mxu0 0.0
  %3895 = vmatmul.mubr.f32.gmra.mxu0 %v3791
  %v3896 = vpop.f32.mrf.mxu0
  %v3897 = vadd.f32 0.0, %v3896
  %v3898 = vpop.f32.mrf.mxu0
  %3899 = vmatprep.mubr.f32.mxu0 0.0
  %3900 = vmatmul.mubr.f32.gmra.mxu0 %v3794
  %v3901 = vpop.f32.mrf.mxu0
  %v3902 = vadd.f32 0.0, %v3901
  %v3903 = vpop.f32.mrf.mxu0
  %3904 = vmatprep.mubr.f32.mxu0 0.0
  %3905 = vmatmul.mubr.f32.gmra.mxu0 %v3797
  %v3906 = vpop.f32.mrf.mxu0
  %v3907 = vadd.f32 0.0, %v3906
  %v3908 = vpop.f32.mrf.mxu0
  %3909 = vmatprep.mubr.f32.mxu0 0.0
  %3910 = vmatmul.mubr.f32.gmra.mxu0 %v3800
  %v3911 = vpop.f32.mrf.mxu0
  %v3912 = vadd.f32 0.0, %v3911
  %v3913 = vpop.f32.mrf.mxu0
  %3914 = vmatprep.mubr.f32.mxu0 0.0
  %3915 = vmatmul.mubr.f32.gmra.mxu0 %v3803
  %v3916 = vpop.f32.mrf.mxu0
  %v3917 = vadd.f32 0.0, %v3916
  %v3918 = vpop.f32.mrf.mxu0
  %3919 = vmatprep.mubr.f32.mxu0 0.0
  %3920 = vmatmul.mubr.f32.gmra.mxu0 %v3806
  %v3921 = vpop.f32.mrf.mxu0
  %v3922 = vadd.f32 0.0, %v3921
  %v3923 = vpop.f32.mrf.mxu0
  %3924 = vmatprep.mubr.f32.mxu0 0.0
  %3925 = vmatmul.mubr.f32.gmra.mxu0 %v3809
  %v3926 = vpop.f32.mrf.mxu0
  %v3927 = vadd.f32 0.0, %v3926
  %v3928 = vpop.f32.mrf.mxu0
  %3929 = vmatprep.mubr.f32.mxu0 0.0
  %3930 = vmatmul.mubr.f32.gmra.mxu0 %v3812
  %v3931 = vpop.f32.mrf.mxu0
  %v3932 = vadd.f32 0.0, %v3931
  %v3933 = vpop.f32.mrf.mxu0
  %3934 = vmatprep.mubr.f32.mxu0 0.0
  %3935 = vmatmul.mubr.f32.gmra.mxu0 %v3815
  %v3936 = vpop.f32.mrf.mxu0
  %v3937 = vadd.f32 0.0, %v3936
  %v3938 = vpop.f32.mrf.mxu0
  %3939 = vmatprep.mubr.f32.mxu0 0.0
  %3940 = vmatmul.mubr.f32.gmra.mxu0 %v3818
  %v3941 = vpop.f32.mrf.mxu0
  %v3942 = vadd.f32 0.0, %v3941
  %v3943 = vpop.f32.mrf.mxu0
  %3944 = vdwg.mxu0
  %v3946 = vlaneseq
  %v3947 = vshrl.u32 %v3946, 7
  %v3948 = vsub.s32 0, %v3947
  %v3949 = vrot.slane %v3769, %v3948
  %v3952 = vsel %vm230, %v3756, 0
  %v3955 = vsel %vm230, %v3757, 0
  %v3958 = vsel %vm230, %v3758, 0
  %v3961 = vsel %vm230, %v3759, 0
  %v3964 = vsel %vm230, %v3760, 0
  %v3967 = vsel %vm230, %v3761, 0
  %v3970 = vsel %vm230, %v3762, 0
  %v3973 = vsel %vm230, %v3763, 0
  %v3976 = vsel %vm230, %v3764, 0
  %v3979 = vsel %vm230, %v3765, 0
  %v3982 = vsel %vm230, %v3766, 0
  %v3985 = vsel %vm230, %v3767, 0
  %3987 = vmatprep.subr.mxu0 0.0
  %3988 = vmatpush1.msra.mxu0 0.0
  %3989 = vmatprep.subr.mxu0 0.0
  %3990 = vmatpush1.msra.mxu0 0.0
  %3991 = vmatprep.subr.mxu0 0.0
  %3992 = vmatpush1.msra.mxu0 0.0
  %3993 = vmatprep.subr.mxu0 0.0
  %3994 = vmatpush1.msra.mxu0 0.0
  %3995 = vmatprep.subr.mxu0 0.0
  %3996 = vmatpush1.msra.mxu0 %v3942
  %3997 = vmatprep.subr.mxu0 0.0
  %3998 = vmatpush1.msra.mxu0 %v3937
  %3999 = vmatprep.subr.mxu0 0.0
  %4000 = vmatpush1.msra.mxu0 %v3932
  %4001 = vmatprep.subr.mxu0 0.0
  %4002 = vmatpush1.msra.mxu0 %v3927
  %4003 = vmatprep.subr.mxu0 0.0
  %4004 = vmatpush1.msra.mxu0 %v3922
  %4005 = vmatprep.subr.mxu0 0.0
  %4006 = vmatpush1.msra.mxu0 %v3917
  %4007 = vmatprep.subr.mxu0 0.0
  %4008 = vmatpush1.msra.mxu0 %v3912
  %4009 = vmatprep.subr.mxu0 0.0
  %4010 = vmatpush1.msra.mxu0 %v3907
  %4011 = vmatprep.subr.mxu0 0.0
  %4012 = vmatpush1.msra.mxu0 %v3902
  %4013 = vmatprep.subr.mxu0 0.0
  %4014 = vmatpush1.msra.mxu0 %v3897
  %4015 = vmatprep.subr.mxu0 0.0
  %4016 = vmatpush1.msra.mxu0 %v3892
  %4017 = vmatprep.subr.mxu0 0.0
  %4018 = vmatpush1.msra.mxu0 %v3887
  %4019 = vmatprep.subr.mxu0 0.0
  %4020 = vmatpush2.msra.mxu0 0.0
  %4021 = vmatprep.subr.mxu0 0.0
  %4022 = vmatpush2.msra.mxu0 0.0
  %4023 = vmatprep.subr.mxu0 0.0
  %4024 = vmatpush2.msra.mxu0 0.0
  %4025 = vmatprep.subr.mxu0 0.0
  %4026 = vmatpush2.msra.mxu0 0.0
  %4027 = vmatprep.subr.mxu0 0.0
  %4028 = vmatpush2.msra.mxu0 0.0
  %4029 = vmatprep.subr.mxu0 0.0
  %4030 = vmatpush2.msra.mxu0 0.0
  %4031 = vmatprep.subr.mxu0 0.0
  %4032 = vmatpush2.msra.mxu0 0.0
  %4033 = vmatprep.subr.mxu0 0.0
  %4034 = vmatpush2.msra.mxu0 0.0
  %4035 = vmatprep.subr.mxu0 0.0
  %4036 = vmatpush2.msra.mxu0 0.0
  %4037 = vmatprep.subr.mxu0 0.0
  %4038 = vmatpush2.msra.mxu0 0.0
  %4039 = vmatprep.subr.mxu0 0.0
  %4040 = vmatpush2.msra.mxu0 0.0
  %4041 = vmatprep.subr.mxu0 0.0
  %4042 = vmatpush2.msra.mxu0 0.0
  %4043 = vmatprep.subr.mxu0 0.0
  %4044 = vmatpush2.msra.mxu0 0.0
  %4045 = vmatprep.subr.mxu0 0.0
  %4046 = vmatpush2.msra.mxu0 0.0
  %4047 = vmatprep.subr.mxu0 0.0
  %4048 = vmatpush2.msra.mxu0 0.0
  %4049 = vmatprep.subr.mxu0 0.0
  %4050 = vmatpush2.msra.mxu0 0.0
  %4051 = vmatprep.mubr.f32.mxu0 0.0
  %4052 = vmatmul.mubr.f32.gmra.mxu0 %v3952
  %v4053 = vpop.f32.mrf.mxu0
  %v4054 = vadd.f32 %v3949, %v4053
  %v4055 = vpop.f32.mrf.mxu0
  %4056 = vmatprep.mubr.f32.mxu0 0.0
  %4057 = vmatmul.mubr.f32.gmra.mxu0 %v3955
  %v4058 = vpop.f32.mrf.mxu0
  %v4059 = vadd.f32 %v3949, %v4058
  %v4060 = vpop.f32.mrf.mxu0
  %4061 = vmatprep.mubr.f32.mxu0 0.0
  %4062 = vmatmul.mubr.f32.gmra.mxu0 %v3958
  %v4063 = vpop.f32.mrf.mxu0
  %v4064 = vadd.f32 %v3949, %v4063
  %v4065 = vpop.f32.mrf.mxu0
  %4066 = vmatprep.mubr.f32.mxu0 0.0
  %4067 = vmatmul.mubr.f32.gmra.mxu0 %v3961
  %v4068 = vpop.f32.mrf.mxu0
  %v4069 = vadd.f32 %v3949, %v4068
  %v4070 = vpop.f32.mrf.mxu0
  %4071 = vmatprep.mubr.f32.mxu0 0.0
  %4072 = vmatmul.mubr.f32.gmra.mxu0 %v3964
  %v4073 = vpop.f32.mrf.mxu0
  %v4074 = vadd.f32 %v3949, %v4073
  %v4075 = vpop.f32.mrf.mxu0
  %4076 = vmatprep.mubr.f32.mxu0 0.0
  %4077 = vmatmul.mubr.f32.gmra.mxu0 %v3967
  %v4078 = vpop.f32.mrf.mxu0
  %v4079 = vadd.f32 %v3949, %v4078
  %v4080 = vpop.f32.mrf.mxu0
  %4081 = vmatprep.mubr.f32.mxu0 0.0
  %4082 = vmatmul.mubr.f32.gmra.mxu0 %v3970
  %v4083 = vpop.f32.mrf.mxu0
  %v4084 = vadd.f32 %v3949, %v4083
  %v4085 = vpop.f32.mrf.mxu0
  %4086 = vmatprep.mubr.f32.mxu0 0.0
  %4087 = vmatmul.mubr.f32.gmra.mxu0 %v3973
  %v4088 = vpop.f32.mrf.mxu0
  %v4089 = vadd.f32 %v3949, %v4088
  %v4090 = vpop.f32.mrf.mxu0
  %4091 = vmatprep.mubr.f32.mxu0 0.0
  %4092 = vmatmul.mubr.f32.gmra.mxu0 %v3976
  %v4093 = vpop.f32.mrf.mxu0
  %v4094 = vadd.f32 %v3949, %v4093
  %v4095 = vpop.f32.mrf.mxu0
  %4096 = vmatprep.mubr.f32.mxu0 0.0
  %4097 = vmatmul.mubr.f32.gmra.mxu0 %v3979
  %v4098 = vpop.f32.mrf.mxu0
  %v4099 = vadd.f32 %v3949, %v4098
  %v4100 = vpop.f32.mrf.mxu0
  %4101 = vmatprep.mubr.f32.mxu0 0.0
  %4102 = vmatmul.mubr.f32.gmra.mxu0 %v3982
  %v4103 = vpop.f32.mrf.mxu0
  %v4104 = vadd.f32 %v3949, %v4103
  %v4105 = vpop.f32.mrf.mxu0
  %4106 = vmatprep.mubr.f32.mxu0 0.0
  %4107 = vmatmul.mubr.f32.gmra.mxu0 %v3985
  %v4108 = vpop.f32.mrf.mxu0
  %v4109 = vadd.f32 %v3949, %v4108
  %v4110 = vpop.f32.mrf.mxu0
  %4111 = vdwg.mxu0
  %v4112 = vadd.f32 %v4054, %v4084
  %v4113 = vadd.f32 %v4059, %v4089
  %v4114 = vadd.f32 %v4064, %v4094
  %v4115 = vadd.f32 %v4069, %v4099
  %v4116 = vadd.f32 %v4074, %v4104
  %v4117 = vadd.f32 %v4079, %v4109
  %v4118 = vmul.f32 %v4112, 0.5
  %v4119 = vmul.f32 %v4113, 0.5
  %v4120 = vmul.f32 %v4114, 0.5
  %v4121 = vmul.f32 %v4115, 0.5
  %v4122 = vmul.f32 %v4116, 0.5
  %v4123 = vmul.f32 %v4117, 0.5
  %v4124 = vsub.f32 %v4054, %v4118
  %v4125 = vsub.f32 %v4059, %v4119
  %v4126 = vsub.f32 %v4064, %v4120
  %v4127 = vsub.f32 %v4069, %v4121
  %v4128 = vsub.f32 %v4074, %v4122
  %v4129 = vsub.f32 %v4079, %v4123
  %v4130 = vmul.f32 %v4124, %v4124
  %v4131 = vmul.f32 %v4125, %v4125
  %v4132 = vmul.f32 %v4126, %v4126
  %v4133 = vmul.f32 %v4127, %v4127
  %v4134 = vmul.f32 %v4128, %v4128
  %v4135 = vmul.f32 %v4129, %v4129
  %v4136 = vsub.f32 %v4084, %v4118
  %v4137 = vsub.f32 %v4089, %v4119
  %v4138 = vsub.f32 %v4094, %v4120
  %v4139 = vsub.f32 %v4099, %v4121
  %v4140 = vsub.f32 %v4104, %v4122
  %v4141 = vsub.f32 %v4109, %v4123
  %v4142 = vmul.f32 %v4136, %v4136
  %v4143 = vmul.f32 %v4137, %v4137
  %v4144 = vmul.f32 %v4138, %v4138
  %v4145 = vmul.f32 %v4139, %v4139
  %v4146 = vmul.f32 %v4140, %v4140
  %v4147 = vmul.f32 %v4141, %v4141
  %v4148 = vadd.f32 %v4130, %v4142
  %v4149 = vadd.f32 %v4131, %v4143
  %v4150 = vadd.f32 %v4132, %v4144
  %v4151 = vadd.f32 %v4133, %v4145
  %v4152 = vadd.f32 %v4134, %v4146
  %v4153 = vadd.f32 %v4135, %v4147
  %v4154 = vmul.f32 %v4148, 0.5
  %v4155 = vmul.f32 %v4149, 0.5
  %v4156 = vmul.f32 %v4150, 0.5
  %v4157 = vmul.f32 %v4151, 0.5
  %v4158 = vmul.f32 %v4152, 0.5
  %v4159 = vmul.f32 %v4153, 0.5
  %v4160 = vadd.f32 %v4154, 1e-05
  %v4161 = vadd.f32 %v4155, 1e-05
  %v4162 = vadd.f32 %v4156, 1e-05
  %v4163 = vadd.f32 %v4157, 1e-05
  %v4164 = vadd.f32 %v4158, 1e-05
  %v4165 = vadd.f32 %v4159, 1e-05
  %v4166 = vrsqrt.pop %v4160
  %v4167 = vrsqrt.pop %v4161
  %v4168 = vrsqrt.pop %v4162
  %v4169 = vrsqrt.pop %v4163
  %v4170 = vrsqrt.pop %v4164
  %v4171 = vrsqrt.pop %v4165
  %v4172 = vmul.f32 %v4124, %v4166
  %v4173 = vmul.f32 %v4125, %v4167
  %v4174 = vmul.f32 %v4126, %v4168
  %v4175 = vmul.f32 %v4127, %v4169
  %v4176 = vmul.f32 %v4128, %v4170
  %v4177 = vmul.f32 %v4129, %v4171
  %v4178 = vmul.f32 %v4172, %v3771
  %v4179 = vmul.f32 %v4173, %v3772
  %v4180 = vmul.f32 %v4174, %v3773
  %v4181 = vmul.f32 %v4175, %v3774
  %v4182 = vmul.f32 %v4176, %v3775
  %v4183 = vmul.f32 %v4177, %v3776
  %v4184 = vadd.f32 %v4178, %v3778
  %v4185 = vadd.f32 %v4179, %v3779
  %v4186 = vadd.f32 %v4180, %v3780
  %v4187 = vadd.f32 %v4181, %v3781
  %v4188 = vadd.f32 %v4182, %v3782
  %v4189 = vadd.f32 %v4183, %v3783
  %v4190 = vsub.f32 0.0, %v4184
  %v4191 = vsub.f32 0.0, %v4185
  %v4192 = vsub.f32 0.0, %v4186
  %v4193 = vsub.f32 0.0, %v4187
  %v4194 = vsub.f32 0.0, %v4188
  %v4195 = vsub.f32 0.0, %v4189
  %v4196 = vmul.f32 %v4190, 1.442695
  %v4197 = vpow.pop %v4196
  %v4198 = vmul.f32 %v4191, 1.442695
  %v4199 = vpow.pop %v4198
  %v4200 = vmul.f32 %v4192, 1.442695
  %v4201 = vpow.pop %v4200
  %v4202 = vmul.f32 %v4193, 1.442695
  %v4203 = vpow.pop %v4202
  %v4204 = vmul.f32 %v4194, 1.442695
  %v4205 = vpow.pop %v4204
  %v4206 = vmul.f32 %v4195, 1.442695
  %v4207 = vpow.pop %v4206
  %v4208 = vadd.f32 %v4197, 1.0
  %v4209 = vadd.f32 %v4199, 1.0
  %v4210 = vadd.f32 %v4201, 1.0
  %v4211 = vadd.f32 %v4203, 1.0
  %v4212 = vadd.f32 %v4205, 1.0
  %v4213 = vadd.f32 %v4207, 1.0
  %v4214 = vrcp.pop %v4208
  %v4215 = vmul.f32 1.0, %v4214
  %v4216 = vrcp.pop %v4209
  %v4217 = vmul.f32 1.0, %v4216
  %v4218 = vrcp.pop %v4210
  %v4219 = vmul.f32 1.0, %v4218
  %v4220 = vrcp.pop %v4211
  %v4221 = vmul.f32 1.0, %v4220
  %v4222 = vrcp.pop %v4212
  %v4223 = vmul.f32 1.0, %v4222
  %v4224 = vrcp.pop %v4213
  %v4225 = vmul.f32 1.0, %v4224
  %v4226 = vmul.f32 %v4136, %v4166
  %v4227 = vmul.f32 %v4137, %v4167
  %v4228 = vmul.f32 %v4138, %v4168
  %v4229 = vmul.f32 %v4139, %v4169
  %v4230 = vmul.f32 %v4140, %v4170
  %v4231 = vmul.f32 %v4141, %v4171
  %v4232 = vmul.f32 %v4226, %v3771
  %v4233 = vmul.f32 %v4227, %v3772
  %v4234 = vmul.f32 %v4228, %v3773
  %v4235 = vmul.f32 %v4229, %v3774
  %v4236 = vmul.f32 %v4230, %v3775
  %v4237 = vmul.f32 %v4231, %v3776
  %v4238 = vadd.f32 %v4232, %v3778
  %v4239 = vadd.f32 %v4233, %v3779
  %v4240 = vadd.f32 %v4234, %v3780
  %v4241 = vadd.f32 %v4235, %v3781
  %v4242 = vadd.f32 %v4236, %v3782
  %v4243 = vadd.f32 %v4237, %v3783
  %v4244 = vsub.f32 0.0, %v4238
  %v4245 = vsub.f32 0.0, %v4239
  %v4246 = vsub.f32 0.0, %v4240
  %v4247 = vsub.f32 0.0, %v4241
  %v4248 = vsub.f32 0.0, %v4242
  %v4249 = vsub.f32 0.0, %v4243
  %v4250 = vmul.f32 %v4244, 1.442695
  %v4251 = vpow.pop %v4250
  %v4252 = vmul.f32 %v4245, 1.442695
  %v4253 = vpow.pop %v4252
  %v4254 = vmul.f32 %v4246, 1.442695
  %v4255 = vpow.pop %v4254
  %v4256 = vmul.f32 %v4247, 1.442695
  %v4257 = vpow.pop %v4256
  %v4258 = vmul.f32 %v4248, 1.442695
  %v4259 = vpow.pop %v4258
  %v4260 = vmul.f32 %v4249, 1.442695
  %v4261 = vpow.pop %v4260
  %v4262 = vadd.f32 %v4251, 1.0
  %v4263 = vadd.f32 %v4253, 1.0
  %v4264 = vadd.f32 %v4255, 1.0
  %v4265 = vadd.f32 %v4257, 1.0
  %v4266 = vadd.f32 %v4259, 1.0
  %v4267 = vadd.f32 %v4261, 1.0
  %v4268 = vrcp.pop %v4262
  %v4269 = vmul.f32 1.0, %v4268
  %v4270 = vrcp.pop %v4263
  %v4271 = vmul.f32 1.0, %v4270
  %v4272 = vrcp.pop %v4264
  %v4273 = vmul.f32 1.0, %v4272
  %v4274 = vrcp.pop %v4265
  %v4275 = vmul.f32 1.0, %v4274
  %v4276 = vrcp.pop %v4266
  %v4277 = vmul.f32 1.0, %v4276
  %v4278 = vrcp.pop %v4267
  %v4279 = vmul.f32 1.0, %v4278
  %v4280 = vadd.f32 %v4215, %v1551
  %v4281 = vadd.f32 %v4217, %v1553
  %v4282 = vadd.f32 %v4219, %v1555
  %v4283 = vadd.f32 %v4221, %v1557
  %v4284 = vadd.f32 %v4223, %v1559
  %v4285 = vadd.f32 %v4225, %v1561
  %v4286 = vadd.f32 %v4269, %v1605
  %v4287 = vadd.f32 %v4271, %v1607
  %v4288 = vadd.f32 %v4273, %v1609
  %v4289 = vadd.f32 %v4275, %v1611
  %v4290 = vadd.f32 %v4277, %v1613
  %v4291 = vadd.f32 %v4279, %v1615
  %s4292 = scalar_lea.vmem %s2, 128
  %v4293 = vld [vmem:[%s4292] sm:$0xff]
  %v4294 = vld [vmem:[%s4292 + $0x8] sm:$0xff]
  %s4295 = scalar_lea.vmem %s1, 768
  %v4296 = vld [vmem:[%s4295] sm:$0xff]
  %v4297 = vld [vmem:[%s4295 + $0x8] sm:$0xff]
  %v4298 = vld [vmem:[%s4295 + $0x10] sm:$0xff]
  %v4299 = vld [vmem:[%s4295 + $0x18] sm:$0xff]
  %v4300 = vld [vmem:[%s4295 + $0x20] sm:$0xff]
  %v4301 = vld [vmem:[%s4295 + $0x28] sm:$0xff]
  %v4302 = vld [vmem:[%s4295 + $0x30] sm:$0xff]
  %v4303 = vld [vmem:[%s4295 + $0x38] sm:$0xff]
  %v4304 = vld [vmem:[%s4295 + $0x40] sm:$0xff]
  %v4305 = vld [vmem:[%s4295 + $0x48] sm:$0xff]
  %v4306 = vld [vmem:[%s4295 + $0x50] sm:$0xff]
  %v4307 = vld [vmem:[%s4295 + $0x58] sm:$0xff]
  %s4308 = scalar_lea.vmem %s3, 8
  %v4309 = vld [vmem:[%s4308] sm:$0x1]
  %s4310 = scalar_lea.vmem %s4, 384
  %v4311 = vld [vmem:[%s4310] sm:$0xff]
  %v4312 = vld [vmem:[%s4310 + $0x8] sm:$0xff]
  %v4313 = vld [vmem:[%s4310 + $0x10] sm:$0xff]
  %v4314 = vld [vmem:[%s4310 + $0x18] sm:$0xff]
  %v4315 = vld [vmem:[%s4310 + $0x20] sm:$0xff]
  %v4316 = vld [vmem:[%s4310 + $0x28] sm:$0xff]
  %s4317 = scalar_lea.vmem %s5, 384
  %v4318 = vld [vmem:[%s4317] sm:$0xff]
  %v4319 = vld [vmem:[%s4317 + $0x8] sm:$0xff]
  %v4320 = vld [vmem:[%s4317 + $0x10] sm:$0xff]
  %v4321 = vld [vmem:[%s4317 + $0x18] sm:$0xff]
  %v4322 = vld [vmem:[%s4317 + $0x20] sm:$0xff]
  %v4323 = vld [vmem:[%s4317 + $0x28] sm:$0xff]
  %v4325 = vsel %vm62, %v4280, 0
  %v4328 = vsel %vm62, %v4281, 0
  %v4331 = vsel %vm62, %v4282, 0
  %v4334 = vsel %vm62, %v4283, 0
  %v4337 = vsel %vm62, %v4284, 0
  %v4340 = vsel %vm62, %v4285, 0
  %v4343 = vsel %vm62, %v4286, 0
  %v4346 = vsel %vm62, %v4287, 0
  %v4349 = vsel %vm62, %v4288, 0
  %v4352 = vsel %vm62, %v4289, 0
  %v4355 = vsel %vm62, %v4290, 0
  %v4358 = vsel %vm62, %v4291, 0
  %4360 = vmatprep.subr.mxu0 0.0
  %4361 = vmatpush1.msra.mxu0 0.0
  %4362 = vmatprep.subr.mxu0 0.0
  %4363 = vmatpush1.msra.mxu0 0.0
  %4364 = vmatprep.subr.mxu0 0.0
  %4365 = vmatpush1.msra.mxu0 0.0
  %4366 = vmatprep.subr.mxu0 0.0
  %4367 = vmatpush1.msra.mxu0 0.0
  %4368 = vmatprep.subr.mxu0 0.0
  %4369 = vmatpush1.msra.mxu0 0.0
  %4370 = vmatprep.subr.mxu0 0.0
  %4371 = vmatpush1.msra.mxu0 0.0
  %4372 = vmatprep.subr.mxu0 0.0
  %4373 = vmatpush1.msra.mxu0 0.0
  %4374 = vmatprep.subr.mxu0 0.0
  %4375 = vmatpush1.msra.mxu0 0.0
  %4376 = vmatprep.subr.mxu0 0.0
  %4377 = vmatpush1.msra.mxu0 0.0
  %4378 = vmatprep.subr.mxu0 0.0
  %4379 = vmatpush1.msra.mxu0 0.0
  %4380 = vmatprep.subr.mxu0 0.0
  %4381 = vmatpush1.msra.mxu0 0.0
  %4382 = vmatprep.subr.mxu0 0.0
  %4383 = vmatpush1.msra.mxu0 0.0
  %4384 = vmatprep.subr.mxu0 0.0
  %4385 = vmatpush1.msra.mxu0 0.0
  %4386 = vmatprep.subr.mxu0 0.0
  %4387 = vmatpush1.msra.mxu0 0.0
  %4388 = vmatprep.subr.mxu0 0.0
  %4389 = vmatpush1.msra.mxu0 %v4294
  %4390 = vmatprep.subr.mxu0 0.0
  %4391 = vmatpush1.msra.mxu0 %v4293
  %4392 = vmatprep.subr.mxu0 0.0
  %4393 = vmatpush2.msra.mxu0 0.0
  %4394 = vmatprep.subr.mxu0 0.0
  %4395 = vmatpush2.msra.mxu0 0.0
  %4396 = vmatprep.subr.mxu0 0.0
  %4397 = vmatpush2.msra.mxu0 0.0
  %4398 = vmatprep.subr.mxu0 0.0
  %4399 = vmatpush2.msra.mxu0 0.0
  %4400 = vmatprep.subr.mxu0 0.0
  %4401 = vmatpush2.msra.mxu0 0.0
  %4402 = vmatprep.subr.mxu0 0.0
  %4403 = vmatpush2.msra.mxu0 0.0
  %4404 = vmatprep.subr.mxu0 0.0
  %4405 = vmatpush2.msra.mxu0 0.0
  %4406 = vmatprep.subr.mxu0 0.0
  %4407 = vmatpush2.msra.mxu0 0.0
  %4408 = vmatprep.subr.mxu0 0.0
  %4409 = vmatpush2.msra.mxu0 0.0
  %4410 = vmatprep.subr.mxu0 0.0
  %4411 = vmatpush2.msra.mxu0 0.0
  %4412 = vmatprep.subr.mxu0 0.0
  %4413 = vmatpush2.msra.mxu0 0.0
  %4414 = vmatprep.subr.mxu0 0.0
  %4415 = vmatpush2.msra.mxu0 0.0
  %4416 = vmatprep.subr.mxu0 0.0
  %4417 = vmatpush2.msra.mxu0 0.0
  %4418 = vmatprep.subr.mxu0 0.0
  %4419 = vmatpush2.msra.mxu0 0.0
  %4420 = vmatprep.subr.mxu0 0.0
  %4421 = vmatpush2.msra.mxu0 0.0
  %4422 = vmatprep.subr.mxu0 0.0
  %4423 = vmatpush2.msra.mxu0 0.0
  %4424 = vmatprep.mubr.f32.mxu0 0.0
  %4425 = vmatmul.mubr.f32.gmra.mxu0 %v4325
  %v4426 = vpop.f32.mrf.mxu0
  %v4427 = vadd.f32 0.0, %v4426
  %v4428 = vpop.f32.mrf.mxu0
  %4429 = vmatprep.mubr.f32.mxu0 0.0
  %4430 = vmatmul.mubr.f32.gmra.mxu0 %v4328
  %v4431 = vpop.f32.mrf.mxu0
  %v4432 = vadd.f32 0.0, %v4431
  %v4433 = vpop.f32.mrf.mxu0
  %4434 = vmatprep.mubr.f32.mxu0 0.0
  %4435 = vmatmul.mubr.f32.gmra.mxu0 %v4331
  %v4436 = vpop.f32.mrf.mxu0
  %v4437 = vadd.f32 0.0, %v4436
  %v4438 = vpop.f32.mrf.mxu0
  %4439 = vmatprep.mubr.f32.mxu0 0.0
  %4440 = vmatmul.mubr.f32.gmra.mxu0 %v4334
  %v4441 = vpop.f32.mrf.mxu0
  %v4442 = vadd.f32 0.0, %v4441
  %v4443 = vpop.f32.mrf.mxu0
  %4444 = vmatprep.mubr.f32.mxu0 0.0
  %4445 = vmatmul.mubr.f32.gmra.mxu0 %v4337
  %v4446 = vpop.f32.mrf.mxu0
  %v4447 = vadd.f32 0.0, %v4446
  %v4448 = vpop.f32.mrf.mxu0
  %4449 = vmatprep.mubr.f32.mxu0 0.0
  %4450 = vmatmul.mubr.f32.gmra.mxu0 %v4340
  %v4451 = vpop.f32.mrf.mxu0
  %v4452 = vadd.f32 0.0, %v4451
  %v4453 = vpop.f32.mrf.mxu0
  %4454 = vmatprep.mubr.f32.mxu0 0.0
  %4455 = vmatmul.mubr.f32.gmra.mxu0 %v4343
  %v4456 = vpop.f32.mrf.mxu0
  %v4457 = vadd.f32 0.0, %v4456
  %v4458 = vpop.f32.mrf.mxu0
  %4459 = vmatprep.mubr.f32.mxu0 0.0
  %4460 = vmatmul.mubr.f32.gmra.mxu0 %v4346
  %v4461 = vpop.f32.mrf.mxu0
  %v4462 = vadd.f32 0.0, %v4461
  %v4463 = vpop.f32.mrf.mxu0
  %4464 = vmatprep.mubr.f32.mxu0 0.0
  %4465 = vmatmul.mubr.f32.gmra.mxu0 %v4349
  %v4466 = vpop.f32.mrf.mxu0
  %v4467 = vadd.f32 0.0, %v4466
  %v4468 = vpop.f32.mrf.mxu0
  %4469 = vmatprep.mubr.f32.mxu0 0.0
  %4470 = vmatmul.mubr.f32.gmra.mxu0 %v4352
  %v4471 = vpop.f32.mrf.mxu0
  %v4472 = vadd.f32 0.0, %v4471
  %v4473 = vpop.f32.mrf.mxu0
  %4474 = vmatprep.mubr.f32.mxu0 0.0
  %4475 = vmatmul.mubr.f32.gmra.mxu0 %v4355
  %v4476 = vpop.f32.mrf.mxu0
  %v4477 = vadd.f32 0.0, %v4476
  %v4478 = vpop.f32.mrf.mxu0
  %4479 = vmatprep.mubr.f32.mxu0 0.0
  %4480 = vmatmul.mubr.f32.gmra.mxu0 %v4358
  %v4481 = vpop.f32.mrf.mxu0
  %v4482 = vadd.f32 0.0, %v4481
  %v4483 = vpop.f32.mrf.mxu0
  %4484 = vdwg.mxu0
  %v4486 = vlaneseq
  %v4487 = vshrl.u32 %v4486, 7
  %v4488 = vsub.s32 0, %v4487
  %v4489 = vrot.slane %v4309, %v4488
  %v4492 = vsel %vm230, %v4296, 0
  %v4495 = vsel %vm230, %v4297, 0
  %v4498 = vsel %vm230, %v4298, 0
  %v4501 = vsel %vm230, %v4299, 0
  %v4504 = vsel %vm230, %v4300, 0
  %v4507 = vsel %vm230, %v4301, 0
  %v4510 = vsel %vm230, %v4302, 0
  %v4513 = vsel %vm230, %v4303, 0
  %v4516 = vsel %vm230, %v4304, 0
  %v4519 = vsel %vm230, %v4305, 0
  %v4522 = vsel %vm230, %v4306, 0
  %v4525 = vsel %vm230, %v4307, 0
  %4527 = vmatprep.subr.mxu0 0.0
  %4528 = vmatpush1.msra.mxu0 0.0
  %4529 = vmatprep.subr.mxu0 0.0
  %4530 = vmatpush1.msra.mxu0 0.0
  %4531 = vmatprep.subr.mxu0 0.0
  %4532 = vmatpush1.msra.mxu0 0.0
  %4533 = vmatprep.subr.mxu0 0.0
  %4534 = vmatpush1.msra.mxu0 0.0
  %4535 = vmatprep.subr.mxu0 0.0
  %4536 = vmatpush1.msra.mxu0 %v4482
  %4537 = vmatprep.subr.mxu0 0.0
  %4538 = vmatpush1.msra.mxu0 %v4477
  %4539 = vmatprep.subr.mxu0 0.0
  %4540 = vmatpush1.msra.mxu0 %v4472
  %4541 = vmatprep.subr.mxu0 0.0
  %4542 = vmatpush1.msra.mxu0 %v4467
  %4543 = vmatprep.subr.mxu0 0.0
  %4544 = vmatpush1.msra.mxu0 %v4462
  %4545 = vmatprep.subr.mxu0 0.0
  %4546 = vmatpush1.msra.mxu0 %v4457
  %4547 = vmatprep.subr.mxu0 0.0
  %4548 = vmatpush1.msra.mxu0 %v4452
  %4549 = vmatprep.subr.mxu0 0.0
  %4550 = vmatpush1.msra.mxu0 %v4447
  %4551 = vmatprep.subr.mxu0 0.0
  %4552 = vmatpush1.msra.mxu0 %v4442
  %4553 = vmatprep.subr.mxu0 0.0
  %4554 = vmatpush1.msra.mxu0 %v4437
  %4555 = vmatprep.subr.mxu0 0.0
  %4556 = vmatpush1.msra.mxu0 %v4432
  %4557 = vmatprep.subr.mxu0 0.0
  %4558 = vmatpush1.msra.mxu0 %v4427
  %4559 = vmatprep.subr.mxu0 0.0
  %4560 = vmatpush2.msra.mxu0 0.0
  %4561 = vmatprep.subr.mxu0 0.0
  %4562 = vmatpush2.msra.mxu0 0.0
  %4563 = vmatprep.subr.mxu0 0.0
  %4564 = vmatpush2.msra.mxu0 0.0
  %4565 = vmatprep.subr.mxu0 0.0
  %4566 = vmatpush2.msra.mxu0 0.0
  %4567 = vmatprep.subr.mxu0 0.0
  %4568 = vmatpush2.msra.mxu0 0.0
  %4569 = vmatprep.subr.mxu0 0.0
  %4570 = vmatpush2.msra.mxu0 0.0
  %4571 = vmatprep.subr.mxu0 0.0
  %4572 = vmatpush2.msra.mxu0 0.0
  %4573 = vmatprep.subr.mxu0 0.0
  %4574 = vmatpush2.msra.mxu0 0.0
  %4575 = vmatprep.subr.mxu0 0.0
  %4576 = vmatpush2.msra.mxu0 0.0
  %4577 = vmatprep.subr.mxu0 0.0
  %4578 = vmatpush2.msra.mxu0 0.0
  %4579 = vmatprep.subr.mxu0 0.0
  %4580 = vmatpush2.msra.mxu0 0.0
  %4581 = vmatprep.subr.mxu0 0.0
  %4582 = vmatpush2.msra.mxu0 0.0
  %4583 = vmatprep.subr.mxu0 0.0
  %4584 = vmatpush2.msra.mxu0 0.0
  %4585 = vmatprep.subr.mxu0 0.0
  %4586 = vmatpush2.msra.mxu0 0.0
  %4587 = vmatprep.subr.mxu0 0.0
  %4588 = vmatpush2.msra.mxu0 0.0
  %4589 = vmatprep.subr.mxu0 0.0
  %4590 = vmatpush2.msra.mxu0 0.0
  %4591 = vmatprep.mubr.f32.mxu0 0.0
  %4592 = vmatmul.mubr.f32.gmra.mxu0 %v4492
  %v4593 = vpop.f32.mrf.mxu0
  %v4594 = vadd.f32 %v4489, %v4593
  %v4595 = vpop.f32.mrf.mxu0
  %4596 = vmatprep.mubr.f32.mxu0 0.0
  %4597 = vmatmul.mubr.f32.gmra.mxu0 %v4495
  %v4598 = vpop.f32.mrf.mxu0
  %v4599 = vadd.f32 %v4489, %v4598
  %v4600 = vpop.f32.mrf.mxu0
  %4601 = vmatprep.mubr.f32.mxu0 0.0
  %4602 = vmatmul.mubr.f32.gmra.mxu0 %v4498
  %v4603 = vpop.f32.mrf.mxu0
  %v4604 = vadd.f32 %v4489, %v4603
  %v4605 = vpop.f32.mrf.mxu0
  %4606 = vmatprep.mubr.f32.mxu0 0.0
  %4607 = vmatmul.mubr.f32.gmra.mxu0 %v4501
  %v4608 = vpop.f32.mrf.mxu0
  %v4609 = vadd.f32 %v4489, %v4608
  %v4610 = vpop.f32.mrf.mxu0
  %4611 = vmatprep.mubr.f32.mxu0 0.0
  %4612 = vmatmul.mubr.f32.gmra.mxu0 %v4504
  %v4613 = vpop.f32.mrf.mxu0
  %v4614 = vadd.f32 %v4489, %v4613
  %v4615 = vpop.f32.mrf.mxu0
  %4616 = vmatprep.mubr.f32.mxu0 0.0
  %4617 = vmatmul.mubr.f32.gmra.mxu0 %v4507
  %v4618 = vpop.f32.mrf.mxu0
  %v4619 = vadd.f32 %v4489, %v4618
  %v4620 = vpop.f32.mrf.mxu0
  %4621 = vmatprep.mubr.f32.mxu0 0.0
  %4622 = vmatmul.mubr.f32.gmra.mxu0 %v4510
  %v4623 = vpop.f32.mrf.mxu0
  %v4624 = vadd.f32 %v4489, %v4623
  %v4625 = vpop.f32.mrf.mxu0
  %4626 = vmatprep.mubr.f32.mxu0 0.0
  %4627 = vmatmul.mubr.f32.gmra.mxu0 %v4513
  %v4628 = vpop.f32.mrf.mxu0
  %v4629 = vadd.f32 %v4489, %v4628
  %v4630 = vpop.f32.mrf.mxu0
  %4631 = vmatprep.mubr.f32.mxu0 0.0
  %4632 = vmatmul.mubr.f32.gmra.mxu0 %v4516
  %v4633 = vpop.f32.mrf.mxu0
  %v4634 = vadd.f32 %v4489, %v4633
  %v4635 = vpop.f32.mrf.mxu0
  %4636 = vmatprep.mubr.f32.mxu0 0.0
  %4637 = vmatmul.mubr.f32.gmra.mxu0 %v4519
  %v4638 = vpop.f32.mrf.mxu0
  %v4639 = vadd.f32 %v4489, %v4638
  %v4640 = vpop.f32.mrf.mxu0
  %4641 = vmatprep.mubr.f32.mxu0 0.0
  %4642 = vmatmul.mubr.f32.gmra.mxu0 %v4522
  %v4643 = vpop.f32.mrf.mxu0
  %v4644 = vadd.f32 %v4489, %v4643
  %v4645 = vpop.f32.mrf.mxu0
  %4646 = vmatprep.mubr.f32.mxu0 0.0
  %4647 = vmatmul.mubr.f32.gmra.mxu0 %v4525
  %v4648 = vpop.f32.mrf.mxu0
  %v4649 = vadd.f32 %v4489, %v4648
  %v4650 = vpop.f32.mrf.mxu0
  %4651 = vdwg.mxu0
  %v4652 = vadd.f32 %v4594, %v4624
  %v4653 = vadd.f32 %v4599, %v4629
  %v4654 = vadd.f32 %v4604, %v4634
  %v4655 = vadd.f32 %v4609, %v4639
  %v4656 = vadd.f32 %v4614, %v4644
  %v4657 = vadd.f32 %v4619, %v4649
  %v4658 = vmul.f32 %v4652, 0.5
  %v4659 = vmul.f32 %v4653, 0.5
  %v4660 = vmul.f32 %v4654, 0.5
  %v4661 = vmul.f32 %v4655, 0.5
  %v4662 = vmul.f32 %v4656, 0.5
  %v4663 = vmul.f32 %v4657, 0.5
  %v4664 = vsub.f32 %v4594, %v4658
  %v4665 = vsub.f32 %v4599, %v4659
  %v4666 = vsub.f32 %v4604, %v4660
  %v4667 = vsub.f32 %v4609, %v4661
  %v4668 = vsub.f32 %v4614, %v4662
  %v4669 = vsub.f32 %v4619, %v4663
  %v4670 = vmul.f32 %v4664, %v4664
  %v4671 = vmul.f32 %v4665, %v4665
  %v4672 = vmul.f32 %v4666, %v4666
  %v4673 = vmul.f32 %v4667, %v4667
  %v4674 = vmul.f32 %v4668, %v4668
  %v4675 = vmul.f32 %v4669, %v4669
  %v4676 = vsub.f32 %v4624, %v4658
  %v4677 = vsub.f32 %v4629, %v4659
  %v4678 = vsub.f32 %v4634, %v4660
  %v4679 = vsub.f32 %v4639, %v4661
  %v4680 = vsub.f32 %v4644, %v4662
  %v4681 = vsub.f32 %v4649, %v4663
  %v4682 = vmul.f32 %v4676, %v4676
  %v4683 = vmul.f32 %v4677, %v4677
  %v4684 = vmul.f32 %v4678, %v4678
  %v4685 = vmul.f32 %v4679, %v4679
  %v4686 = vmul.f32 %v4680, %v4680
  %v4687 = vmul.f32 %v4681, %v4681
  %v4688 = vadd.f32 %v4670, %v4682
  %v4689 = vadd.f32 %v4671, %v4683
  %v4690 = vadd.f32 %v4672, %v4684
  %v4691 = vadd.f32 %v4673, %v4685
  %v4692 = vadd.f32 %v4674, %v4686
  %v4693 = vadd.f32 %v4675, %v4687
  %v4694 = vmul.f32 %v4688, 0.5
  %v4695 = vmul.f32 %v4689, 0.5
  %v4696 = vmul.f32 %v4690, 0.5
  %v4697 = vmul.f32 %v4691, 0.5
  %v4698 = vmul.f32 %v4692, 0.5
  %v4699 = vmul.f32 %v4693, 0.5
  %v4700 = vadd.f32 %v4694, 1e-05
  %v4701 = vadd.f32 %v4695, 1e-05
  %v4702 = vadd.f32 %v4696, 1e-05
  %v4703 = vadd.f32 %v4697, 1e-05
  %v4704 = vadd.f32 %v4698, 1e-05
  %v4705 = vadd.f32 %v4699, 1e-05
  %v4706 = vrsqrt.pop %v4700
  %v4707 = vrsqrt.pop %v4701
  %v4708 = vrsqrt.pop %v4702
  %v4709 = vrsqrt.pop %v4703
  %v4710 = vrsqrt.pop %v4704
  %v4711 = vrsqrt.pop %v4705
  %v4712 = vmul.f32 %v4664, %v4706
  %v4713 = vmul.f32 %v4665, %v4707
  %v4714 = vmul.f32 %v4666, %v4708
  %v4715 = vmul.f32 %v4667, %v4709
  %v4716 = vmul.f32 %v4668, %v4710
  %v4717 = vmul.f32 %v4669, %v4711
  %v4718 = vmul.f32 %v4712, %v4311
  %v4719 = vmul.f32 %v4713, %v4312
  %v4720 = vmul.f32 %v4714, %v4313
  %v4721 = vmul.f32 %v4715, %v4314
  %v4722 = vmul.f32 %v4716, %v4315
  %v4723 = vmul.f32 %v4717, %v4316
  %v4724 = vadd.f32 %v4718, %v4318
  %v4725 = vadd.f32 %v4719, %v4319
  %v4726 = vadd.f32 %v4720, %v4320
  %v4727 = vadd.f32 %v4721, %v4321
  %v4728 = vadd.f32 %v4722, %v4322
  %v4729 = vadd.f32 %v4723, %v4323
  %v4730 = vsub.f32 0.0, %v4724
  %v4731 = vsub.f32 0.0, %v4725
  %v4732 = vsub.f32 0.0, %v4726
  %v4733 = vsub.f32 0.0, %v4727
  %v4734 = vsub.f32 0.0, %v4728
  %v4735 = vsub.f32 0.0, %v4729
  %v4736 = vmul.f32 %v4730, 1.442695
  %v4737 = vpow.pop %v4736
  %v4738 = vmul.f32 %v4731, 1.442695
  %v4739 = vpow.pop %v4738
  %v4740 = vmul.f32 %v4732, 1.442695
  %v4741 = vpow.pop %v4740
  %v4742 = vmul.f32 %v4733, 1.442695
  %v4743 = vpow.pop %v4742
  %v4744 = vmul.f32 %v4734, 1.442695
  %v4745 = vpow.pop %v4744
  %v4746 = vmul.f32 %v4735, 1.442695
  %v4747 = vpow.pop %v4746
  %v4748 = vadd.f32 %v4737, 1.0
  %v4749 = vadd.f32 %v4739, 1.0
  %v4750 = vadd.f32 %v4741, 1.0
  %v4751 = vadd.f32 %v4743, 1.0
  %v4752 = vadd.f32 %v4745, 1.0
  %v4753 = vadd.f32 %v4747, 1.0
  %v4754 = vrcp.pop %v4748
  %v4755 = vmul.f32 1.0, %v4754
  %v4756 = vrcp.pop %v4749
  %v4757 = vmul.f32 1.0, %v4756
  %v4758 = vrcp.pop %v4750
  %v4759 = vmul.f32 1.0, %v4758
  %v4760 = vrcp.pop %v4751
  %v4761 = vmul.f32 1.0, %v4760
  %v4762 = vrcp.pop %v4752
  %v4763 = vmul.f32 1.0, %v4762
  %v4764 = vrcp.pop %v4753
  %v4765 = vmul.f32 1.0, %v4764
  %v4766 = vmul.f32 %v4676, %v4706
  %v4767 = vmul.f32 %v4677, %v4707
  %v4768 = vmul.f32 %v4678, %v4708
  %v4769 = vmul.f32 %v4679, %v4709
  %v4770 = vmul.f32 %v4680, %v4710
  %v4771 = vmul.f32 %v4681, %v4711
  %v4772 = vmul.f32 %v4766, %v4311
  %v4773 = vmul.f32 %v4767, %v4312
  %v4774 = vmul.f32 %v4768, %v4313
  %v4775 = vmul.f32 %v4769, %v4314
  %v4776 = vmul.f32 %v4770, %v4315
  %v4777 = vmul.f32 %v4771, %v4316
  %v4778 = vadd.f32 %v4772, %v4318
  %v4779 = vadd.f32 %v4773, %v4319
  %v4780 = vadd.f32 %v4774, %v4320
  %v4781 = vadd.f32 %v4775, %v4321
  %v4782 = vadd.f32 %v4776, %v4322
  %v4783 = vadd.f32 %v4777, %v4323
  %v4784 = vsub.f32 0.0, %v4778
  %v4785 = vsub.f32 0.0, %v4779
  %v4786 = vsub.f32 0.0, %v4780
  %v4787 = vsub.f32 0.0, %v4781
  %v4788 = vsub.f32 0.0, %v4782
  %v4789 = vsub.f32 0.0, %v4783
  %v4790 = vmul.f32 %v4784, 1.442695
  %v4791 = vpow.pop %v4790
  %v4792 = vmul.f32 %v4785, 1.442695
  %v4793 = vpow.pop %v4792
  %v4794 = vmul.f32 %v4786, 1.442695
  %v4795 = vpow.pop %v4794
  %v4796 = vmul.f32 %v4787, 1.442695
  %v4797 = vpow.pop %v4796
  %v4798 = vmul.f32 %v4788, 1.442695
  %v4799 = vpow.pop %v4798
  %v4800 = vmul.f32 %v4789, 1.442695
  %v4801 = vpow.pop %v4800
  %v4802 = vadd.f32 %v4791, 1.0
  %v4803 = vadd.f32 %v4793, 1.0
  %v4804 = vadd.f32 %v4795, 1.0
  %v4805 = vadd.f32 %v4797, 1.0
  %v4806 = vadd.f32 %v4799, 1.0
  %v4807 = vadd.f32 %v4801, 1.0
  %v4808 = vrcp.pop %v4802
  %v4809 = vmul.f32 1.0, %v4808
  %v4810 = vrcp.pop %v4803
  %v4811 = vmul.f32 1.0, %v4810
  %v4812 = vrcp.pop %v4804
  %v4813 = vmul.f32 1.0, %v4812
  %v4814 = vrcp.pop %v4805
  %v4815 = vmul.f32 1.0, %v4814
  %v4816 = vrcp.pop %v4806
  %v4817 = vmul.f32 1.0, %v4816
  %v4818 = vrcp.pop %v4807
  %v4819 = vmul.f32 1.0, %v4818
  %v4820 = vadd.f32 %v4755, %v1023
  %v4821 = vadd.f32 %v4757, %v1025
  %v4822 = vadd.f32 %v4759, %v1027
  %v4823 = vadd.f32 %v4761, %v1029
  %v4824 = vadd.f32 %v4763, %v1031
  %v4825 = vadd.f32 %v4765, %v1033
  %v4826 = vadd.f32 %v4809, %v1077
  %v4827 = vadd.f32 %v4811, %v1079
  %v4828 = vadd.f32 %v4813, %v1081
  %v4829 = vadd.f32 %v4815, %v1083
  %v4830 = vadd.f32 %v4817, %v1085
  %v4831 = vadd.f32 %v4819, %v1087
  %s4832 = scalar_lea.vmem %s2, 144
  %v4833 = vld [vmem:[%s4832] sm:$0xff]
  %v4834 = vld [vmem:[%s4832 + $0x8] sm:$0xff]
  %s4835 = scalar_lea.vmem %s1, 864
  %v4836 = vld [vmem:[%s4835] sm:$0xff]
  %v4837 = vld [vmem:[%s4835 + $0x8] sm:$0xff]
  %v4838 = vld [vmem:[%s4835 + $0x10] sm:$0xff]
  %v4839 = vld [vmem:[%s4835 + $0x18] sm:$0xff]
  %v4840 = vld [vmem:[%s4835 + $0x20] sm:$0xff]
  %v4841 = vld [vmem:[%s4835 + $0x28] sm:$0xff]
  %v4842 = vld [vmem:[%s4835 + $0x30] sm:$0xff]
  %v4843 = vld [vmem:[%s4835 + $0x38] sm:$0xff]
  %v4844 = vld [vmem:[%s4835 + $0x40] sm:$0xff]
  %v4845 = vld [vmem:[%s4835 + $0x48] sm:$0xff]
  %v4846 = vld [vmem:[%s4835 + $0x50] sm:$0xff]
  %v4847 = vld [vmem:[%s4835 + $0x58] sm:$0xff]
  %s4848 = scalar_lea.vmem %s3, 9
  %v4849 = vld [vmem:[%s4848] sm:$0x1]
  %s4850 = scalar_lea.vmem %s4, 432
  %v4851 = vld [vmem:[%s4850] sm:$0xff]
  %v4852 = vld [vmem:[%s4850 + $0x8] sm:$0xff]
  %v4853 = vld [vmem:[%s4850 + $0x10] sm:$0xff]
  %v4854 = vld [vmem:[%s4850 + $0x18] sm:$0xff]
  %v4855 = vld [vmem:[%s4850 + $0x20] sm:$0xff]
  %v4856 = vld [vmem:[%s4850 + $0x28] sm:$0xff]
  %s4857 = scalar_lea.vmem %s5, 432
  %v4858 = vld [vmem:[%s4857] sm:$0xff]
  %v4859 = vld [vmem:[%s4857 + $0x8] sm:$0xff]
  %v4860 = vld [vmem:[%s4857 + $0x10] sm:$0xff]
  %v4861 = vld [vmem:[%s4857 + $0x18] sm:$0xff]
  %v4862 = vld [vmem:[%s4857 + $0x20] sm:$0xff]
  %v4863 = vld [vmem:[%s4857 + $0x28] sm:$0xff]
  %v4865 = vsel %vm62, %v4820, 0
  %v4868 = vsel %vm62, %v4821, 0
  %v4871 = vsel %vm62, %v4822, 0
  %v4874 = vsel %vm62, %v4823, 0
  %v4877 = vsel %vm62, %v4824, 0
  %v4880 = vsel %vm62, %v4825, 0
  %v4883 = vsel %vm62, %v4826, 0
  %v4886 = vsel %vm62, %v4827, 0
  %v4889 = vsel %vm62, %v4828, 0
  %v4892 = vsel %vm62, %v4829, 0
  %v4895 = vsel %vm62, %v4830, 0
  %v4898 = vsel %vm62, %v4831, 0
  %4900 = vmatprep.subr.mxu0 0.0
  %4901 = vmatpush1.msra.mxu0 0.0
  %4902 = vmatprep.subr.mxu0 0.0
  %4903 = vmatpush1.msra.mxu0 0.0
  %4904 = vmatprep.subr.mxu0 0.0
  %4905 = vmatpush1.msra.mxu0 0.0
  %4906 = vmatprep.subr.mxu0 0.0
  %4907 = vmatpush1.msra.mxu0 0.0
  %4908 = vmatprep.subr.mxu0 0.0
  %4909 = vmatpush1.msra.mxu0 0.0
  %4910 = vmatprep.subr.mxu0 0.0
  %4911 = vmatpush1.msra.mxu0 0.0
  %4912 = vmatprep.subr.mxu0 0.0
  %4913 = vmatpush1.msra.mxu0 0.0
  %4914 = vmatprep.subr.mxu0 0.0
  %4915 = vmatpush1.msra.mxu0 0.0
  %4916 = vmatprep.subr.mxu0 0.0
  %4917 = vmatpush1.msra.mxu0 0.0
  %4918 = vmatprep.subr.mxu0 0.0
  %4919 = vmatpush1.msra.mxu0 0.0
  %4920 = vmatprep.subr.mxu0 0.0
  %4921 = vmatpush1.msra.mxu0 0.0
  %4922 = vmatprep.subr.mxu0 0.0
  %4923 = vmatpush1.msra.mxu0 0.0
  %4924 = vmatprep.subr.mxu0 0.0
  %4925 = vmatpush1.msra.mxu0 0.0
  %4926 = vmatprep.subr.mxu0 0.0
  %4927 = vmatpush1.msra.mxu0 0.0
  %4928 = vmatprep.subr.mxu0 0.0
  %4929 = vmatpush1.msra.mxu0 %v4834
  %4930 = vmatprep.subr.mxu0 0.0
  %4931 = vmatpush1.msra.mxu0 %v4833
  %4932 = vmatprep.subr.mxu0 0.0
  %4933 = vmatpush2.msra.mxu0 0.0
  %4934 = vmatprep.subr.mxu0 0.0
  %4935 = vmatpush2.msra.mxu0 0.0
  %4936 = vmatprep.subr.mxu0 0.0
  %4937 = vmatpush2.msra.mxu0 0.0
  %4938 = vmatprep.subr.mxu0 0.0
  %4939 = vmatpush2.msra.mxu0 0.0
  %4940 = vmatprep.subr.mxu0 0.0
  %4941 = vmatpush2.msra.mxu0 0.0
  %4942 = vmatprep.subr.mxu0 0.0
  %4943 = vmatpush2.msra.mxu0 0.0
  %4944 = vmatprep.subr.mxu0 0.0
  %4945 = vmatpush2.msra.mxu0 0.0
  %4946 = vmatprep.subr.mxu0 0.0
  %4947 = vmatpush2.msra.mxu0 0.0
  %4948 = vmatprep.subr.mxu0 0.0
  %4949 = vmatpush2.msra.mxu0 0.0
  %4950 = vmatprep.subr.mxu0 0.0
  %4951 = vmatpush2.msra.mxu0 0.0
  %4952 = vmatprep.subr.mxu0 0.0
  %4953 = vmatpush2.msra.mxu0 0.0
  %4954 = vmatprep.subr.mxu0 0.0
  %4955 = vmatpush2.msra.mxu0 0.0
  %4956 = vmatprep.subr.mxu0 0.0
  %4957 = vmatpush2.msra.mxu0 0.0
  %4958 = vmatprep.subr.mxu0 0.0
  %4959 = vmatpush2.msra.mxu0 0.0
  %4960 = vmatprep.subr.mxu0 0.0
  %4961 = vmatpush2.msra.mxu0 0.0
  %4962 = vmatprep.subr.mxu0 0.0
  %4963 = vmatpush2.msra.mxu0 0.0
  %4964 = vmatprep.mubr.f32.mxu0 0.0
  %4965 = vmatmul.mubr.f32.gmra.mxu0 %v4865
  %v4966 = vpop.f32.mrf.mxu0
  %v4967 = vadd.f32 0.0, %v4966
  %v4968 = vpop.f32.mrf.mxu0
  %4969 = vmatprep.mubr.f32.mxu0 0.0
  %4970 = vmatmul.mubr.f32.gmra.mxu0 %v4868
  %v4971 = vpop.f32.mrf.mxu0
  %v4972 = vadd.f32 0.0, %v4971
  %v4973 = vpop.f32.mrf.mxu0
  %4974 = vmatprep.mubr.f32.mxu0 0.0
  %4975 = vmatmul.mubr.f32.gmra.mxu0 %v4871
  %v4976 = vpop.f32.mrf.mxu0
  %v4977 = vadd.f32 0.0, %v4976
  %v4978 = vpop.f32.mrf.mxu0
  %4979 = vmatprep.mubr.f32.mxu0 0.0
  %4980 = vmatmul.mubr.f32.gmra.mxu0 %v4874
  %v4981 = vpop.f32.mrf.mxu0
  %v4982 = vadd.f32 0.0, %v4981
  %v4983 = vpop.f32.mrf.mxu0
  %4984 = vmatprep.mubr.f32.mxu0 0.0
  %4985 = vmatmul.mubr.f32.gmra.mxu0 %v4877
  %v4986 = vpop.f32.mrf.mxu0
  %v4987 = vadd.f32 0.0, %v4986
  %v4988 = vpop.f32.mrf.mxu0
  %4989 = vmatprep.mubr.f32.mxu0 0.0
  %4990 = vmatmul.mubr.f32.gmra.mxu0 %v4880
  %v4991 = vpop.f32.mrf.mxu0
  %v4992 = vadd.f32 0.0, %v4991
  %v4993 = vpop.f32.mrf.mxu0
  %4994 = vmatprep.mubr.f32.mxu0 0.0
  %4995 = vmatmul.mubr.f32.gmra.mxu0 %v4883
  %v4996 = vpop.f32.mrf.mxu0
  %v4997 = vadd.f32 0.0, %v4996
  %v4998 = vpop.f32.mrf.mxu0
  %4999 = vmatprep.mubr.f32.mxu0 0.0
  %5000 = vmatmul.mubr.f32.gmra.mxu0 %v4886
  %v5001 = vpop.f32.mrf.mxu0
  %v5002 = vadd.f32 0.0, %v5001
  %v5003 = vpop.f32.mrf.mxu0
  %5004 = vmatprep.mubr.f32.mxu0 0.0
  %5005 = vmatmul.mubr.f32.gmra.mxu0 %v4889
  %v5006 = vpop.f32.mrf.mxu0
  %v5007 = vadd.f32 0.0, %v5006
  %v5008 = vpop.f32.mrf.mxu0
  %5009 = vmatprep.mubr.f32.mxu0 0.0
  %5010 = vmatmul.mubr.f32.gmra.mxu0 %v4892
  %v5011 = vpop.f32.mrf.mxu0
  %v5012 = vadd.f32 0.0, %v5011
  %v5013 = vpop.f32.mrf.mxu0
  %5014 = vmatprep.mubr.f32.mxu0 0.0
  %5015 = vmatmul.mubr.f32.gmra.mxu0 %v4895
  %v5016 = vpop.f32.mrf.mxu0
  %v5017 = vadd.f32 0.0, %v5016
  %v5018 = vpop.f32.mrf.mxu0
  %5019 = vmatprep.mubr.f32.mxu0 0.0
  %5020 = vmatmul.mubr.f32.gmra.mxu0 %v4898
  %v5021 = vpop.f32.mrf.mxu0
  %v5022 = vadd.f32 0.0, %v5021
  %v5023 = vpop.f32.mrf.mxu0
  %5024 = vdwg.mxu0
  %v5026 = vlaneseq
  %v5027 = vshrl.u32 %v5026, 7
  %v5028 = vsub.s32 0, %v5027
  %v5029 = vrot.slane %v4849, %v5028
  %v5032 = vsel %vm230, %v4836, 0
  %v5035 = vsel %vm230, %v4837, 0
  %v5038 = vsel %vm230, %v4838, 0
  %v5041 = vsel %vm230, %v4839, 0
  %v5044 = vsel %vm230, %v4840, 0
  %v5047 = vsel %vm230, %v4841, 0
  %v5050 = vsel %vm230, %v4842, 0
  %v5053 = vsel %vm230, %v4843, 0
  %v5056 = vsel %vm230, %v4844, 0
  %v5059 = vsel %vm230, %v4845, 0
  %v5062 = vsel %vm230, %v4846, 0
  %v5065 = vsel %vm230, %v4847, 0
  %5067 = vmatprep.subr.mxu0 0.0
  %5068 = vmatpush1.msra.mxu0 0.0
  %5069 = vmatprep.subr.mxu0 0.0
  %5070 = vmatpush1.msra.mxu0 0.0
  %5071 = vmatprep.subr.mxu0 0.0
  %5072 = vmatpush1.msra.mxu0 0.0
  %5073 = vmatprep.subr.mxu0 0.0
  %5074 = vmatpush1.msra.mxu0 0.0
  %5075 = vmatprep.subr.mxu0 0.0
  %5076 = vmatpush1.msra.mxu0 %v5022
  %5077 = vmatprep.subr.mxu0 0.0
  %5078 = vmatpush1.msra.mxu0 %v5017
  %5079 = vmatprep.subr.mxu0 0.0
  %5080 = vmatpush1.msra.mxu0 %v5012
  %5081 = vmatprep.subr.mxu0 0.0
  %5082 = vmatpush1.msra.mxu0 %v5007
  %5083 = vmatprep.subr.mxu0 0.0
  %5084 = vmatpush1.msra.mxu0 %v5002
  %5085 = vmatprep.subr.mxu0 0.0
  %5086 = vmatpush1.msra.mxu0 %v4997
  %5087 = vmatprep.subr.mxu0 0.0
  %5088 = vmatpush1.msra.mxu0 %v4992
  %5089 = vmatprep.subr.mxu0 0.0
  %5090 = vmatpush1.msra.mxu0 %v4987
  %5091 = vmatprep.subr.mxu0 0.0
  %5092 = vmatpush1.msra.mxu0 %v4982
  %5093 = vmatprep.subr.mxu0 0.0
  %5094 = vmatpush1.msra.mxu0 %v4977
  %5095 = vmatprep.subr.mxu0 0.0
  %5096 = vmatpush1.msra.mxu0 %v4972
  %5097 = vmatprep.subr.mxu0 0.0
  %5098 = vmatpush1.msra.mxu0 %v4967
  %5099 = vmatprep.subr.mxu0 0.0
  %5100 = vmatpush2.msra.mxu0 0.0
  %5101 = vmatprep.subr.mxu0 0.0
  %5102 = vmatpush2.msra.mxu0 0.0
  %5103 = vmatprep.subr.mxu0 0.0
  %5104 = vmatpush2.msra.mxu0 0.0
  %5105 = vmatprep.subr.mxu0 0.0
  %5106 = vmatpush2.msra.mxu0 0.0
  %5107 = vmatprep.subr.mxu0 0.0
  %5108 = vmatpush2.msra.mxu0 0.0
  %5109 = vmatprep.subr.mxu0 0.0
  %5110 = vmatpush2.msra.mxu0 0.0
  %5111 = vmatprep.subr.mxu0 0.0
  %5112 = vmatpush2.msra.mxu0 0.0
  %5113 = vmatprep.subr.mxu0 0.0
  %5114 = vmatpush2.msra.mxu0 0.0
  %5115 = vmatprep.subr.mxu0 0.0
  %5116 = vmatpush2.msra.mxu0 0.0
  %5117 = vmatprep.subr.mxu0 0.0
  %5118 = vmatpush2.msra.mxu0 0.0
  %5119 = vmatprep.subr.mxu0 0.0
  %5120 = vmatpush2.msra.mxu0 0.0
  %5121 = vmatprep.subr.mxu0 0.0
  %5122 = vmatpush2.msra.mxu0 0.0
  %5123 = vmatprep.subr.mxu0 0.0
  %5124 = vmatpush2.msra.mxu0 0.0
  %5125 = vmatprep.subr.mxu0 0.0
  %5126 = vmatpush2.msra.mxu0 0.0
  %5127 = vmatprep.subr.mxu0 0.0
  %5128 = vmatpush2.msra.mxu0 0.0
  %5129 = vmatprep.subr.mxu0 0.0
  %5130 = vmatpush2.msra.mxu0 0.0
  %5131 = vmatprep.mubr.f32.mxu0 0.0
  %5132 = vmatmul.mubr.f32.gmra.mxu0 %v5032
  %v5133 = vpop.f32.mrf.mxu0
  %v5134 = vadd.f32 %v5029, %v5133
  %v5135 = vpop.f32.mrf.mxu0
  %5136 = vmatprep.mubr.f32.mxu0 0.0
  %5137 = vmatmul.mubr.f32.gmra.mxu0 %v5035
  %v5138 = vpop.f32.mrf.mxu0
  %v5139 = vadd.f32 %v5029, %v5138
  %v5140 = vpop.f32.mrf.mxu0
  %5141 = vmatprep.mubr.f32.mxu0 0.0
  %5142 = vmatmul.mubr.f32.gmra.mxu0 %v5038
  %v5143 = vpop.f32.mrf.mxu0
  %v5144 = vadd.f32 %v5029, %v5143
  %v5145 = vpop.f32.mrf.mxu0
  %5146 = vmatprep.mubr.f32.mxu0 0.0
  %5147 = vmatmul.mubr.f32.gmra.mxu0 %v5041
  %v5148 = vpop.f32.mrf.mxu0
  %v5149 = vadd.f32 %v5029, %v5148
  %v5150 = vpop.f32.mrf.mxu0
  %5151 = vmatprep.mubr.f32.mxu0 0.0
  %5152 = vmatmul.mubr.f32.gmra.mxu0 %v5044
  %v5153 = vpop.f32.mrf.mxu0
  %v5154 = vadd.f32 %v5029, %v5153
  %v5155 = vpop.f32.mrf.mxu0
  %5156 = vmatprep.mubr.f32.mxu0 0.0
  %5157 = vmatmul.mubr.f32.gmra.mxu0 %v5047
  %v5158 = vpop.f32.mrf.mxu0
  %v5159 = vadd.f32 %v5029, %v5158
  %v5160 = vpop.f32.mrf.mxu0
  %5161 = vmatprep.mubr.f32.mxu0 0.0
  %5162 = vmatmul.mubr.f32.gmra.mxu0 %v5050
  %v5163 = vpop.f32.mrf.mxu0
  %v5164 = vadd.f32 %v5029, %v5163
  %v5165 = vpop.f32.mrf.mxu0
  %5166 = vmatprep.mubr.f32.mxu0 0.0
  %5167 = vmatmul.mubr.f32.gmra.mxu0 %v5053
  %v5168 = vpop.f32.mrf.mxu0
  %v5169 = vadd.f32 %v5029, %v5168
  %v5170 = vpop.f32.mrf.mxu0
  %5171 = vmatprep.mubr.f32.mxu0 0.0
  %5172 = vmatmul.mubr.f32.gmra.mxu0 %v5056
  %v5173 = vpop.f32.mrf.mxu0
  %v5174 = vadd.f32 %v5029, %v5173
  %v5175 = vpop.f32.mrf.mxu0
  %5176 = vmatprep.mubr.f32.mxu0 0.0
  %5177 = vmatmul.mubr.f32.gmra.mxu0 %v5059
  %v5178 = vpop.f32.mrf.mxu0
  %v5179 = vadd.f32 %v5029, %v5178
  %v5180 = vpop.f32.mrf.mxu0
  %5181 = vmatprep.mubr.f32.mxu0 0.0
  %5182 = vmatmul.mubr.f32.gmra.mxu0 %v5062
  %v5183 = vpop.f32.mrf.mxu0
  %v5184 = vadd.f32 %v5029, %v5183
  %v5185 = vpop.f32.mrf.mxu0
  %5186 = vmatprep.mubr.f32.mxu0 0.0
  %5187 = vmatmul.mubr.f32.gmra.mxu0 %v5065
  %v5188 = vpop.f32.mrf.mxu0
  %v5189 = vadd.f32 %v5029, %v5188
  %v5190 = vpop.f32.mrf.mxu0
  %5191 = vdwg.mxu0
  %v5192 = vadd.f32 %v5134, %v5164
  %v5193 = vadd.f32 %v5139, %v5169
  %v5194 = vadd.f32 %v5144, %v5174
  %v5195 = vadd.f32 %v5149, %v5179
  %v5196 = vadd.f32 %v5154, %v5184
  %v5197 = vadd.f32 %v5159, %v5189
  %v5198 = vmul.f32 %v5192, 0.5
  %v5199 = vmul.f32 %v5193, 0.5
  %v5200 = vmul.f32 %v5194, 0.5
  %v5201 = vmul.f32 %v5195, 0.5
  %v5202 = vmul.f32 %v5196, 0.5
  %v5203 = vmul.f32 %v5197, 0.5
  %v5204 = vsub.f32 %v5134, %v5198
  %v5205 = vsub.f32 %v5139, %v5199
  %v5206 = vsub.f32 %v5144, %v5200
  %v5207 = vsub.f32 %v5149, %v5201
  %v5208 = vsub.f32 %v5154, %v5202
  %v5209 = vsub.f32 %v5159, %v5203
  %v5210 = vmul.f32 %v5204, %v5204
  %v5211 = vmul.f32 %v5205, %v5205
  %v5212 = vmul.f32 %v5206, %v5206
  %v5213 = vmul.f32 %v5207, %v5207
  %v5214 = vmul.f32 %v5208, %v5208
  %v5215 = vmul.f32 %v5209, %v5209
  %v5216 = vsub.f32 %v5164, %v5198
  %v5217 = vsub.f32 %v5169, %v5199
  %v5218 = vsub.f32 %v5174, %v5200
  %v5219 = vsub.f32 %v5179, %v5201
  %v5220 = vsub.f32 %v5184, %v5202
  %v5221 = vsub.f32 %v5189, %v5203
  %v5222 = vmul.f32 %v5216, %v5216
  %v5223 = vmul.f32 %v5217, %v5217
  %v5224 = vmul.f32 %v5218, %v5218
  %v5225 = vmul.f32 %v5219, %v5219
  %v5226 = vmul.f32 %v5220, %v5220
  %v5227 = vmul.f32 %v5221, %v5221
  %v5228 = vadd.f32 %v5210, %v5222
  %v5229 = vadd.f32 %v5211, %v5223
  %v5230 = vadd.f32 %v5212, %v5224
  %v5231 = vadd.f32 %v5213, %v5225
  %v5232 = vadd.f32 %v5214, %v5226
  %v5233 = vadd.f32 %v5215, %v5227
  %v5234 = vmul.f32 %v5228, 0.5
  %v5235 = vmul.f32 %v5229, 0.5
  %v5236 = vmul.f32 %v5230, 0.5
  %v5237 = vmul.f32 %v5231, 0.5
  %v5238 = vmul.f32 %v5232, 0.5
  %v5239 = vmul.f32 %v5233, 0.5
  %v5240 = vadd.f32 %v5234, 1e-05
  %v5241 = vadd.f32 %v5235, 1e-05
  %v5242 = vadd.f32 %v5236, 1e-05
  %v5243 = vadd.f32 %v5237, 1e-05
  %v5244 = vadd.f32 %v5238, 1e-05
  %v5245 = vadd.f32 %v5239, 1e-05
  %v5246 = vrsqrt.pop %v5240
  %v5247 = vrsqrt.pop %v5241
  %v5248 = vrsqrt.pop %v5242
  %v5249 = vrsqrt.pop %v5243
  %v5250 = vrsqrt.pop %v5244
  %v5251 = vrsqrt.pop %v5245
  %v5252 = vmul.f32 %v5204, %v5246
  %v5253 = vmul.f32 %v5205, %v5247
  %v5254 = vmul.f32 %v5206, %v5248
  %v5255 = vmul.f32 %v5207, %v5249
  %v5256 = vmul.f32 %v5208, %v5250
  %v5257 = vmul.f32 %v5209, %v5251
  %v5258 = vmul.f32 %v5252, %v4851
  %v5259 = vmul.f32 %v5253, %v4852
  %v5260 = vmul.f32 %v5254, %v4853
  %v5261 = vmul.f32 %v5255, %v4854
  %v5262 = vmul.f32 %v5256, %v4855
  %v5263 = vmul.f32 %v5257, %v4856
  %v5264 = vadd.f32 %v5258, %v4858
  %v5265 = vadd.f32 %v5259, %v4859
  %v5266 = vadd.f32 %v5260, %v4860
  %v5267 = vadd.f32 %v5261, %v4861
  %v5268 = vadd.f32 %v5262, %v4862
  %v5269 = vadd.f32 %v5263, %v4863
  %v5270 = vsub.f32 0.0, %v5264
  %v5271 = vsub.f32 0.0, %v5265
  %v5272 = vsub.f32 0.0, %v5266
  %v5273 = vsub.f32 0.0, %v5267
  %v5274 = vsub.f32 0.0, %v5268
  %v5275 = vsub.f32 0.0, %v5269
  %v5276 = vmul.f32 %v5270, 1.442695
  %v5277 = vpow.pop %v5276
  %v5278 = vmul.f32 %v5271, 1.442695
  %v5279 = vpow.pop %v5278
  %v5280 = vmul.f32 %v5272, 1.442695
  %v5281 = vpow.pop %v5280
  %v5282 = vmul.f32 %v5273, 1.442695
  %v5283 = vpow.pop %v5282
  %v5284 = vmul.f32 %v5274, 1.442695
  %v5285 = vpow.pop %v5284
  %v5286 = vmul.f32 %v5275, 1.442695
  %v5287 = vpow.pop %v5286
  %v5288 = vadd.f32 %v5277, 1.0
  %v5289 = vadd.f32 %v5279, 1.0
  %v5290 = vadd.f32 %v5281, 1.0
  %v5291 = vadd.f32 %v5283, 1.0
  %v5292 = vadd.f32 %v5285, 1.0
  %v5293 = vadd.f32 %v5287, 1.0
  %v5294 = vrcp.pop %v5288
  %v5295 = vmul.f32 1.0, %v5294
  %v5296 = vrcp.pop %v5289
  %v5297 = vmul.f32 1.0, %v5296
  %v5298 = vrcp.pop %v5290
  %v5299 = vmul.f32 1.0, %v5298
  %v5300 = vrcp.pop %v5291
  %v5301 = vmul.f32 1.0, %v5300
  %v5302 = vrcp.pop %v5292
  %v5303 = vmul.f32 1.0, %v5302
  %v5304 = vrcp.pop %v5293
  %v5305 = vmul.f32 1.0, %v5304
  %v5306 = vmul.f32 %v5216, %v5246
  %v5307 = vmul.f32 %v5217, %v5247
  %v5308 = vmul.f32 %v5218, %v5248
  %v5309 = vmul.f32 %v5219, %v5249
  %v5310 = vmul.f32 %v5220, %v5250
  %v5311 = vmul.f32 %v5221, %v5251
  %v5312 = vmul.f32 %v5306, %v4851
  %v5313 = vmul.f32 %v5307, %v4852
  %v5314 = vmul.f32 %v5308, %v4853
  %v5315 = vmul.f32 %v5309, %v4854
  %v5316 = vmul.f32 %v5310, %v4855
  %v5317 = vmul.f32 %v5311, %v4856
  %v5318 = vadd.f32 %v5312, %v4858
  %v5319 = vadd.f32 %v5313, %v4859
  %v5320 = vadd.f32 %v5314, %v4860
  %v5321 = vadd.f32 %v5315, %v4861
  %v5322 = vadd.f32 %v5316, %v4862
  %v5323 = vadd.f32 %v5317, %v4863
  %v5324 = vsub.f32 0.0, %v5318
  %v5325 = vsub.f32 0.0, %v5319
  %v5326 = vsub.f32 0.0, %v5320
  %v5327 = vsub.f32 0.0, %v5321
  %v5328 = vsub.f32 0.0, %v5322
  %v5329 = vsub.f32 0.0, %v5323
  %v5330 = vmul.f32 %v5324, 1.442695
  %v5331 = vpow.pop %v5330
  %v5332 = vmul.f32 %v5325, 1.442695
  %v5333 = vpow.pop %v5332
  %v5334 = vmul.f32 %v5326, 1.442695
  %v5335 = vpow.pop %v5334
  %v5336 = vmul.f32 %v5327, 1.442695
  %v5337 = vpow.pop %v5336
  %v5338 = vmul.f32 %v5328, 1.442695
  %v5339 = vpow.pop %v5338
  %v5340 = vmul.f32 %v5329, 1.442695
  %v5341 = vpow.pop %v5340
  %v5342 = vadd.f32 %v5331, 1.0
  %v5343 = vadd.f32 %v5333, 1.0
  %v5344 = vadd.f32 %v5335, 1.0
  %v5345 = vadd.f32 %v5337, 1.0
  %v5346 = vadd.f32 %v5339, 1.0
  %v5347 = vadd.f32 %v5341, 1.0
  %v5348 = vrcp.pop %v5342
  %v5349 = vmul.f32 1.0, %v5348
  %v5350 = vrcp.pop %v5343
  %v5351 = vmul.f32 1.0, %v5350
  %v5352 = vrcp.pop %v5344
  %v5353 = vmul.f32 1.0, %v5352
  %v5354 = vrcp.pop %v5345
  %v5355 = vmul.f32 1.0, %v5354
  %v5356 = vrcp.pop %v5346
  %v5357 = vmul.f32 1.0, %v5356
  %v5358 = vrcp.pop %v5347
  %v5359 = vmul.f32 1.0, %v5358
  %v5360 = vadd.f32 %v5295, %v495
  %v5361 = vadd.f32 %v5297, %v497
  %v5362 = vadd.f32 %v5299, %v499
  %v5363 = vadd.f32 %v5301, %v501
  %v5364 = vadd.f32 %v5303, %v503
  %v5365 = vadd.f32 %v5305, %v505
  %v5366 = vadd.f32 %v5349, %v549
  %v5367 = vadd.f32 %v5351, %v551
  %v5368 = vadd.f32 %v5353, %v553
  %v5369 = vadd.f32 %v5355, %v555
  %v5370 = vadd.f32 %v5357, %v557
  %v5371 = vadd.f32 %v5359, %v559
  %s5372 = scalar_lea.vmem %s2, 160
  %v5373 = vld [vmem:[%s5372] sm:$0xff]
  %v5374 = vld [vmem:[%s5372 + $0x8] sm:$0xff]
  %s5375 = scalar_lea.vmem %s1, 960
  %v5376 = vld [vmem:[%s5375] sm:$0xff]
  %v5377 = vld [vmem:[%s5375 + $0x8] sm:$0xff]
  %v5378 = vld [vmem:[%s5375 + $0x10] sm:$0xff]
  %v5379 = vld [vmem:[%s5375 + $0x18] sm:$0xff]
  %v5380 = vld [vmem:[%s5375 + $0x20] sm:$0xff]
  %v5381 = vld [vmem:[%s5375 + $0x28] sm:$0xff]
  %v5382 = vld [vmem:[%s5375 + $0x30] sm:$0xff]
  %v5383 = vld [vmem:[%s5375 + $0x38] sm:$0xff]
  %v5384 = vld [vmem:[%s5375 + $0x40] sm:$0xff]
  %v5385 = vld [vmem:[%s5375 + $0x48] sm:$0xff]
  %v5386 = vld [vmem:[%s5375 + $0x50] sm:$0xff]
  %v5387 = vld [vmem:[%s5375 + $0x58] sm:$0xff]
  %s5388 = scalar_lea.vmem %s3, 10
  %v5389 = vld [vmem:[%s5388] sm:$0x1]
  %s5390 = scalar_lea.vmem %s4, 480
  %v5391 = vld [vmem:[%s5390] sm:$0xff]
  %v5392 = vld [vmem:[%s5390 + $0x8] sm:$0xff]
  %v5393 = vld [vmem:[%s5390 + $0x10] sm:$0xff]
  %v5394 = vld [vmem:[%s5390 + $0x18] sm:$0xff]
  %v5395 = vld [vmem:[%s5390 + $0x20] sm:$0xff]
  %v5396 = vld [vmem:[%s5390 + $0x28] sm:$0xff]
  %s5397 = scalar_lea.vmem %s5, 480
  %v5398 = vld [vmem:[%s5397] sm:$0xff]
  %v5399 = vld [vmem:[%s5397 + $0x8] sm:$0xff]
  %v5400 = vld [vmem:[%s5397 + $0x10] sm:$0xff]
  %v5401 = vld [vmem:[%s5397 + $0x18] sm:$0xff]
  %v5402 = vld [vmem:[%s5397 + $0x20] sm:$0xff]
  %v5403 = vld [vmem:[%s5397 + $0x28] sm:$0xff]
  %v5405 = vsel %vm62, %v5360, 0
  %v5408 = vsel %vm62, %v5361, 0
  %v5411 = vsel %vm62, %v5362, 0
  %v5414 = vsel %vm62, %v5363, 0
  %v5417 = vsel %vm62, %v5364, 0
  %v5420 = vsel %vm62, %v5365, 0
  %v5423 = vsel %vm62, %v5366, 0
  %v5426 = vsel %vm62, %v5367, 0
  %v5429 = vsel %vm62, %v5368, 0
  %v5432 = vsel %vm62, %v5369, 0
  %v5435 = vsel %vm62, %v5370, 0
  %v5438 = vsel %vm62, %v5371, 0
  %5440 = vmatprep.subr.mxu0 0.0
  %5441 = vmatpush1.msra.mxu0 0.0
  %5442 = vmatprep.subr.mxu0 0.0
  %5443 = vmatpush1.msra.mxu0 0.0
  %5444 = vmatprep.subr.mxu0 0.0
  %5445 = vmatpush1.msra.mxu0 0.0
  %5446 = vmatprep.subr.mxu0 0.0
  %5447 = vmatpush1.msra.mxu0 0.0
  %5448 = vmatprep.subr.mxu0 0.0
  %5449 = vmatpush1.msra.mxu0 0.0
  %5450 = vmatprep.subr.mxu0 0.0
  %5451 = vmatpush1.msra.mxu0 0.0
  %5452 = vmatprep.subr.mxu0 0.0
  %5453 = vmatpush1.msra.mxu0 0.0
  %5454 = vmatprep.subr.mxu0 0.0
  %5455 = vmatpush1.msra.mxu0 0.0
  %5456 = vmatprep.subr.mxu0 0.0
  %5457 = vmatpush1.msra.mxu0 0.0
  %5458 = vmatprep.subr.mxu0 0.0
  %5459 = vmatpush1.msra.mxu0 0.0
  %5460 = vmatprep.subr.mxu0 0.0
  %5461 = vmatpush1.msra.mxu0 0.0
  %5462 = vmatprep.subr.mxu0 0.0
  %5463 = vmatpush1.msra.mxu0 0.0
  %5464 = vmatprep.subr.mxu0 0.0
  %5465 = vmatpush1.msra.mxu0 0.0
  %5466 = vmatprep.subr.mxu0 0.0
  %5467 = vmatpush1.msra.mxu0 0.0
  %5468 = vmatprep.subr.mxu0 0.0
  %5469 = vmatpush1.msra.mxu0 %v5374
  %5470 = vmatprep.subr.mxu0 0.0
  %5471 = vmatpush1.msra.mxu0 %v5373
  %5472 = vmatprep.subr.mxu0 0.0
  %5473 = vmatpush2.msra.mxu0 0.0
  %5474 = vmatprep.subr.mxu0 0.0
  %5475 = vmatpush2.msra.mxu0 0.0
  %5476 = vmatprep.subr.mxu0 0.0
  %5477 = vmatpush2.msra.mxu0 0.0
  %5478 = vmatprep.subr.mxu0 0.0
  %5479 = vmatpush2.msra.mxu0 0.0
  %5480 = vmatprep.subr.mxu0 0.0
  %5481 = vmatpush2.msra.mxu0 0.0
  %5482 = vmatprep.subr.mxu0 0.0
  %5483 = vmatpush2.msra.mxu0 0.0
  %5484 = vmatprep.subr.mxu0 0.0
  %5485 = vmatpush2.msra.mxu0 0.0
  %5486 = vmatprep.subr.mxu0 0.0
  %5487 = vmatpush2.msra.mxu0 0.0
  %5488 = vmatprep.subr.mxu0 0.0
  %5489 = vmatpush2.msra.mxu0 0.0
  %5490 = vmatprep.subr.mxu0 0.0
  %5491 = vmatpush2.msra.mxu0 0.0
  %5492 = vmatprep.subr.mxu0 0.0
  %5493 = vmatpush2.msra.mxu0 0.0
  %5494 = vmatprep.subr.mxu0 0.0
  %5495 = vmatpush2.msra.mxu0 0.0
  %5496 = vmatprep.subr.mxu0 0.0
  %5497 = vmatpush2.msra.mxu0 0.0
  %5498 = vmatprep.subr.mxu0 0.0
  %5499 = vmatpush2.msra.mxu0 0.0
  %5500 = vmatprep.subr.mxu0 0.0
  %5501 = vmatpush2.msra.mxu0 0.0
  %5502 = vmatprep.subr.mxu0 0.0
  %5503 = vmatpush2.msra.mxu0 0.0
  %5504 = vmatprep.mubr.f32.mxu0 0.0
  %5505 = vmatmul.mubr.f32.gmra.mxu0 %v5405
  %v5506 = vpop.f32.mrf.mxu0
  %v5507 = vadd.f32 0.0, %v5506
  %v5508 = vpop.f32.mrf.mxu0
  %5509 = vmatprep.mubr.f32.mxu0 0.0
  %5510 = vmatmul.mubr.f32.gmra.mxu0 %v5408
  %v5511 = vpop.f32.mrf.mxu0
  %v5512 = vadd.f32 0.0, %v5511
  %v5513 = vpop.f32.mrf.mxu0
  %5514 = vmatprep.mubr.f32.mxu0 0.0
  %5515 = vmatmul.mubr.f32.gmra.mxu0 %v5411
  %v5516 = vpop.f32.mrf.mxu0
  %v5517 = vadd.f32 0.0, %v5516
  %v5518 = vpop.f32.mrf.mxu0
  %5519 = vmatprep.mubr.f32.mxu0 0.0
  %5520 = vmatmul.mubr.f32.gmra.mxu0 %v5414
  %v5521 = vpop.f32.mrf.mxu0
  %v5522 = vadd.f32 0.0, %v5521
  %v5523 = vpop.f32.mrf.mxu0
  %5524 = vmatprep.mubr.f32.mxu0 0.0
  %5525 = vmatmul.mubr.f32.gmra.mxu0 %v5417
  %v5526 = vpop.f32.mrf.mxu0
  %v5527 = vadd.f32 0.0, %v5526
  %v5528 = vpop.f32.mrf.mxu0
  %5529 = vmatprep.mubr.f32.mxu0 0.0
  %5530 = vmatmul.mubr.f32.gmra.mxu0 %v5420
  %v5531 = vpop.f32.mrf.mxu0
  %v5532 = vadd.f32 0.0, %v5531
  %v5533 = vpop.f32.mrf.mxu0
  %5534 = vmatprep.mubr.f32.mxu0 0.0
  %5535 = vmatmul.mubr.f32.gmra.mxu0 %v5423
  %v5536 = vpop.f32.mrf.mxu0
  %v5537 = vadd.f32 0.0, %v5536
  %v5538 = vpop.f32.mrf.mxu0
  %5539 = vmatprep.mubr.f32.mxu0 0.0
  %5540 = vmatmul.mubr.f32.gmra.mxu0 %v5426
  %v5541 = vpop.f32.mrf.mxu0
  %v5542 = vadd.f32 0.0, %v5541
  %v5543 = vpop.f32.mrf.mxu0
  %5544 = vmatprep.mubr.f32.mxu0 0.0
  %5545 = vmatmul.mubr.f32.gmra.mxu0 %v5429
  %v5546 = vpop.f32.mrf.mxu0
  %v5547 = vadd.f32 0.0, %v5546
  %v5548 = vpop.f32.mrf.mxu0
  %5549 = vmatprep.mubr.f32.mxu0 0.0
  %5550 = vmatmul.mubr.f32.gmra.mxu0 %v5432
  %v5551 = vpop.f32.mrf.mxu0
  %v5552 = vadd.f32 0.0, %v5551
  %v5553 = vpop.f32.mrf.mxu0
  %5554 = vmatprep.mubr.f32.mxu0 0.0
  %5555 = vmatmul.mubr.f32.gmra.mxu0 %v5435
  %v5556 = vpop.f32.mrf.mxu0
  %v5557 = vadd.f32 0.0, %v5556
  %v5558 = vpop.f32.mrf.mxu0
  %5559 = vmatprep.mubr.f32.mxu0 0.0
  %5560 = vmatmul.mubr.f32.gmra.mxu0 %v5438
  %v5561 = vpop.f32.mrf.mxu0
  %v5562 = vadd.f32 0.0, %v5561
  %v5563 = vpop.f32.mrf.mxu0
  %5564 = vdwg.mxu0
  %v5566 = vlaneseq
  %v5567 = vshrl.u32 %v5566, 7
  %v5568 = vsub.s32 0, %v5567
  %v5569 = vrot.slane %v5389, %v5568
  %v5572 = vsel %vm230, %v5376, 0
  %v5575 = vsel %vm230, %v5377, 0
  %v5578 = vsel %vm230, %v5378, 0
  %v5581 = vsel %vm230, %v5379, 0
  %v5584 = vsel %vm230, %v5380, 0
  %v5587 = vsel %vm230, %v5381, 0
  %v5590 = vsel %vm230, %v5382, 0
  %v5593 = vsel %vm230, %v5383, 0
  %v5596 = vsel %vm230, %v5384, 0
  %v5599 = vsel %vm230, %v5385, 0
  %v5602 = vsel %vm230, %v5386, 0
  %v5605 = vsel %vm230, %v5387, 0
  %5607 = vmatprep.subr.mxu0 0.0
  %5608 = vmatpush1.msra.mxu0 0.0
  %5609 = vmatprep.subr.mxu0 0.0
  %5610 = vmatpush1.msra.mxu0 0.0
  %5611 = vmatprep.subr.mxu0 0.0
  %5612 = vmatpush1.msra.mxu0 0.0
  %5613 = vmatprep.subr.mxu0 0.0
  %5614 = vmatpush1.msra.mxu0 0.0
  %5615 = vmatprep.subr.mxu0 0.0
  %5616 = vmatpush1.msra.mxu0 %v5562
  %5617 = vmatprep.subr.mxu0 0.0
  %5618 = vmatpush1.msra.mxu0 %v5557
  %5619 = vmatprep.subr.mxu0 0.0
  %5620 = vmatpush1.msra.mxu0 %v5552
  %5621 = vmatprep.subr.mxu0 0.0
  %5622 = vmatpush1.msra.mxu0 %v5547
  %5623 = vmatprep.subr.mxu0 0.0
  %5624 = vmatpush1.msra.mxu0 %v5542
  %5625 = vmatprep.subr.mxu0 0.0
  %5626 = vmatpush1.msra.mxu0 %v5537
  %5627 = vmatprep.subr.mxu0 0.0
  %5628 = vmatpush1.msra.mxu0 %v5532
  %5629 = vmatprep.subr.mxu0 0.0
  %5630 = vmatpush1.msra.mxu0 %v5527
  %5631 = vmatprep.subr.mxu0 0.0
  %5632 = vmatpush1.msra.mxu0 %v5522
  %5633 = vmatprep.subr.mxu0 0.0
  %5634 = vmatpush1.msra.mxu0 %v5517
  %5635 = vmatprep.subr.mxu0 0.0
  %5636 = vmatpush1.msra.mxu0 %v5512
  %5637 = vmatprep.subr.mxu0 0.0
  %5638 = vmatpush1.msra.mxu0 %v5507
  %5639 = vmatprep.subr.mxu0 0.0
  %5640 = vmatpush2.msra.mxu0 0.0
  %5641 = vmatprep.subr.mxu0 0.0
  %5642 = vmatpush2.msra.mxu0 0.0
  %5643 = vmatprep.subr.mxu0 0.0
  %5644 = vmatpush2.msra.mxu0 0.0
  %5645 = vmatprep.subr.mxu0 0.0
  %5646 = vmatpush2.msra.mxu0 0.0
  %5647 = vmatprep.subr.mxu0 0.0
  %5648 = vmatpush2.msra.mxu0 0.0
  %5649 = vmatprep.subr.mxu0 0.0
  %5650 = vmatpush2.msra.mxu0 0.0
  %5651 = vmatprep.subr.mxu0 0.0
  %5652 = vmatpush2.msra.mxu0 0.0
  %5653 = vmatprep.subr.mxu0 0.0
  %5654 = vmatpush2.msra.mxu0 0.0
  %5655 = vmatprep.subr.mxu0 0.0
  %5656 = vmatpush2.msra.mxu0 0.0
  %5657 = vmatprep.subr.mxu0 0.0
  %5658 = vmatpush2.msra.mxu0 0.0
  %5659 = vmatprep.subr.mxu0 0.0
  %5660 = vmatpush2.msra.mxu0 0.0
  %5661 = vmatprep.subr.mxu0 0.0
  %5662 = vmatpush2.msra.mxu0 0.0
  %5663 = vmatprep.subr.mxu0 0.0
  %5664 = vmatpush2.msra.mxu0 0.0
  %5665 = vmatprep.subr.mxu0 0.0
  %5666 = vmatpush2.msra.mxu0 0.0
  %5667 = vmatprep.subr.mxu0 0.0
  %5668 = vmatpush2.msra.mxu0 0.0
  %5669 = vmatprep.subr.mxu0 0.0
  %5670 = vmatpush2.msra.mxu0 0.0
  %5671 = vmatprep.mubr.f32.mxu0 0.0
  %5672 = vmatmul.mubr.f32.gmra.mxu0 %v5572
  %v5673 = vpop.f32.mrf.mxu0
  %v5674 = vadd.f32 %v5569, %v5673
  %v5675 = vpop.f32.mrf.mxu0
  %5676 = vmatprep.mubr.f32.mxu0 0.0
  %5677 = vmatmul.mubr.f32.gmra.mxu0 %v5575
  %v5678 = vpop.f32.mrf.mxu0
  %v5679 = vadd.f32 %v5569, %v5678
  %v5680 = vpop.f32.mrf.mxu0
  %5681 = vmatprep.mubr.f32.mxu0 0.0
  %5682 = vmatmul.mubr.f32.gmra.mxu0 %v5578
  %v5683 = vpop.f32.mrf.mxu0
  %v5684 = vadd.f32 %v5569, %v5683
  %v5685 = vpop.f32.mrf.mxu0
  %5686 = vmatprep.mubr.f32.mxu0 0.0
  %5687 = vmatmul.mubr.f32.gmra.mxu0 %v5581
  %v5688 = vpop.f32.mrf.mxu0
  %v5689 = vadd.f32 %v5569, %v5688
  %v5690 = vpop.f32.mrf.mxu0
  %5691 = vmatprep.mubr.f32.mxu0 0.0
  %5692 = vmatmul.mubr.f32.gmra.mxu0 %v5584
  %v5693 = vpop.f32.mrf.mxu0
  %v5694 = vadd.f32 %v5569, %v5693
  %v5695 = vpop.f32.mrf.mxu0
  %5696 = vmatprep.mubr.f32.mxu0 0.0
  %5697 = vmatmul.mubr.f32.gmra.mxu0 %v5587
  %v5698 = vpop.f32.mrf.mxu0
  %v5699 = vadd.f32 %v5569, %v5698
  %v5700 = vpop.f32.mrf.mxu0
  %5701 = vmatprep.mubr.f32.mxu0 0.0
  %5702 = vmatmul.mubr.f32.gmra.mxu0 %v5590
  %v5703 = vpop.f32.mrf.mxu0
  %v5704 = vadd.f32 %v5569, %v5703
  %v5705 = vpop.f32.mrf.mxu0
  %5706 = vmatprep.mubr.f32.mxu0 0.0
  %5707 = vmatmul.mubr.f32.gmra.mxu0 %v5593
  %v5708 = vpop.f32.mrf.mxu0
  %v5709 = vadd.f32 %v5569, %v5708
  %v5710 = vpop.f32.mrf.mxu0
  %5711 = vmatprep.mubr.f32.mxu0 0.0
  %5712 = vmatmul.mubr.f32.gmra.mxu0 %v5596
  %v5713 = vpop.f32.mrf.mxu0
  %v5714 = vadd.f32 %v5569, %v5713
  %v5715 = vpop.f32.mrf.mxu0
  %5716 = vmatprep.mubr.f32.mxu0 0.0
  %5717 = vmatmul.mubr.f32.gmra.mxu0 %v5599
  %v5718 = vpop.f32.mrf.mxu0
  %v5719 = vadd.f32 %v5569, %v5718
  %v5720 = vpop.f32.mrf.mxu0
  %5721 = vmatprep.mubr.f32.mxu0 0.0
  %5722 = vmatmul.mubr.f32.gmra.mxu0 %v5602
  %v5723 = vpop.f32.mrf.mxu0
  %v5724 = vadd.f32 %v5569, %v5723
  %v5725 = vpop.f32.mrf.mxu0
  %5726 = vmatprep.mubr.f32.mxu0 0.0
  %5727 = vmatmul.mubr.f32.gmra.mxu0 %v5605
  %v5728 = vpop.f32.mrf.mxu0
  %v5729 = vadd.f32 %v5569, %v5728
  %v5730 = vpop.f32.mrf.mxu0
  %5731 = vdwg.mxu0
  %v5732 = vadd.f32 %v5674, %v5704
  %v5733 = vadd.f32 %v5679, %v5709
  %v5734 = vadd.f32 %v5684, %v5714
  %v5735 = vadd.f32 %v5689, %v5719
  %v5736 = vadd.f32 %v5694, %v5724
  %v5737 = vadd.f32 %v5699, %v5729
  %v5738 = vmul.f32 %v5732, 0.5
  %v5739 = vmul.f32 %v5733, 0.5
  %v5740 = vmul.f32 %v5734, 0.5
  %v5741 = vmul.f32 %v5735, 0.5
  %v5742 = vmul.f32 %v5736, 0.5
  %v5743 = vmul.f32 %v5737, 0.5
  %v5744 = vsub.f32 %v5674, %v5738
  %v5745 = vsub.f32 %v5679, %v5739
  %v5746 = vsub.f32 %v5684, %v5740
  %v5747 = vsub.f32 %v5689, %v5741
  %v5748 = vsub.f32 %v5694, %v5742
  %v5749 = vsub.f32 %v5699, %v5743
  %v5750 = vmul.f32 %v5744, %v5744
  %v5751 = vmul.f32 %v5745, %v5745
  %v5752 = vmul.f32 %v5746, %v5746
  %v5753 = vmul.f32 %v5747, %v5747
  %v5754 = vmul.f32 %v5748, %v5748
  %v5755 = vmul.f32 %v5749, %v5749
  %v5756 = vsub.f32 %v5704, %v5738
  %v5757 = vsub.f32 %v5709, %v5739
  %v5758 = vsub.f32 %v5714, %v5740
  %v5759 = vsub.f32 %v5719, %v5741
  %v5760 = vsub.f32 %v5724, %v5742
  %v5761 = vsub.f32 %v5729, %v5743
  %v5762 = vmul.f32 %v5756, %v5756
  %v5763 = vmul.f32 %v5757, %v5757
  %v5764 = vmul.f32 %v5758, %v5758
  %v5765 = vmul.f32 %v5759, %v5759
  %v5766 = vmul.f32 %v5760, %v5760
  %v5767 = vmul.f32 %v5761, %v5761
  %v5768 = vadd.f32 %v5750, %v5762
  %v5769 = vadd.f32 %v5751, %v5763
  %v5770 = vadd.f32 %v5752, %v5764
  %v5771 = vadd.f32 %v5753, %v5765
  %v5772 = vadd.f32 %v5754, %v5766
  %v5773 = vadd.f32 %v5755, %v5767
  %v5774 = vmul.f32 %v5768, 0.5
  %v5775 = vmul.f32 %v5769, 0.5
  %v5776 = vmul.f32 %v5770, 0.5
  %v5777 = vmul.f32 %v5771, 0.5
  %v5778 = vmul.f32 %v5772, 0.5
  %v5779 = vmul.f32 %v5773, 0.5
  %v5780 = vadd.f32 %v5774, 1e-05
  %v5781 = vadd.f32 %v5775, 1e-05
  %v5782 = vadd.f32 %v5776, 1e-05
  %v5783 = vadd.f32 %v5777, 1e-05
  %v5784 = vadd.f32 %v5778, 1e-05
  %v5785 = vadd.f32 %v5779, 1e-05
  %v5786 = vrsqrt.pop %v5780
  %v5787 = vrsqrt.pop %v5781
  %v5788 = vrsqrt.pop %v5782
  %v5789 = vrsqrt.pop %v5783
  %v5790 = vrsqrt.pop %v5784
  %v5791 = vrsqrt.pop %v5785
  %v5792 = vmul.f32 %v5744, %v5786
  %v5793 = vmul.f32 %v5745, %v5787
  %v5794 = vmul.f32 %v5746, %v5788
  %v5795 = vmul.f32 %v5747, %v5789
  %v5796 = vmul.f32 %v5748, %v5790
  %v5797 = vmul.f32 %v5749, %v5791
  %v5798 = vmul.f32 %v5792, %v5391
  %v5799 = vmul.f32 %v5793, %v5392
  %v5800 = vmul.f32 %v5794, %v5393
  %v5801 = vmul.f32 %v5795, %v5394
  %v5802 = vmul.f32 %v5796, %v5395
  %v5803 = vmul.f32 %v5797, %v5396
  %v5804 = vadd.f32 %v5798, %v5398
  %v5805 = vadd.f32 %v5799, %v5399
  %v5806 = vadd.f32 %v5800, %v5400
  %v5807 = vadd.f32 %v5801, %v5401
  %v5808 = vadd.f32 %v5802, %v5402
  %v5809 = vadd.f32 %v5803, %v5403
  %v5810 = vsub.f32 0.0, %v5804
  %v5811 = vsub.f32 0.0, %v5805
  %v5812 = vsub.f32 0.0, %v5806
  %v5813 = vsub.f32 0.0, %v5807
  %v5814 = vsub.f32 0.0, %v5808
  %v5815 = vsub.f32 0.0, %v5809
  %v5816 = vmul.f32 %v5810, 1.442695
  %v5817 = vpow.pop %v5816
  %v5818 = vmul.f32 %v5811, 1.442695
  %v5819 = vpow.pop %v5818
  %v5820 = vmul.f32 %v5812, 1.442695
  %v5821 = vpow.pop %v5820
  %v5822 = vmul.f32 %v5813, 1.442695
  %v5823 = vpow.pop %v5822
  %v5824 = vmul.f32 %v5814, 1.442695
  %v5825 = vpow.pop %v5824
  %v5826 = vmul.f32 %v5815, 1.442695
  %v5827 = vpow.pop %v5826
  %v5828 = vadd.f32 %v5817, 1.0
  %v5829 = vadd.f32 %v5819, 1.0
  %v5830 = vadd.f32 %v5821, 1.0
  %v5831 = vadd.f32 %v5823, 1.0
  %v5832 = vadd.f32 %v5825, 1.0
  %v5833 = vadd.f32 %v5827, 1.0
  %v5834 = vrcp.pop %v5828
  %v5835 = vmul.f32 1.0, %v5834
  %v5836 = vrcp.pop %v5829
  %v5837 = vmul.f32 1.0, %v5836
  %v5838 = vrcp.pop %v5830
  %v5839 = vmul.f32 1.0, %v5838
  %v5840 = vrcp.pop %v5831
  %v5841 = vmul.f32 1.0, %v5840
  %v5842 = vrcp.pop %v5832
  %v5843 = vmul.f32 1.0, %v5842
  %v5844 = vrcp.pop %v5833
  %v5845 = vmul.f32 1.0, %v5844
  %v5846 = vmul.f32 %v5756, %v5786
  %v5847 = vmul.f32 %v5757, %v5787
  %v5848 = vmul.f32 %v5758, %v5788
  %v5849 = vmul.f32 %v5759, %v5789
  %v5850 = vmul.f32 %v5760, %v5790
  %v5851 = vmul.f32 %v5761, %v5791
  %v5852 = vmul.f32 %v5846, %v5391
  %v5853 = vmul.f32 %v5847, %v5392
  %v5854 = vmul.f32 %v5848, %v5393
  %v5855 = vmul.f32 %v5849, %v5394
  %v5856 = vmul.f32 %v5850, %v5395
  %v5857 = vmul.f32 %v5851, %v5396
  %v5858 = vadd.f32 %v5852, %v5398
  %v5859 = vadd.f32 %v5853, %v5399
  %v5860 = vadd.f32 %v5854, %v5400
  %v5861 = vadd.f32 %v5855, %v5401
  %v5862 = vadd.f32 %v5856, %v5402
  %v5863 = vadd.f32 %v5857, %v5403
  %v5864 = vsub.f32 0.0, %v5858
  %v5865 = vsub.f32 0.0, %v5859
  %v5866 = vsub.f32 0.0, %v5860
  %v5867 = vsub.f32 0.0, %v5861
  %v5868 = vsub.f32 0.0, %v5862
  %v5869 = vsub.f32 0.0, %v5863
  %v5870 = vmul.f32 %v5864, 1.442695
  %v5871 = vpow.pop %v5870
  %v5872 = vmul.f32 %v5865, 1.442695
  %v5873 = vpow.pop %v5872
  %v5874 = vmul.f32 %v5866, 1.442695
  %v5875 = vpow.pop %v5874
  %v5876 = vmul.f32 %v5867, 1.442695
  %v5877 = vpow.pop %v5876
  %v5878 = vmul.f32 %v5868, 1.442695
  %v5879 = vpow.pop %v5878
  %v5880 = vmul.f32 %v5869, 1.442695
  %v5881 = vpow.pop %v5880
  %v5882 = vadd.f32 %v5871, 1.0
  %v5883 = vadd.f32 %v5873, 1.0
  %v5884 = vadd.f32 %v5875, 1.0
  %v5885 = vadd.f32 %v5877, 1.0
  %v5886 = vadd.f32 %v5879, 1.0
  %v5887 = vadd.f32 %v5881, 1.0
  %v5888 = vrcp.pop %v5882
  %v5889 = vmul.f32 1.0, %v5888
  %v5890 = vrcp.pop %v5883
  %v5891 = vmul.f32 1.0, %v5890
  %v5892 = vrcp.pop %v5884
  %v5893 = vmul.f32 1.0, %v5892
  %v5894 = vrcp.pop %v5885
  %v5895 = vmul.f32 1.0, %v5894
  %v5896 = vrcp.pop %v5886
  %v5897 = vmul.f32 1.0, %v5896
  %v5898 = vrcp.pop %v5887
  %v5899 = vmul.f32 1.0, %v5898
  %v5900 = vadd.f32 %v5835, %v23
  %v5901 = vadd.f32 %v5837, %v24
  %v5902 = vadd.f32 %v5839, %v25
  %v5903 = vadd.f32 %v5841, %v26
  %v5904 = vadd.f32 %v5843, %v27
  %v5905 = vadd.f32 %v5845, %v28
  %v5906 = vadd.f32 %v5889, %v29
  %v5907 = vadd.f32 %v5891, %v30
  %v5908 = vadd.f32 %v5893, %v31
  %v5909 = vadd.f32 %v5895, %v32
  %v5910 = vadd.f32 %v5897, %v33
  %v5911 = vadd.f32 %v5899, %v34
  %5912 = vst.msk [vmem:[%s6] sm:$0xff] %vm62, %v5900
  %5913 = vst.msk [vmem:[%s6 + $0x8] sm:$0xff] %vm62, %v5901
  %5914 = vst.msk [vmem:[%s6 + $0x10] sm:$0xff] %vm62, %v5902
  %5915 = vst.msk [vmem:[%s6 + $0x18] sm:$0xff] %vm62, %v5903
  %5916 = vst.msk [vmem:[%s6 + $0x20] sm:$0xff] %vm62, %v5904
  %5917 = vst.msk [vmem:[%s6 + $0x28] sm:$0xff] %vm62, %v5905
  %5918 = vst.msk [vmem:[%s6 + $0x30] sm:$0xff] %vm62, %v5906
  %5919 = vst.msk [vmem:[%s6 + $0x38] sm:$0xff] %vm62, %v5907
  %5920 = vst.msk [vmem:[%s6 + $0x40] sm:$0xff] %vm62, %v5908
  %5921 = vst.msk [vmem:[%s6 + $0x48] sm:$0xff] %vm62, %v5909
  %5922 = vst.msk [vmem:[%s6 + $0x50] sm:$0xff] %vm62, %v5910
  %5923 = vst.msk [vmem:[%s6 + $0x58] sm:$0xff] %vm62, %v5911
  // Predicated region
  $region26: #{gcn_forward_pallas.1} parent=0 // pred_check
    _
  $region27: #{gcn_forward_pallas.1} parent=0 // pred_check_branch
    %5925 = sbr.rel (0) target = $region29
  $region28: #{gcn_forward_pallas.1} parent=0 // pred_region
    _
  $region29: #{gcn_forward_pallas.1} parent=0 // pred_fallthru
    _
  // Predicated region
  $region30: #{gcn_forward_pallas.1} parent=0 // pred_check
    _
  $region31: #{gcn_forward_pallas.1} parent=0 // pred_check_branch
    %5927 = sbr.rel (0) target = $region33
  $region32: #{gcn_forward_pallas.1} parent=0 // pred_region
    _
  $region33: #{gcn_forward_pallas.1} parent=0 // pred_fallthru
    _

</llo_original>
